<compile_context>
chip_gen: v6e
topology: v6e:2x2x1
jax: 0.10.0
libtpu: 0.0.40
codegen_flags: <defaults>
</compile_context>

<pallas_src>
from math import sqrt

import jax
import jax.numpy as jnp
from jax import lax
from jax.experimental import pallas as pl
from jax.experimental.pallas import tpu as pltpu


def _talking_head_body(wpre_ref, wpost_ref, kmask_ref, amask_ref,
                       q_ref, k_ref, v_ref, out_ref):
    q = q_ref[0]                      # (H, TL, E)  native dtype (bf16 stays bf16)
    k = k_ref[0]                      # (H, E, S)   S padded to a multiple of 128
    v = v_ref[0]                      # (H, S, D)
    H, TL, _ = q.shape
    S = k.shape[2]
    D = v.shape[2]

    # Scores: per-head (TL,E)x(E,S) batched matmul on the MXU, f32 accumulation.
    qk = jnp.einsum('hle,hes->hls', q, k, preferred_element_type=jnp.float32)

    # Pre-softmax talking heads (softmax_temp already folded into W_pre).
    # With S % 128 == 0 the reshapes around this matmul stay lane-dense.
    qk = jnp.dot(wpre_ref[...], qk.reshape(H, TL * S),
                 preferred_element_type=jnp.float32).reshape(H, TL, S)

    # Additive mask: per-batch key-length row (also blanks padded keys) plus either
    # an in-kernel causal mask (no HBM traffic) or an arbitrary HBM mask tile.
    mask = kmask_ref[0].astype(jnp.float32)                     # (1, S)
    if amask_ref is None:
        row0 = pl.program_id(1) * TL
        rows = lax.broadcasted_iota(jnp.int32, (TL, S), 0) + row0
        cols = lax.broadcasted_iota(jnp.int32, (TL, S), 1)
        mask = mask + jnp.where(cols <= rows, 0.0, -1e9).astype(jnp.float32)
    else:
        mask = mask + amask_ref[...].astype(jnp.float32)        # (TL, S)
    qk = qk + mask[None]

    # Numerically stable softmax over keys (f32 on the VPU; denominator on the EUP).
    m = jnp.max(qk, axis=-1, keepdims=True)
    p = jnp.exp(qk - m)
    a = p * pl.reciprocal(jnp.sum(p, axis=-1, keepdims=True), approx=True)

    # TODO(synk): training-mode attention dropout (pltpu.prng_random_bits) not applied.

    # Post-softmax talking heads in bf16 on the MXU (probabilities tolerate bf16).
    a = jnp.dot(wpost_ref[...].astype(jnp.bfloat16),
                a.astype(jnp.bfloat16).reshape(H, TL * S),
                preferred_element_type=jnp.float32).reshape(H, TL, S)
    a = a.astype(v.dtype)

    # A @ V as one batched matmul; concatenate heads along lanes and issue a single
    # unmasked, lane-dense (TL, H*D) store (H*D is a multiple of 128 in practice).
    pv = jnp.einsum('hls,hsd->hld', a, v, preferred_element_type=jnp.float32)
    out_ref[0] = jnp.concatenate([pv[h] for h in range(H)],
                                 axis=-1).astype(out_ref.dtype)


def _talking_head_kernel_masked(wpre_ref, wpost_ref, kmask_ref, amask_ref,
                                q_ref, k_ref, v_ref, out_ref):
    _talking_head_body(wpre_ref, wpost_ref, kmask_ref, amask_ref,
                       q_ref, k_ref, v_ref, out_ref)


def _talking_head_kernel_causal(wpre_ref, wpost_ref, kmask_ref,
                                q_ref, k_ref, v_ref, out_ref):
    _talking_head_body(wpre_ref, wpost_ref, kmask_ref, None,
                       q_ref, k_ref, v_ref, out_ref)


def _vmem_limit_bytes():
    """3/4 of the physical VMEM: 96 MiB on v5e/v6e (128 MiB), 48 MiB on v7x (64 MiB)."""
    try:
        cap = int(pltpu.get_tpu_info().vmem_capacity_bytes)
    except Exception:
        cap = 64 * 1024 * 1024   # conservative fallback: v7x per-TensorCore VMEM
    return (cap * 3) // 4


def _choose_query_tile(L, S_pad, H, E, D, itemsize, vmem_limit_bytes):
    """Largest query tile TL (preferring multiples of 128, then 8, dividing L)
    such that resident + per-tile VMEM stays under the limit.

    Accounts for: double-buffered resident K/V, double-buffered Q/out/mask tiles,
    ~4 f32 + 1 bf16 live copies of the (H, TL, S) score tensor, the f32 PV result,
    and 4 MiB headroom for compiler scratch."""
    # TODO(synk): for very long S where the resident double-buffered K/V alone
    # exceed the limit (notably v7x's 64 MiB VMEM), an S-tiled online-softmax
    # variant (W_pre/W_post applied per key chunk) is needed; this chooser only
    # degrades TL gracefully.
    fixed = 2 * (H * E * S_pad + H * S_pad * D) * itemsize   # K + V, double-buffered
    fixed += 2 * 8 * S_pad * 2                               # key-length mask tiles (bf16)
    fixed += 4 * H * H * 4                                   # W_pre / W_post
    headroom = 4 * 1024 * 1024
    avail = vmem_limit_bytes - fixed - headroom
    per_row = (2 * H * (E + D) * itemsize      # Q tile + out tile, double-buffered
               + 2 * S_pad * 2                 # attention-mask tile (bf16), double-buffered
               + (4 * 4 + 2) * H * S_pad       # live f32/bf16 copies of the scores
               + 4 * H * D)                    # f32 PV result
    max_tl = max(avail // per_row, 8)
    cap = int(min(max_tl, L))
    for step in (128, 8):
        t = (cap // step) * step
        while t >= step:
            if L % t == 0:
                return t
            t -= step
    return L


def talking_head_attention(queries, keys, values, w_pre, w_post,
                           attn_mask_add=None, key_len_add=None,
                           softmax_temp=None, causal=False, query_tile=None):
    """queries (N,L,H,E), keys (N,S,H,E), values (N,S,H,D) -> (N,L,H,D).

    attn_mask_add: (L, S) additive mask (ignored when causal=True).
    key_len_add:   (N, S) additive key-length mask (None -> all keys valid).
    """
    N, L, H, E = queries.shape
    _, S, _, D = values.shape
    temp = softmax_temp if softmax_temp is not None else 1.0 / sqrt(E)
    itemsize = jnp.dtype(queries.dtype).itemsize

    # Pad the key axis to a multiple of 128 so every (.., S) tensor is lane-dense.
    S_pad = ((S + 127) // 128) * 128
    pad = S_pad - S

    # Fold softmax_temp into the pre-softmax head-mix; ship the post-softmax
    # head-mix weights as bf16 (the mix runs in bf16 on the MXU).
    w_pre32 = w_pre.astype(jnp.float32) * jnp.float32(temp)
    w_post16 = w_post.astype(jnp.bfloat16)

    # Head-major Q / V; K pre-transposed to (N,H,E,S) so QK is (TL,E)x(E,S).
    q = jnp.transpose(queries, (0, 2, 1, 3))                   # (N, H, L, E)
    k = jnp.transpose(keys, (0, 2, 3, 1))                      # (N, H, E, S)
    v = jnp.transpose(values, (0, 2, 1, 3))                    # (N, H, S, D)
    if pad:
        k = jnp.pad(k, ((0, 0), (0, 0), (0, 0), (0, pad)))     # zero padded keys
        v = jnp.pad(v, ((0, 0), (0, 0), (0, pad), (0, 0)))

    if key_len_add is None:
        key_len_add = jnp.zeros((N, S), jnp.float32)
    kmask = jnp.pad(key_len_add.astype(jnp.float32), ((0, 0), (0, pad)),
                    constant_values=-1e9)                      # blank padded keys
    # Masks are 0 / -1e9 -> bf16 halves their DMA at no accuracy cost.
    kmask = kmask.reshape(N, 1, S_pad).astype(jnp.bfloat16)

    vmem_limit = _vmem_limit_bytes()
    tl = query_tile if query_tile is not None else _choose_query_tile(
        L, S_pad, H, E, D, itemsize, vmem_limit)
    assert L % tl == 0, (L, tl)
    grid = (N, L // tl)

    in_specs = [
        pl.BlockSpec((H, H), lambda n, l: (0, 0)),              # W_pre (temp folded), f32
        pl.BlockSpec((H, H), lambda n, l: (0, 0)),              # W_post, bf16
        pl.BlockSpec((1, 1, S_pad), lambda n, l: (n, 0, 0)),    # key-length mask row, bf16
    ]
    args = [w_pre32, w_post16, kmask]
    if causal:
        kernel = _talking_head_kernel_causal                    # mask built in-kernel
    else:
        assert attn_mask_add is not None, "attn_mask_add required when causal=False"
        amask = jnp.pad(attn_mask_add.astype(jnp.float32),
                        ((0, 0), (0, pad))).astype(jnp.bfloat16)
        in_specs.append(pl.BlockSpec((tl, S_pad), lambda n, l: (l, 0)))
        args.append(amask)
        kernel = _talking_head_kernel_masked
    in_specs += [
        pl.BlockSpec((1, H, tl, E), lambda n, l: (n, 0, l, 0)),     # Q tile
        pl.BlockSpec((1, H, E, S_pad), lambda n, l: (n, 0, 0, 0)),  # K (resident per batch)
        pl.BlockSpec((1, H, S_pad, D), lambda n, l: (n, 0, 0, 0)),  # V (resident per batch)
    ]
    args += [q, k, v]

    out = pl.pallas_call(
        kernel,
        out_shape=jax.ShapeDtypeStruct((N, L, H * D), queries.dtype),
        grid_spec=pltpu.PrefetchScalarGridSpec(
            num_scalar_prefetch=0,
            grid=grid,
            in_specs=in_specs,
            out_specs=pl.BlockSpec((1, tl, H * D), lambda n, l: (n, l, 0)),
        ),
        compiler_params=pltpu.CompilerParams(
            dimension_semantics=("parallel", "parallel"),
            vmem_limit_bytes=vmem_limit),
    )(*args)

    # Free trailing-dim split (no HBM transpose round trip).
    return out.reshape(N, L, H, D)


def _reference(queries, keys, values, w_pre, w_post, amask, kmask, softmax_temp=None):
    N, L, H, E = queries.shape
    temp = softmax_temp if softmax_temp is not None else 1.0 / sqrt(E)
    q = queries * temp
    qk = jnp.einsum('nlhe,nshe->nhls', q, keys)
    qk = jnp.einsum('hg,ngls->nhls', w_pre, qk)
    qk = qk + amask[None, None, :, :]
    qk = qk + kmask[:, None, None, :]
    a = jax.nn.softmax(qk, axis=-1)
    a = jnp.einsum('hg,ngls->nhls', w_post, a)
    return jnp.einsum('nhls,nshd->nlhd', a, values)


if __name__ == "__main__":
    N, L, S, H, E, D = 2, 32, 32, 8, 32, 32

    key = jax.random.PRNGKey(0)
    kq, kk, kv, kw1, kw2 = jax.random.split(key, 5)

    queries = jax.random.normal(kq, (N, L, H, E), dtype=jnp.float32)
    keys = jax.random.normal(kk, (N, S, H, E), dtype=jnp.float32)
    values = jax.random.normal(kv, (N, S, H, D), dtype=jnp.float32)

    # Conv2d(heads, heads, 1, bias=False) weights -> (H, H) head-mixing matrices.
    w_pre = jax.random.normal(kw1, (H, H), dtype=jnp.float32) / sqrt(H)
    w_post = jax.random.normal(kw2, (H, H), dtype=jnp.float32) / sqrt(H)

    # Additive masks (finite large-negative, like BaseMask.additive_matrix):
    # causal attention mask + key-length mask blanking the last 8 keys of batch 1.
    neg = jnp.float32(-1e9)
    causal_mask = jnp.where(jnp.arange(S)[None, :] <= jnp.arange(L)[:, None],
                            0.0, neg).astype(jnp.float32)        # (L, S)
    key_valid = jnp.arange(S)[None, :] < jnp.array([[S], [S - 8]])
    key_len_add = jnp.where(key_valid, 0.0, neg).astype(jnp.float32)  # (N, S)

    ref = _reference(queries, keys, values, w_pre, w_post, causal_mask, key_len_add)

    # Tolerances reflect the bf16 post-softmax head mix + EUP approx reciprocal.
    tol = dict(atol=3e-2, rtol=3e-2)

    # Path 1: arbitrary HBM mask (shipped as bf16); query_tile=16 forces a (2,2)
    # grid so the L-tiling / S-padding path is exercised.
    out1 = jax.block_until_ready(
        talking_head_attention(queries, keys, values, w_pre, w_post,
                               attn_mask_add=causal_mask, key_len_add=key_len_add,
                               query_tile=16))
    assert out1.shape == (N, L, H, D)
    assert jnp.allclose(out1, ref, **tol), (
        "masked path max abs err", float(jnp.max(jnp.abs(out1 - ref))))

    # Path 2: in-kernel causal mask (no HBM attention-mask traffic).
    out2 = jax.block_until_ready(
        talking_head_attention(queries, keys, values, w_pre, w_post,
                               key_len_add=key_len_add, causal=True,
                               query_tile=16))
    assert out2.shape == (N, L, H, D)
    assert jnp.allclose(out2, ref, **tol), (
        "causal path max abs err", float(jnp.max(jnp.abs(out2 - ref))))

    print("KERNEL_OK")
</pallas_src>

<mosaic_0001>
module attributes {stable_mosaic.version = 11 : i64} {
  func.func @_talking_head_kernel_masked(%arg0: i32, %arg1: i32, %arg2: memref<8x8xf32, #tpu.memory_space<vmem>>, %arg3: memref<8x8xbf16, #tpu.memory_space<vmem>>, %arg4: memref<1x1x128xbf16, #tpu.memory_space<vmem>>, %arg5: memref<16x128xbf16, #tpu.memory_space<vmem>>, %arg6: memref<1x8x16x32xf32, #tpu.memory_space<vmem>>, %arg7: memref<1x8x32x128xf32, #tpu.memory_space<vmem>>, %arg8: memref<1x8x128x32xf32, #tpu.memory_space<vmem>>, %arg9: memref<1x16x256xf32, #tpu.memory_space<vmem>>) attributes {dimension_semantics = [#tpu.dimension_semantics<parallel>, #tpu.dimension_semantics<parallel>], iteration_bounds = array<i64: 2, 2>, scalar_prefetch = 0 : i64, scratch_operands = 0 : i64, tpu.core_type = #tpu.core_type<tc>, window_params = [{pipeline_mode = #tpu.pipeline_mode<synchronous>, transform_indices = @transform_0, window_bounds = array<i64: 8, 8>}, {pipeline_mode = #tpu.pipeline_mode<synchronous>, transform_indices = @transform_1, window_bounds = array<i64: 8, 8>}, {transform_indices = @transform_2, window_bounds = array<i64: 1, 1, 128>}, {transform_indices = @transform_3, window_bounds = array<i64: 16, 128>}, {transform_indices = @transform_4, window_bounds = array<i64: 1, 8, 16, 32>}, {transform_indices = @transform_5, window_bounds = array<i64: 1, 8, 32, 128>}, {transform_indices = @transform_6, window_bounds = array<i64: 1, 8, 128, 32>}, {transform_indices = @transform_7, window_bounds = array<i64: 1, 16, 256>}]} {
    %c0 = arith.constant 0 : index
    %c0_0 = arith.constant 0 : index
    %c0_1 = arith.constant 0 : index
    %c0_2 = arith.constant 0 : index
    %0 = vector.load %arg6[%c0, %c0_0, %c0_1, %c0_2] : memref<1x8x16x32xf32, #tpu.memory_space<vmem>>, vector<1x8x16x32xf32>
    %1 = vector.shape_cast %0 : vector<1x8x16x32xf32> to vector<8x16x32xf32>
    %c0_3 = arith.constant 0 : index
    %c0_4 = arith.constant 0 : index
    %c0_5 = arith.constant 0 : index
    %c0_6 = arith.constant 0 : index
    %2 = vector.load %arg7[%c0_3, %c0_4, %c0_5, %c0_6] : memref<1x8x32x128xf32, #tpu.memory_space<vmem>>, vector<1x8x32x128xf32>
    %3 = vector.shape_cast %2 : vector<1x8x32x128xf32> to vector<8x32x128xf32>
    %c0_7 = arith.constant 0 : index
    %c0_8 = arith.constant 0 : index
    %c0_9 = arith.constant 0 : index
    %c0_10 = arith.constant 0 : index
    %4 = vector.load %arg8[%c0_7, %c0_8, %c0_9, %c0_10] : memref<1x8x128x32xf32, #tpu.memory_space<vmem>>, vector<1x8x128x32xf32>
    %5 = vector.shape_cast %4 : vector<1x8x128x32xf32> to vector<8x128x32xf32>
    "tpu.trace_start"() <{level = 10 : i32, message = "hle,hes->hls"}> : () -> ()
    %cst = arith.constant dense<0.000000e+00> : vector<8x16x128xf32>
    %6 = tpu.matmul %1, %3, %cst {dimension_numbers = #tpu.dot_dimension_numbers<[2], [1], [1], [2], [0, 0, 0, 1, 1, 2], [0], [0]>} : vector<8x16x32xf32>, vector<8x32x128xf32>, vector<8x16x128xf32> -> vector<8x16x128xf32>
    "tpu.trace_stop"() : () -> ()
    %c0_11 = arith.constant 0 : index
    %c0_12 = arith.constant 0 : index
    %7 = vector.load %arg2[%c0_11, %c0_12] : memref<8x8xf32, #tpu.memory_space<vmem>>, vector<8x8xf32>
    %8 = vector.shape_cast %6 : vector<8x16x128xf32> to vector<8x2048xf32>
    %cst_13 = arith.constant dense<0.000000e+00> : vector<8x2048xf32>
    %9 = tpu.matmul %7, %8, %cst_13 {dimension_numbers = #tpu.dot_dimension_numbers<[1], [0], [0], [1], [0, 0, 1, 1], [], []>} : vector<8x8xf32>, vector<8x2048xf32>, vector<8x2048xf32> -> vector<8x2048xf32>
    %10 = vector.shape_cast %9 : vector<8x2048xf32> to vector<8x16x128xf32>
    %c0_14 = arith.constant 0 : index
    %c0_15 = arith.constant 0 : index
    %c0_16 = arith.constant 0 : index
    %11 = vector.load %arg4[%c0_14, %c0_15, %c0_16] : memref<1x1x128xbf16, #tpu.memory_space<vmem>>, vector<1x1x128xbf16>
    %12 = vector.shape_cast %11 : vector<1x1x128xbf16> to vector<1x128xbf16>
    %13 = arith.extf %12 : vector<1x128xbf16> to vector<1x128xf32>
    %c0_17 = arith.constant 0 : index
    %c0_18 = arith.constant 0 : index
    %14 = vector.load %arg5[%c0_17, %c0_18] : memref<16x128xbf16, #tpu.memory_space<vmem>>, vector<16x128xbf16>
    %15 = arith.extf %14 : vector<16x128xbf16> to vector<16x128xf32>
    %16 = vector.broadcast %13 : vector<1x128xf32> to vector<16x128xf32>
    %17 = arith.addf %16, %15 : vector<16x128xf32>
    %18 = vector.shape_cast %17 : vector<16x128xf32> to vector<1x16x128xf32>
    %19 = vector.broadcast %18 : vector<1x16x128xf32> to vector<8x16x128xf32>
    %20 = arith.addf %10, %19 : vector<8x16x128xf32>
    %cst_19 = arith.constant dense<0xFF800000> : vector<8x16xf32>
    %21 = vector.multi_reduction <maximumf>, %20, %cst_19 [2] : vector<8x16x128xf32> to vector<8x16xf32>
    %22 = vector.shape_cast %21 : vector<8x16xf32> to vector<8x16x1xf32>
    %23 = vector.broadcast %22 : vector<8x16x1xf32> to vector<8x16x128xf32>
    %24 = arith.subf %20, %23 : vector<8x16x128xf32>
    %25 = math.exp %24 : vector<8x16x128xf32>
    %cst_20 = arith.constant dense<0.000000e+00> : vector<8x16xf32>
    %26 = vector.multi_reduction <add>, %25, %cst_20 [2] : vector<8x16x128xf32> to vector<8x16xf32>
    %27 = vector.shape_cast %26 : vector<8x16xf32> to vector<8x16x1xf32>
    %28 = tpu.reciprocal %27 {approx = true} : vector<8x16x1xf32> -> vector<8x16x1xf32>
    %29 = vector.broadcast %28 : vector<8x16x1xf32> to vector<8x16x128xf32>
    %30 = arith.mulf %25, %29 : vector<8x16x128xf32>
    %c0_21 = arith.constant 0 : index
    %c0_22 = arith.constant 0 : index
    %31 = vector.load %arg3[%c0_21, %c0_22] : memref<8x8xbf16, #tpu.memory_space<vmem>>, vector<8x8xbf16>
    %32 = arith.truncf %30 : vector<8x16x128xf32> to vector<8x16x128xbf16>
    %33 = vector.shape_cast %32 : vector<8x16x128xbf16> to vector<8x2048xbf16>
    %cst_23 = arith.constant dense<0.000000e+00> : vector<8x2048xf32>
    %34 = tpu.matmul %31, %33, %cst_23 {dimension_numbers = #tpu.dot_dimension_numbers<[1], [0], [0], [1], [0, 0, 1, 1], [], []>} : vector<8x8xbf16>, vector<8x2048xbf16>, vector<8x2048xf32> -> vector<8x2048xf32>
    %35 = vector.shape_cast %34 : vector<8x2048xf32> to vector<8x16x128xf32>
    "tpu.trace_start"() <{level = 10 : i32, message = "hls,hsd->hld"}> : () -> ()
    %cst_24 = arith.constant dense<0.000000e+00> : vector<8x16x32xf32>
    %36 = tpu.matmul %35, %5, %cst_24 {dimension_numbers = #tpu.dot_dimension_numbers<[2], [1], [1], [2], [0, 0, 0, 1, 1, 2], [0], [0]>} : vector<8x16x128xf32>, vector<8x128x32xf32>, vector<8x16x32xf32> -> vector<8x16x32xf32>
    "tpu.trace_stop"() : () -> ()
    %37 = vector.extract_strided_slice %36 {offsets = [0, 0, 0], sizes = [1, 16, 32], strides = [1, 1, 1]} : vector<8x16x32xf32> to vector<1x16x32xf32>
    %38 = vector.shape_cast %37 : vector<1x16x32xf32> to vector<16x32xf32>
    %39 = vector.extract_strided_slice %36 {offsets = [1, 0, 0], sizes = [1, 16, 32], strides = [1, 1, 1]} : vector<8x16x32xf32> to vector<1x16x32xf32>
    %40 = vector.shape_cast %39 : vector<1x16x32xf32> to vector<16x32xf32>
    %41 = vector.extract_strided_slice %36 {offsets = [2, 0, 0], sizes = [1, 16, 32], strides = [1, 1, 1]} : vector<8x16x32xf32> to vector<1x16x32xf32>
    %42 = vector.shape_cast %41 : vector<1x16x32xf32> to vector<16x32xf32>
    %43 = vector.extract_strided_slice %36 {offsets = [3, 0, 0], sizes = [1, 16, 32], strides = [1, 1, 1]} : vector<8x16x32xf32> to vector<1x16x32xf32>
    %44 = vector.shape_cast %43 : vector<1x16x32xf32> to vector<16x32xf32>
    %45 = vector.extract_strided_slice %36 {offsets = [4, 0, 0], sizes = [1, 16, 32], strides = [1, 1, 1]} : vector<8x16x32xf32> to vector<1x16x32xf32>
    %46 = vector.shape_cast %45 : vector<1x16x32xf32> to vector<16x32xf32>
    %47 = vector.extract_strided_slice %36 {offsets = [5, 0, 0], sizes = [1, 16, 32], strides = [1, 1, 1]} : vector<8x16x32xf32> to vector<1x16x32xf32>
    %48 = vector.shape_cast %47 : vector<1x16x32xf32> to vector<16x32xf32>
    %49 = vector.extract_strided_slice %36 {offsets = [6, 0, 0], sizes = [1, 16, 32], strides = [1, 1, 1]} : vector<8x16x32xf32> to vector<1x16x32xf32>
    %50 = vector.shape_cast %49 : vector<1x16x32xf32> to vector<16x32xf32>
    %51 = vector.extract_strided_slice %36 {offsets = [7, 0, 0], sizes = [1, 16, 32], strides = [1, 1, 1]} : vector<8x16x32xf32> to vector<1x16x32xf32>
    %52 = vector.shape_cast %51 : vector<1x16x32xf32> to vector<16x32xf32>
    %53 = tpu.concatenate %38, %40, %42, %44, %46, %48, %50, %52 in 1 : vector<16x32xf32>, vector<16x32xf32>, vector<16x32xf32>, vector<16x32xf32>, vector<16x32xf32>, vector<16x32xf32>, vector<16x32xf32>, vector<16x32xf32> -> vector<16x256xf32>
    %c0_25 = arith.constant 0 : index
    %c0_26 = arith.constant 0 : index
    %c0_27 = arith.constant 0 : index
    %54 = vector.load %arg9[%c0_25, %c0_26, %c0_27] : memref<1x16x256xf32, #tpu.memory_space<vmem>>, vector<1x16x256xf32>
    %55 = vector.shape_cast %54 : vector<1x16x256xf32> to vector<16x256xf32>
    %56 = vector.shape_cast %53 : vector<16x256xf32> to vector<1x16x256xf32>
    tpu.vector_store %arg9[%c0_25, %c0_26, %c0_27], %56 {strides = array<i32>} : memref<1x16x256xf32, #tpu.memory_space<vmem>>, vector<1x16x256xf32>,
    return
  }
  func.func @transform_0(%arg0: i32, %arg1: i32) -> (i32, i32) {
    %c0_i32 = arith.constant 0 : i32
    %c0_i32_0 = arith.constant 0 : i32
    %c0_i32_1 = arith.constant 0 : i32
    return %c0_i32, %c0_i32_0 : i32, i32
  }
  func.func @transform_1(%arg0: i32, %arg1: i32) -> (i32, i32) {
    %c0_i32 = arith.constant 0 : i32
    %c0_i32_0 = arith.constant 0 : i32
    %c0_i32_1 = arith.constant 0 : i32
    return %c0_i32, %c0_i32_0 : i32, i32
  }
  func.func @transform_2(%arg0: i32, %arg1: i32) -> (i32, i32, i32) {
    %c0_i32 = arith.constant 0 : i32
    %c0_i32_0 = arith.constant 0 : i32
    %c0_i32_1 = arith.constant 0 : i32
    return %arg0, %c0_i32, %c0_i32_0 : i32, i32, i32
  }
  func.func @transform_3(%arg0: i32, %arg1: i32) -> (i32, i32) {
    %c0_i32 = arith.constant 0 : i32
    %c0_i32_0 = arith.constant 0 : i32
    return %arg1, %c0_i32 : i32, i32
  }
  func.func @transform_4(%arg0: i32, %arg1: i32) -> (i32, i32, i32, i32) {
    %c0_i32 = arith.constant 0 : i32
    %c0_i32_0 = arith.constant 0 : i32
    %c0_i32_1 = arith.constant 0 : i32
    return %arg0, %c0_i32, %arg1, %c0_i32_0 : i32, i32, i32, i32
  }
  func.func @transform_5(%arg0: i32, %arg1: i32) -> (i32, i32, i32, i32) {
    %c0_i32 = arith.constant 0 : i32
    %c0_i32_0 = arith.constant 0 : i32
    %c0_i32_1 = arith.constant 0 : i32
    %c0_i32_2 = arith.constant 0 : i32
    return %arg0, %c0_i32, %c0_i32_0, %c0_i32_1 : i32, i32, i32, i32
  }
  func.func @transform_6(%arg0: i32, %arg1: i32) -> (i32, i32, i32, i32) {
    %c0_i32 = arith.constant 0 : i32
    %c0_i32_0 = arith.constant 0 : i32
    %c0_i32_1 = arith.constant 0 : i32
    %c0_i32_2 = arith.constant 0 : i32
    return %arg0, %c0_i32, %c0_i32_0, %c0_i32_1 : i32, i32, i32, i32
  }
  func.func @transform_7(%arg0: i32, %arg1: i32) -> (i32, i32, i32) {
    %c0_i32 = arith.constant 0 : i32
    %c0_i32_0 = arith.constant 0 : i32
    return %arg0, %arg1, %c0_i32 : i32, i32, i32
  }
}

</mosaic_0001>

<llo_original>
// kernel: tpu_custom_call.1
$region0: #{tpu_custom_call.1}
  #allocation0 [shape = 'u32[]', space=smem, size = 0x4, offset = 0x4, fixed_abs, tag = 'smem constant byte address 0x4 - core index']
  #allocation1 [shape = 'u32[144,128]{1,0:T(1,128)}', space=vmem, size = 0x12000, scoped, tag = 'internal scratch']
  %s0 = inlined_call_operand.vmem [shape: f32[8,8], index: 0, kind: input, shape index: {}]
  %s1 = inlined_call_operand.vmem [shape: bf16[8,8], index: 1, kind: input, shape index: {}]
  %s2 = inlined_call_operand.vmem [shape: bf16[2,1,128], index: 2, kind: input, shape index: {}]
  %s3 = inlined_call_operand.vmem [shape: bf16[32,128], index: 3, kind: input, shape index: {}]
  %s4 = inlined_call_operand.vmem [shape: f32[2,8,32,32], index: 4, kind: input, shape index: {}]
  %s5 = inlined_call_operand.vmem [shape: f32[2,8,32,128], index: 5, kind: input, shape index: {}]
  %s6 = inlined_call_operand.vmem [shape: f32[2,8,128,32], index: 6, kind: input, shape index: {}]
  %s7 = inlined_call_operand.hbm [shape: f32[2,32,256], index: 7, kind: output, shape index: {}]
  %s8 = sld [smem:[#allocation0]]
  $region99: #{tpu_custom_call.1} parent=0
    _
  %s10 = ssub.s32 1, %s8
  %s11 = scalar_select 0, %s10, %s8
  $region1: #{tpu_custom_call.1} parent=0
    #allocation2 [shape = 'u8[131072]{0}', space=vmem, size = 0x20000, scoped, tag = 'input window, operand 4']
    #allocation3 [shape = 'u8[32768]{0}', space=vmem, size = 0x8000, scoped, tag = 'output window, operand 0']
    #allocation4 [shape = 's32[2]{0}', space=sflag, size = 0x8, scoped, tag = 'scoped memory for tpu_custom_call.1']
    %12 = vsyncpa [#allocation4], 0
    %s13 = scalar_lea.sflag [#allocation4], 1
    %14 = vsyncpa %s13, 0
    loop: start=0, step=1, limit=6
    $region2: #{tpu_custom_call.1} parent=1 // loop_pre_header
      _
    $region3: #{tpu_custom_call.1} parent=1 // loop_header
      %s16 = sphi 0, %s20
      %p17 = scmp.ge.s32.totalorder %s16, 6
      %s23 = sphi 0, %s35
      %s24 = sphi 0, %s31
      %s25 = sphi 0, %s23
      %s26 = sphi 0, %s24
      %s27 = sphi 0, %s25
      %s28 = sphi 0, %s26
      %s36 = sphi 0, %s36
      %s38 = sphi 0, %s36
      %s39 = sphi 0, %s38
      %s53 = sphi 0, %s39
      %s57 = sphi 0, %s57
      %s59 = sphi 0, %s57
      %s60 = sphi 0, %s59
      %s74 = sphi 0, %s60
      %s80 = sphi 0, %s82
      %s83 = sphi 0, %s80
      %s84 = sphi 0, %s83
      %s100 = sphi 0, %s84
      %s106 = sphi 0, %s108
      %s109 = sphi 0, %s106
      %s110 = sphi 0, %s109
      %s126 = sphi 0, %s110
      %s134 = sphi 0, %s136
      %s137 = sphi 0, %s134
      %s138 = sphi 0, %s137
      %s154 = sphi 0, %s138
      %s160 = sphi 0, %s162
      %s163 = sphi 0, %s160
      %s164 = sphi 0, %s163
      %s180 = sphi 0, %s164
      %s186 = sphi 0, %s188
      %s189 = sphi 0, %s186
      %s190 = sphi 0, %s189
      %s206 = sphi 0, %s190
      %s214 = sphi 0, %s216
      %s217 = sphi 0, %s214
      %s218 = sphi 0, %s217
      %s234 = sphi 0, %s218
    $region4: #{tpu_custom_call.1} parent=1 // loop_header_branch
      %19 = sbr.rel (%p17) target = $region8
    $region5: #{tpu_custom_call.1} parent=1 // loop_body
      %s21 = ssub.s32 %s16, 1
      %s22 = ssub.s32 %s16, 2
      %s29 = sadd.s32 1, %s24
      %p30 = scmp.ge.s32.totalorder %s29, 2
      %s31 = scalar_select %p30, 0, %s29
      %s32 = sadd.s32 1, %s23
      %s33 = scalar_select %p30, %s32, %s23
      %p34 = scmp.ge.s32.totalorder %s33, 2
      %s35 = scalar_select %p34, 0, %s33
      %s37 = sadd.s32 %s36, 1
      %p40 = scmp.eq.s32.totalorder %s16, 3
      %p41 = scmp.ne.s32.totalorder %s36, %s38
      %p42 = scmp.eq.s32.totalorder %s16, 0
      %p43 = por %p41, %p42
      %p44 = scmp.ne.s32.totalorder %s36, %s38
      %p45 = scmp.eq.s32.totalorder %s21, 3
      %p46 = por %p44, %p45
      %p47 = scmp.ne.s32.totalorder %s38, %s39
      %p48 = scmp.eq.s32.totalorder %s21, 0
      %p49 = por %p47, %p48
      %p50 = scmp.ne.s32.totalorder %s38, %s39
      %p51 = scmp.eq.s32.totalorder %s22, 3
      %p52 = por %p50, %p51
      %p54 = scmp.ne.s32.totalorder %s39, %s53
      %p55 = scmp.eq.s32.totalorder %s22, 0
      %p56 = por %p54, %p55
      %s58 = sadd.s32 %s57, 1
      %p61 = scmp.eq.s32.totalorder %s16, 3
      %p62 = scmp.ne.s32.totalorder %s57, %s59
      %p63 = scmp.eq.s32.totalorder %s16, 0
      %p64 = por %p62, %p63
      %p65 = scmp.ne.s32.totalorder %s57, %s59
      %p66 = scmp.eq.s32.totalorder %s21, 3
      %p67 = por %p65, %p66
      %p68 = scmp.ne.s32.totalorder %s59, %s60
      %p69 = scmp.eq.s32.totalorder %s21, 0
      %p70 = por %p68, %p69
      %p71 = scmp.ne.s32.totalorder %s59, %s60
      %p72 = scmp.eq.s32.totalorder %s22, 3
      %p73 = por %p71, %p72
      %p75 = scmp.ne.s32.totalorder %s60, %s74
      %p76 = scmp.eq.s32.totalorder %s22, 0
      %p77 = por %p75, %p76
      %s78 = ssub.s32 %s23, %s35
      %p79 = scmp.eq.s32.totalorder %s78, 0
      %s81 = sadd.s32 %s80, 1
      %s82 = scalar_select %p79, %s80, %s81
      %p85 = pneg %p79
      %p86 = scmp.eq.s32.totalorder %s16, 3
      %p87 = por %p85, %p86
      %p88 = scmp.ne.s32.totalorder %s80, %s83
      %p89 = scmp.eq.s32.totalorder %s16, 0
      %p90 = por %p88, %p89
      %p91 = scmp.ne.s32.totalorder %s80, %s83
      %p92 = scmp.eq.s32.totalorder %s21, 3
      %p93 = por %p91, %p92
      %p94 = scmp.ne.s32.totalorder %s83, %s84
      %p95 = scmp.eq.s32.totalorder %s21, 0
      %p96 = por %p94, %p95
      %p97 = scmp.ne.s32.totalorder %s83, %s84
      %p98 = scmp.eq.s32.totalorder %s22, 3
      %p99 = por %p97, %p98
      %p101 = scmp.ne.s32.totalorder %s84, %s100
      %p102 = scmp.eq.s32.totalorder %s22, 0
      %p103 = por %p101, %p102
      %s104 = ssub.s32 %s24, %s31
      %p105 = scmp.eq.s32.totalorder %s104, 0
      %s107 = sadd.s32 %s106, 1
      %s108 = scalar_select %p105, %s106, %s107
      %p111 = pneg %p105
      %p112 = scmp.eq.s32.totalorder %s16, 3
      %p113 = por %p111, %p112
      %p114 = scmp.ne.s32.totalorder %s106, %s109
      %p115 = scmp.eq.s32.totalorder %s16, 0
      %p116 = por %p114, %p115
      %p117 = scmp.ne.s32.totalorder %s106, %s109
      %p118 = scmp.eq.s32.totalorder %s21, 3
      %p119 = por %p117, %p118
      %p120 = scmp.ne.s32.totalorder %s109, %s110
      %p121 = scmp.eq.s32.totalorder %s21, 0
      %p122 = por %p120, %p121
      %p123 = scmp.ne.s32.totalorder %s109, %s110
      %p124 = scmp.eq.s32.totalorder %s22, 3
      %p125 = por %p123, %p124
      %p127 = scmp.ne.s32.totalorder %s110, %s126
      %p128 = scmp.eq.s32.totalorder %s22, 0
      %p129 = por %p127, %p128
      %s130 = ssub.s32 %s23, %s35
      %s131 = ssub.s32 %s24, %s31
      %s132 = sor.u32 %s130, %s131
      %p133 = scmp.eq.s32.totalorder %s132, 0
      %s135 = sadd.s32 %s134, 1
      %s136 = scalar_select %p133, %s134, %s135
      %p139 = pneg %p133
      %p140 = scmp.eq.s32.totalorder %s16, 3
      %p141 = por %p139, %p140
      %p142 = scmp.ne.s32.totalorder %s134, %s137
      %p143 = scmp.eq.s32.totalorder %s16, 0
      %p144 = por %p142, %p143
      %p145 = scmp.ne.s32.totalorder %s134, %s137
      %p146 = scmp.eq.s32.totalorder %s21, 3
      %p147 = por %p145, %p146
      %p148 = scmp.ne.s32.totalorder %s137, %s138
      %p149 = scmp.eq.s32.totalorder %s21, 0
      %p150 = por %p148, %p149
      %p151 = scmp.ne.s32.totalorder %s137, %s138
      %p152 = scmp.eq.s32.totalorder %s22, 3
      %p153 = por %p151, %p152
      %p155 = scmp.ne.s32.totalorder %s138, %s154
      %p156 = scmp.eq.s32.totalorder %s22, 0
      %p157 = por %p155, %p156
      %s158 = ssub.s32 %s23, %s35
      %p159 = scmp.eq.s32.totalorder %s158, 0
      %s161 = sadd.s32 %s160, 1
      %s162 = scalar_select %p159, %s160, %s161
      %p165 = pneg %p159
      %p166 = scmp.eq.s32.totalorder %s16, 3
      %p167 = por %p165, %p166
      %p168 = scmp.ne.s32.totalorder %s160, %s163
      %p169 = scmp.eq.s32.totalorder %s16, 0
      %p170 = por %p168, %p169
      %p171 = scmp.ne.s32.totalorder %s160, %s163
      %p172 = scmp.eq.s32.totalorder %s21, 3
      %p173 = por %p171, %p172
      %p174 = scmp.ne.s32.totalorder %s163, %s164
      %p175 = scmp.eq.s32.totalorder %s21, 0
      %p176 = por %p174, %p175
      %p177 = scmp.ne.s32.totalorder %s163, %s164
      %p178 = scmp.eq.s32.totalorder %s22, 3
      %p179 = por %p177, %p178
      %p181 = scmp.ne.s32.totalorder %s164, %s180
      %p182 = scmp.eq.s32.totalorder %s22, 0
      %p183 = por %p181, %p182
      %s184 = ssub.s32 %s23, %s35
      %p185 = scmp.eq.s32.totalorder %s184, 0
      %s187 = sadd.s32 %s186, 1
      %s188 = scalar_select %p185, %s186, %s187
      %p191 = pneg %p185
      %p192 = scmp.eq.s32.totalorder %s16, 3
      %p193 = por %p191, %p192
      %p194 = scmp.ne.s32.totalorder %s186, %s189
      %p195 = scmp.eq.s32.totalorder %s16, 0
      %p196 = por %p194, %p195
      %p197 = scmp.ne.s32.totalorder %s186, %s189
      %p198 = scmp.eq.s32.totalorder %s21, 3
      %p199 = por %p197, %p198
      %p200 = scmp.ne.s32.totalorder %s189, %s190
      %p201 = scmp.eq.s32.totalorder %s21, 0
      %p202 = por %p200, %p201
      %p203 = scmp.ne.s32.totalorder %s189, %s190
      %p204 = scmp.eq.s32.totalorder %s22, 3
      %p205 = por %p203, %p204
      %p207 = scmp.ne.s32.totalorder %s190, %s206
      %p208 = scmp.eq.s32.totalorder %s22, 0
      %p209 = por %p207, %p208
      %s210 = ssub.s32 %s23, %s35
      %s211 = ssub.s32 %s24, %s31
      %s212 = sor.u32 %s210, %s211
      %p213 = scmp.eq.s32.totalorder %s212, 0
      %s215 = sadd.s32 %s214, 1
      %s216 = scalar_select %p213, %s214, %s215
      %p219 = pneg %p213
      %p220 = scmp.eq.s32.totalorder %s16, 3
      %p221 = por %p219, %p220
      %p222 = scmp.ne.s32.totalorder %s214, %s217
      %p223 = scmp.eq.s32.totalorder %s16, 0
      %p224 = por %p222, %p223
      %p225 = scmp.ne.s32.totalorder %s214, %s217
      %p226 = scmp.eq.s32.totalorder %s21, 3
      %p227 = por %p225, %p226
      %p228 = scmp.ne.s32.totalorder %s217, %s218
      %p229 = scmp.eq.s32.totalorder %s21, 0
      %p230 = por %p228, %p229
      %p231 = scmp.ne.s32.totalorder %s217, %s218
      %p232 = scmp.eq.s32.totalorder %s22, 3
      %p233 = por %p231, %p232
      %p235 = scmp.ne.s32.totalorder %s218, %s234
      %p236 = scmp.eq.s32.totalorder %s22, 0
      %p237 = por %p235, %p236
      %p238 = scmp.le.s32.totalorder 1, %s16
      %p239 = scmp.lt.s32.totalorder %s16, 5
      %p240 = pnand %p238, %p239
      %p241 = pneg %p240
      // Predicated region
      $region9: #{tpu_custom_call.1} parent=5 // pred_check
        _
      $region10: #{tpu_custom_call.1} parent=5 // pred_check_branch
        %243 = sbr.rel (%p240) target = $region12
      $region11: #{tpu_custom_call.1} parent=5 // pred_region
        %s244 = ssub.s32 %s16, 1
        // Predicated region
        $region13: #{tpu_custom_call.1} parent=11 // pred_check
          %p245 = pneg %p49
        $region14: #{tpu_custom_call.1} parent=11 // pred_check_branch
          %247 = sbr.rel (%p245) target = $region16
        $region15: #{tpu_custom_call.1} parent=11 // pred_region
          _
        $region16: #{tpu_custom_call.1} parent=11 // pred_fallthru
          _
        // Predicated region
        $region17: #{tpu_custom_call.1} parent=11 // pred_check
          %p248 = pneg %p70
        $region18: #{tpu_custom_call.1} parent=11 // pred_check_branch
          %250 = sbr.rel (%p248) target = $region20
        $region19: #{tpu_custom_call.1} parent=11 // pred_region
          _
        $region20: #{tpu_custom_call.1} parent=11 // pred_fallthru
          _
      $region12: #{tpu_custom_call.1} parent=5 // pred_fallthru
        _
      %p251 = scmp.lt.s32.totalorder %s16, 4
      // Predicated region
      $region21: #{tpu_custom_call.1} parent=5 // pred_check
        %p252 = pneg %p251
      $region22: #{tpu_custom_call.1} parent=5 // pred_check_branch
        %254 = sbr.rel (%p252) target = $region24
      $region23: #{tpu_custom_call.1} parent=5 // pred_region
        // Predicated region
        $region25: #{tpu_custom_call.1} parent=23 // pred_check
          %p255 = pneg %p90
        $region26: #{tpu_custom_call.1} parent=23 // pred_check_branch
          %257 = sbr.rel (%p255) target = $region28
        $region27: #{tpu_custom_call.1} parent=23 // pred_region
          %p258 = scmp.lt.s32.totalorder %s23, 1
          %s259 = scalar_select %p258, %s23, 1
          %s260 = scalar_lea.vmem %s2, %s259
        $region28: #{tpu_custom_call.1} parent=23 // pred_fallthru
          _
        // Predicated region
        $region29: #{tpu_custom_call.1} parent=23 // pred_check
          %p261 = pneg %p116
        $region30: #{tpu_custom_call.1} parent=23 // pred_check_branch
          %263 = sbr.rel (%p261) target = $region32
        $region31: #{tpu_custom_call.1} parent=23 // pred_region
          %s264 = smul.u32 2, %s24
          %p265 = scmp.lt.s32.totalorder %s264, 3
          %s266 = scalar_select %p265, %s264, 3
          %s267 = smul.addr %s266, 4
          %s268 = scalar_lea.vmem %s3, %s267
          %s269 = smul.u32 2, %s24
        $region32: #{tpu_custom_call.1} parent=23 // pred_fallthru
          _
        // Predicated region
        $region33: #{tpu_custom_call.1} parent=23 // pred_check
          %p270 = pneg %p144
        $region34: #{tpu_custom_call.1} parent=23 // pred_check_branch
          %272 = sbr.rel (%p270) target = $region36
        $region35: #{tpu_custom_call.1} parent=23 // pred_region
          %s273 = sand.u32 %s134, 1
          %s274 = sand.u32 %s134, 1
          %s275 = smul.addr %s274, 128
          %s276 = scalar_lea.vmem [#allocation2], %s275
          %s277 = smul.u32 2, %s24
          %s278 = smul.addr %s23, 32
          %s279 = sadd.s32 %s277, %s278
          %s280 = smul.addr %s279, 8
          %s281 = scalar_lea.vmem %s4, %s280
          // Predicated region
          $region37: #{tpu_custom_call.1} parent=35 // pred_check
            _
          $region38: #{tpu_custom_call.1} parent=35 // pred_check_branch
            %283 = sbr.rel (0) target = $region40
          $region39: #{tpu_custom_call.1} parent=35 // pred_region
            // Predicated region
            $region41: #{tpu_custom_call.1} parent=39 // pred_check
              _
            $region42: #{tpu_custom_call.1} parent=39 // pred_check_branch
              %285 = sbr.rel (0) target = $region44
            $region43: #{tpu_custom_call.1} parent=39 // pred_region
              // Predicated region
              $region56: #{tpu_custom_call.1} parent=43 // pred_check
                _
              $region57: #{tpu_custom_call.1} parent=43 // pred_check_branch
                %331 = sbr.rel (0) target = $region59
              $region58: #{tpu_custom_call.1} parent=43 // pred_region
                loop: start=0, step=1, limit=1
                $region60: #{tpu_custom_call.1} parent=58 // loop_pre_header
                  _
                $region61: #{tpu_custom_call.1} parent=58 // loop_header
                  %s333 = sphi 0, %s337
                  %p334 = scmp.ge.s32.totalorder %s333, 1
                  %s338 = sphi %s281, %s281
                  %s339 = sphi %s276, %s276
                $region62: #{tpu_custom_call.1} parent=58 // loop_header_branch
                  %336 = sbr.rel (%p334) target = $region66
                $region63: #{tpu_custom_call.1} parent=58 // loop_body
                  %v340 = vld [vmem:[%s338] sm:$0xff]
                  %341 = vst [vmem:[%s339] sm:$0xff] %v340
                  %v342 = vld [vmem:[%s338 + $0x8] sm:$0xff]
                  %343 = vst [vmem:[%s339 + $0x8] sm:$0xff] %v342
                  %v344 = vld [vmem:[%s338 + $0x20] sm:$0xff]
                  %345 = vst [vmem:[%s339 + $0x10] sm:$0xff] %v344
                  %v346 = vld [vmem:[%s338 + $0x28] sm:$0xff]
                  %347 = vst [vmem:[%s339 + $0x18] sm:$0xff] %v346
                  %v348 = vld [vmem:[%s338 + $0x40] sm:$0xff]
                  %349 = vst [vmem:[%s339 + $0x20] sm:$0xff] %v348
                  %v350 = vld [vmem:[%s338 + $0x48] sm:$0xff]
                  %351 = vst [vmem:[%s339 + $0x28] sm:$0xff] %v350
                  %v352 = vld [vmem:[%s338 + $0x60] sm:$0xff]
                  %353 = vst [vmem:[%s339 + $0x30] sm:$0xff] %v352
                  %v354 = vld [vmem:[%s338 + $0x68] sm:$0xff]
                  %355 = vst [vmem:[%s339 + $0x38] sm:$0xff] %v354
                  %v356 = vld [vmem:[%s338 + $0x80] sm:$0xff]
                  %357 = vst [vmem:[%s339 + $0x40] sm:$0xff] %v356
                  %v358 = vld [vmem:[%s338 + $0x88] sm:$0xff]
                  %359 = vst [vmem:[%s339 + $0x48] sm:$0xff] %v358
                  %v360 = vld [vmem:[%s338 + $0xa0] sm:$0xff]
                  %361 = vst [vmem:[%s339 + $0x50] sm:$0xff] %v360
                  %v362 = vld [vmem:[%s338 + $0xa8] sm:$0xff]
                  %363 = vst [vmem:[%s339 + $0x58] sm:$0xff] %v362
                  %v364 = vld [vmem:[%s338 + $0xc0] sm:$0xff]
                  %365 = vst [vmem:[%s339 + $0x60] sm:$0xff] %v364
                  %v366 = vld [vmem:[%s338 + $0xc8] sm:$0xff]
                  %367 = vst [vmem:[%s339 + $0x68] sm:$0xff] %v366
                  %v368 = vld [vmem:[%s338 + $0xe0] sm:$0xff]
                  %369 = vst [vmem:[%s339 + $0x70] sm:$0xff] %v368
                  %v370 = vld [vmem:[%s338 + $0xe8] sm:$0xff]
                  %371 = vst [vmem:[%s339 + $0x78] sm:$0xff] %v370
                $region64: #{tpu_custom_call.1} parent=58 // loop_footer
                  %s337 = sadd.s32 1, %s333
                $region65: #{tpu_custom_call.1} parent=58 // loop_footer_branch
                  %332 = sbr.rel target = $region61
                $region66: #{tpu_custom_call.1} parent=58 // loop_exit
                  _
              $region59: #{tpu_custom_call.1} parent=43 // pred_fallthru
                _
              // Predicated region
              $region67: #{tpu_custom_call.1} parent=43 // pred_check
                _
              $region68: #{tpu_custom_call.1} parent=43 // pred_check_branch
                %373 = sbr.rel target = $region70
              $region69: #{tpu_custom_call.1} parent=43 // pred_region
                _
              $region70: #{tpu_custom_call.1} parent=43 // pred_fallthru
                _
            $region44: #{tpu_custom_call.1} parent=39 // pred_fallthru
              _
            // Predicated region
            $region45: #{tpu_custom_call.1} parent=39 // pred_check
              _
            $region46: #{tpu_custom_call.1} parent=39 // pred_check_branch
              %287 = sbr.rel target = $region48
            $region47: #{tpu_custom_call.1} parent=39 // pred_region
              %s289 = ssub.s32 256, 1
              loop: start=0, step=1, limit=1
              $region49: #{tpu_custom_call.1} parent=47 // loop_pre_header
                _
              $region50: #{tpu_custom_call.1} parent=47 // loop_header
                %s291 = sphi 0, %s295
                %p292 = scmp.ge.s32.totalorder %s291, 1
                %s296 = sphi %s281, %s281
                %s297 = sphi %s276, %s276
              $region51: #{tpu_custom_call.1} parent=47 // loop_header_branch
                %294 = sbr.rel (%p292) target = $region55
              $region52: #{tpu_custom_call.1} parent=47 // loop_body
                %v298 = vld [vmem:[%s296] sm:%s289]
                %299 = vst [vmem:[%s297] sm:%s289] %v298
                %v300 = vld [vmem:[%s296 + $0x8] sm:%s289]
                %301 = vst [vmem:[%s297 + $0x8] sm:%s289] %v300
                %v302 = vld [vmem:[%s296 + $0x20] sm:%s289]
                %303 = vst [vmem:[%s297 + $0x10] sm:%s289] %v302
                %v304 = vld [vmem:[%s296 + $0x28] sm:%s289]
                %305 = vst [vmem:[%s297 + $0x18] sm:%s289] %v304
                %v306 = vld [vmem:[%s296 + $0x40] sm:%s289]
                %307 = vst [vmem:[%s297 + $0x20] sm:%s289] %v306
                %v308 = vld [vmem:[%s296 + $0x48] sm:%s289]
                %309 = vst [vmem:[%s297 + $0x28] sm:%s289] %v308
                %v310 = vld [vmem:[%s296 + $0x60] sm:%s289]
                %311 = vst [vmem:[%s297 + $0x30] sm:%s289] %v310
                %v312 = vld [vmem:[%s296 + $0x68] sm:%s289]
                %313 = vst [vmem:[%s297 + $0x38] sm:%s289] %v312
                %v314 = vld [vmem:[%s296 + $0x80] sm:%s289]
                %315 = vst [vmem:[%s297 + $0x40] sm:%s289] %v314
                %v316 = vld [vmem:[%s296 + $0x88] sm:%s289]
                %317 = vst [vmem:[%s297 + $0x48] sm:%s289] %v316
                %v318 = vld [vmem:[%s296 + $0xa0] sm:%s289]
                %319 = vst [vmem:[%s297 + $0x50] sm:%s289] %v318
                %v320 = vld [vmem:[%s296 + $0xa8] sm:%s289]
                %321 = vst [vmem:[%s297 + $0x58] sm:%s289] %v320
                %v322 = vld [vmem:[%s296 + $0xc0] sm:%s289]
                %323 = vst [vmem:[%s297 + $0x60] sm:%s289] %v322
                %v324 = vld [vmem:[%s296 + $0xc8] sm:%s289]
                %325 = vst [vmem:[%s297 + $0x68] sm:%s289] %v324
                %v326 = vld [vmem:[%s296 + $0xe0] sm:%s289]
                %327 = vst [vmem:[%s297 + $0x70] sm:%s289] %v326
                %v328 = vld [vmem:[%s296 + $0xe8] sm:%s289]
                %329 = vst [vmem:[%s297 + $0x78] sm:%s289] %v328
              $region53: #{tpu_custom_call.1} parent=47 // loop_footer
                %s295 = sadd.s32 1, %s291
              $region54: #{tpu_custom_call.1} parent=47 // loop_footer_branch
                %290 = sbr.rel target = $region50
              $region55: #{tpu_custom_call.1} parent=47 // loop_exit
                _
            $region48: #{tpu_custom_call.1} parent=39 // pred_fallthru
              _
          $region40: #{tpu_custom_call.1} parent=35 // pred_fallthru
            _
          %374 = vnop
        $region36: #{tpu_custom_call.1} parent=23 // pred_fallthru
          _
        // Predicated region
        $region71: #{tpu_custom_call.1} parent=23 // pred_check
          %p375 = pneg %p170
        $region72: #{tpu_custom_call.1} parent=23 // pred_check_branch
          %377 = sbr.rel (%p375) target = $region74
        $region73: #{tpu_custom_call.1} parent=23 // pred_region
          %p378 = scmp.lt.s32.totalorder %s23, 1
          %s379 = scalar_select %p378, %s23, 1
          %s380 = smul.addr %s379, 32
          %s381 = smul.addr %s380, 8
          %s382 = scalar_lea.vmem %s5, %s381
        $region74: #{tpu_custom_call.1} parent=23 // pred_fallthru
          _
        // Predicated region
        $region75: #{tpu_custom_call.1} parent=23 // pred_check
          %p383 = pneg %p196
        $region76: #{tpu_custom_call.1} parent=23 // pred_check_branch
          %385 = sbr.rel (%p383) target = $region78
        $region77: #{tpu_custom_call.1} parent=23 // pred_region
          %p386 = scmp.lt.s32.totalorder %s23, 1
          %s387 = scalar_select %p386, %s23, 1
          %s388 = smul.addr %s387, 128
          %s389 = smul.addr %s388, 8
          %s390 = scalar_lea.vmem %s6, %s389
        $region78: #{tpu_custom_call.1} parent=23 // pred_fallthru
          _
      $region24: #{tpu_custom_call.1} parent=5 // pred_fallthru
        _
      %p391 = scmp.le.s32.totalorder 1, %s16
      %p392 = scmp.lt.s32.totalorder %s16, 5
      %p393 = pnand %p391, %p392
      %p394 = pneg %p393
      // Predicated region
      $region79: #{tpu_custom_call.1} parent=5 // pred_check
        _
      $region80: #{tpu_custom_call.1} parent=5 // pred_check_branch
        %396 = sbr.rel (%p393) target = $region82
      $region81: #{tpu_custom_call.1} parent=5 // pred_region
        %s397 = ssub.s32 %s16, 1
        %s398 = sand.u32 %s137, 1
        %s399 = sand.u32 %s137, 1
        %s400 = smul.addr %s399, 128
        %s401 = scalar_lea.vmem [#allocation2], %s400
        // Predicated region
        $region83: #{tpu_custom_call.1} parent=81 // pred_check
          %p402 = pneg %p150
        $region84: #{tpu_custom_call.1} parent=81 // pred_check_branch
          %404 = sbr.rel (%p402) target = $region86
        $region85: #{tpu_custom_call.1} parent=81 // pred_region
          _
        $region86: #{tpu_custom_call.1} parent=81 // pred_fallthru
          _
        %p405 = pneg %p49
        %p406 = pneg %p46
        %p407 = pneg %p70
        %p408 = pneg %p67
        %p409 = scmp.lt.s32.totalorder %s25, 1
        %s410 = scalar_select %p409, %s25, 1
        %s411 = scalar_lea.vmem %s2, %s410
        %p412 = pneg %p96
        %p413 = pneg %p93
        %s414 = smul.u32 2, %s26
        %p415 = scmp.lt.s32.totalorder %s414, 3
        %s416 = scalar_select %p415, %s414, 3
        %s417 = smul.addr %s416, 4
        %s418 = scalar_lea.vmem %s3, %s417
        %p419 = pneg %p122
        %p420 = pneg %p119
        %s421 = sand.u32 %s137, 1
        %s422 = sand.u32 %s137, 1
        %s423 = smul.addr %s422, 128
        %s424 = scalar_lea.vmem [#allocation2], %s423
        %p425 = pneg %p150
        %p426 = pneg %p147
        %p427 = scmp.lt.s32.totalorder %s25, 1
        %s428 = scalar_select %p427, %s25, 1
        %s429 = smul.addr %s428, 32
        %s430 = smul.addr %s429, 8
        %s431 = scalar_lea.vmem %s5, %s430
        %p432 = pneg %p176
        %p433 = pneg %p173
        %p434 = scmp.lt.s32.totalorder %s25, 1
        %s435 = scalar_select %p434, %s25, 1
        %s436 = smul.addr %s435, 128
        %s437 = smul.addr %s436, 8
        %s438 = scalar_lea.vmem %s6, %s437
        %p439 = pneg %p202
        %p440 = pneg %p199
        %p441 = pneg %p230
        %p442 = pneg %p227
        %s443 = sand.u32 %s217, 1
        %s444 = scalar_lea.sflag [#allocation4], %s443
        %s445 = sand.u32 %s217, 1
        %s446 = smul.addr %s445, 32
        %s447 = scalar_lea.vmem [#allocation3], %s446
        %p448 = scmp.lt.s32.totalorder %s25, 1
        %s449 = scalar_select %p448, %s25, 1
        %s450 = scalar_lea.vmem %s2, %s449
        %s451 = smul.u32 2, %s26
        %p452 = scmp.lt.s32.totalorder %s451, 3
        %s453 = scalar_select %p452, %s451, 3
        %s454 = smul.addr %s453, 4
        %s455 = scalar_lea.vmem %s3, %s454
        %s456 = smul.u32 2, %s26
        %s457 = smul.u32 2, %s26
        %p458 = scmp.lt.s32.totalorder %s25, 1
        %s459 = scalar_select %p458, %s25, 1
        %s460 = smul.addr %s459, 32
        %s461 = smul.addr %s460, 8
        %s462 = scalar_lea.vmem %s5, %s461
        %p463 = scmp.lt.s32.totalorder %s25, 1
        %s464 = scalar_select %p463, %s25, 1
        %s465 = smul.addr %s464, 128
        %s466 = smul.addr %s465, 8
        %s467 = scalar_lea.vmem %s6, %s466
        %s468 = smul.u32 2, %s26
        %v470 = vld [vmem:[%s401] sm:$0xff]
        %v471 = vld [vmem:[%s401 + $0x8] sm:$0xff]
        %v472 = vld [vmem:[%s401 + $0x10] sm:$0xff]
        %v473 = vld [vmem:[%s401 + $0x18] sm:$0xff]
        %v474 = vld [vmem:[%s401 + $0x20] sm:$0xff]
        %v475 = vld [vmem:[%s401 + $0x28] sm:$0xff]
        %v476 = vld [vmem:[%s401 + $0x30] sm:$0xff]
        %v477 = vld [vmem:[%s401 + $0x38] sm:$0xff]
        %v478 = vld [vmem:[%s401 + $0x40] sm:$0xff]
        %v479 = vld [vmem:[%s401 + $0x48] sm:$0xff]
        %v480 = vld [vmem:[%s401 + $0x50] sm:$0xff]
        %v481 = vld [vmem:[%s401 + $0x58] sm:$0xff]
        %v482 = vld [vmem:[%s401 + $0x60] sm:$0xff]
        %v483 = vld [vmem:[%s401 + $0x68] sm:$0xff]
        %v484 = vld [vmem:[%s401 + $0x70] sm:$0xff]
        %v485 = vld [vmem:[%s401 + $0x78] sm:$0xff]
        %v486 = vld [vmem:[%s462] sm:$0xff]
        %v487 = vld [vmem:[%s462 + $0x8] sm:$0xff]
        %v488 = vld [vmem:[%s462 + $0x10] sm:$0xff]
        %v489 = vld [vmem:[%s462 + $0x18] sm:$0xff]
        %v490 = vld [vmem:[%s462 + $0x20] sm:$0xff]
        %v491 = vld [vmem:[%s462 + $0x28] sm:$0xff]
        %v492 = vld [vmem:[%s462 + $0x30] sm:$0xff]
        %v493 = vld [vmem:[%s462 + $0x38] sm:$0xff]
        %v494 = vld [vmem:[%s462 + $0x40] sm:$0xff]
        %v495 = vld [vmem:[%s462 + $0x48] sm:$0xff]
        %v496 = vld [vmem:[%s462 + $0x50] sm:$0xff]
        %v497 = vld [vmem:[%s462 + $0x58] sm:$0xff]
        %v498 = vld [vmem:[%s462 + $0x60] sm:$0xff]
        %v499 = vld [vmem:[%s462 + $0x68] sm:$0xff]
        %v500 = vld [vmem:[%s462 + $0x70] sm:$0xff]
        %v501 = vld [vmem:[%s462 + $0x78] sm:$0xff]
        %v502 = vld [vmem:[%s462 + $0x80] sm:$0xff]
        %v503 = vld [vmem:[%s462 + $0x88] sm:$0xff]
        %v504 = vld [vmem:[%s462 + $0x90] sm:$0xff]
        %v505 = vld [vmem:[%s462 + $0x98] sm:$0xff]
        %v506 = vld [vmem:[%s462 + $0xa0] sm:$0xff]
        %v507 = vld [vmem:[%s462 + $0xa8] sm:$0xff]
        %v508 = vld [vmem:[%s462 + $0xb0] sm:$0xff]
        %v509 = vld [vmem:[%s462 + $0xb8] sm:$0xff]
        %v510 = vld [vmem:[%s462 + $0xc0] sm:$0xff]
        %v511 = vld [vmem:[%s462 + $0xc8] sm:$0xff]
        %v512 = vld [vmem:[%s462 + $0xd0] sm:$0xff]
        %v513 = vld [vmem:[%s462 + $0xd8] sm:$0xff]
        %v514 = vld [vmem:[%s462 + $0xe0] sm:$0xff]
        %v515 = vld [vmem:[%s462 + $0xe8] sm:$0xff]
        %v516 = vld [vmem:[%s462 + $0xf0] sm:$0xff]
        %v517 = vld [vmem:[%s462 + $0xf8] sm:$0xff]
        %v518 = vld [vmem:[%s467] sm:$0xff]
        %v519 = vld [vmem:[%s467 + $0x8] sm:$0xff]
        %v520 = vld [vmem:[%s467 + $0x10] sm:$0xff]
        %v521 = vld [vmem:[%s467 + $0x18] sm:$0xff]
        %v522 = vld [vmem:[%s467 + $0x20] sm:$0xff]
        %v523 = vld [vmem:[%s467 + $0x28] sm:$0xff]
        %v524 = vld [vmem:[%s467 + $0x30] sm:$0xff]
        %v525 = vld [vmem:[%s467 + $0x38] sm:$0xff]
        %v526 = vld [vmem:[%s467 + $0x40] sm:$0xff]
        %v527 = vld [vmem:[%s467 + $0x48] sm:$0xff]
        %v528 = vld [vmem:[%s467 + $0x50] sm:$0xff]
        %v529 = vld [vmem:[%s467 + $0x58] sm:$0xff]
        %v530 = vld [vmem:[%s467 + $0x60] sm:$0xff]
        %v531 = vld [vmem:[%s467 + $0x68] sm:$0xff]
        %v532 = vld [vmem:[%s467 + $0x70] sm:$0xff]
        %v533 = vld [vmem:[%s467 + $0x78] sm:$0xff]
        %v534 = vld [vmem:[%s467 + $0x80] sm:$0xff]
        %v535 = vld [vmem:[%s467 + $0x88] sm:$0xff]
        %v536 = vld [vmem:[%s467 + $0x90] sm:$0xff]
        %v537 = vld [vmem:[%s467 + $0x98] sm:$0xff]
        %v538 = vld [vmem:[%s467 + $0xa0] sm:$0xff]
        %v539 = vld [vmem:[%s467 + $0xa8] sm:$0xff]
        %v540 = vld [vmem:[%s467 + $0xb0] sm:$0xff]
        %v541 = vld [vmem:[%s467 + $0xb8] sm:$0xff]
        %v542 = vld [vmem:[%s467 + $0xc0] sm:$0xff]
        %v543 = vld [vmem:[%s467 + $0xc8] sm:$0xff]
        %v544 = vld [vmem:[%s467 + $0xd0] sm:$0xff]
        %v545 = vld [vmem:[%s467 + $0xd8] sm:$0xff]
        %v546 = vld [vmem:[%s467 + $0xe0] sm:$0xff]
        %v547 = vld [vmem:[%s467 + $0xe8] sm:$0xff]
        %v548 = vld [vmem:[%s467 + $0xf0] sm:$0xff]
        %v549 = vld [vmem:[%s467 + $0xf8] sm:$0xff]
        %v550 = vld [vmem:[%s467 + $0x100] sm:$0xff]
        %v551 = vld [vmem:[%s467 + $0x108] sm:$0xff]
        %v552 = vld [vmem:[%s467 + $0x110] sm:$0xff]
        %v553 = vld [vmem:[%s467 + $0x118] sm:$0xff]
        %v554 = vld [vmem:[%s467 + $0x120] sm:$0xff]
        %v555 = vld [vmem:[%s467 + $0x128] sm:$0xff]
        %v556 = vld [vmem:[%s467 + $0x130] sm:$0xff]
        %v557 = vld [vmem:[%s467 + $0x138] sm:$0xff]
        %v558 = vld [vmem:[%s467 + $0x140] sm:$0xff]
        %v559 = vld [vmem:[%s467 + $0x148] sm:$0xff]
        %v560 = vld [vmem:[%s467 + $0x150] sm:$0xff]
        %v561 = vld [vmem:[%s467 + $0x158] sm:$0xff]
        %v562 = vld [vmem:[%s467 + $0x160] sm:$0xff]
        %v563 = vld [vmem:[%s467 + $0x168] sm:$0xff]
        %v564 = vld [vmem:[%s467 + $0x170] sm:$0xff]
        %v565 = vld [vmem:[%s467 + $0x178] sm:$0xff]
        %v566 = vld [vmem:[%s467 + $0x180] sm:$0xff]
        %v567 = vld [vmem:[%s467 + $0x188] sm:$0xff]
        %v568 = vld [vmem:[%s467 + $0x190] sm:$0xff]
        %v569 = vld [vmem:[%s467 + $0x198] sm:$0xff]
        %v570 = vld [vmem:[%s467 + $0x1a0] sm:$0xff]
        %v571 = vld [vmem:[%s467 + $0x1a8] sm:$0xff]
        %v572 = vld [vmem:[%s467 + $0x1b0] sm:$0xff]
        %v573 = vld [vmem:[%s467 + $0x1b8] sm:$0xff]
        %v574 = vld [vmem:[%s467 + $0x1c0] sm:$0xff]
        %v575 = vld [vmem:[%s467 + $0x1c8] sm:$0xff]
        %v576 = vld [vmem:[%s467 + $0x1d0] sm:$0xff]
        %v577 = vld [vmem:[%s467 + $0x1d8] sm:$0xff]
        %v578 = vld [vmem:[%s467 + $0x1e0] sm:$0xff]
        %v579 = vld [vmem:[%s467 + $0x1e8] sm:$0xff]
        %v580 = vld [vmem:[%s467 + $0x1f0] sm:$0xff]
        %v581 = vld [vmem:[%s467 + $0x1f8] sm:$0xff]
        %v582 = vld [vmem:[%s467 + $0x200] sm:$0xff]
        %v583 = vld [vmem:[%s467 + $0x208] sm:$0xff]
        %v584 = vld [vmem:[%s467 + $0x210] sm:$0xff]
        %v585 = vld [vmem:[%s467 + $0x218] sm:$0xff]
        %v586 = vld [vmem:[%s467 + $0x220] sm:$0xff]
        %v587 = vld [vmem:[%s467 + $0x228] sm:$0xff]
        %v588 = vld [vmem:[%s467 + $0x230] sm:$0xff]
        %v589 = vld [vmem:[%s467 + $0x238] sm:$0xff]
        %v590 = vld [vmem:[%s467 + $0x240] sm:$0xff]
        %v591 = vld [vmem:[%s467 + $0x248] sm:$0xff]
        %v592 = vld [vmem:[%s467 + $0x250] sm:$0xff]
        %v593 = vld [vmem:[%s467 + $0x258] sm:$0xff]
        %v594 = vld [vmem:[%s467 + $0x260] sm:$0xff]
        %v595 = vld [vmem:[%s467 + $0x268] sm:$0xff]
        %v596 = vld [vmem:[%s467 + $0x270] sm:$0xff]
        %v597 = vld [vmem:[%s467 + $0x278] sm:$0xff]
        %v598 = vld [vmem:[%s467 + $0x280] sm:$0xff]
        %v599 = vld [vmem:[%s467 + $0x288] sm:$0xff]
        %v600 = vld [vmem:[%s467 + $0x290] sm:$0xff]
        %v601 = vld [vmem:[%s467 + $0x298] sm:$0xff]
        %v602 = vld [vmem:[%s467 + $0x2a0] sm:$0xff]
        %v603 = vld [vmem:[%s467 + $0x2a8] sm:$0xff]
        %v604 = vld [vmem:[%s467 + $0x2b0] sm:$0xff]
        %v605 = vld [vmem:[%s467 + $0x2b8] sm:$0xff]
        %v606 = vld [vmem:[%s467 + $0x2c0] sm:$0xff]
        %v607 = vld [vmem:[%s467 + $0x2c8] sm:$0xff]
        %v608 = vld [vmem:[%s467 + $0x2d0] sm:$0xff]
        %v609 = vld [vmem:[%s467 + $0x2d8] sm:$0xff]
        %v610 = vld [vmem:[%s467 + $0x2e0] sm:$0xff]
        %v611 = vld [vmem:[%s467 + $0x2e8] sm:$0xff]
        %v612 = vld [vmem:[%s467 + $0x2f0] sm:$0xff]
        %v613 = vld [vmem:[%s467 + $0x2f8] sm:$0xff]
        %v614 = vld [vmem:[%s467 + $0x300] sm:$0xff]
        %v615 = vld [vmem:[%s467 + $0x308] sm:$0xff]
        %v616 = vld [vmem:[%s467 + $0x310] sm:$0xff]
        %v617 = vld [vmem:[%s467 + $0x318] sm:$0xff]
        %v618 = vld [vmem:[%s467 + $0x320] sm:$0xff]
        %v619 = vld [vmem:[%s467 + $0x328] sm:$0xff]
        %v620 = vld [vmem:[%s467 + $0x330] sm:$0xff]
        %v621 = vld [vmem:[%s467 + $0x338] sm:$0xff]
        %v622 = vld [vmem:[%s467 + $0x340] sm:$0xff]
        %v623 = vld [vmem:[%s467 + $0x348] sm:$0xff]
        %v624 = vld [vmem:[%s467 + $0x350] sm:$0xff]
        %v625 = vld [vmem:[%s467 + $0x358] sm:$0xff]
        %v626 = vld [vmem:[%s467 + $0x360] sm:$0xff]
        %v627 = vld [vmem:[%s467 + $0x368] sm:$0xff]
        %v628 = vld [vmem:[%s467 + $0x370] sm:$0xff]
        %v629 = vld [vmem:[%s467 + $0x378] sm:$0xff]
        %v630 = vld [vmem:[%s467 + $0x380] sm:$0xff]
        %v631 = vld [vmem:[%s467 + $0x388] sm:$0xff]
        %v632 = vld [vmem:[%s467 + $0x390] sm:$0xff]
        %v633 = vld [vmem:[%s467 + $0x398] sm:$0xff]
        %v634 = vld [vmem:[%s467 + $0x3a0] sm:$0xff]
        %v635 = vld [vmem:[%s467 + $0x3a8] sm:$0xff]
        %v636 = vld [vmem:[%s467 + $0x3b0] sm:$0xff]
        %v637 = vld [vmem:[%s467 + $0x3b8] sm:$0xff]
        %v638 = vld [vmem:[%s467 + $0x3c0] sm:$0xff]
        %v639 = vld [vmem:[%s467 + $0x3c8] sm:$0xff]
        %v640 = vld [vmem:[%s467 + $0x3d0] sm:$0xff]
        %v641 = vld [vmem:[%s467 + $0x3d8] sm:$0xff]
        %v642 = vld [vmem:[%s467 + $0x3e0] sm:$0xff]
        %v643 = vld [vmem:[%s467 + $0x3e8] sm:$0xff]
        %v644 = vld [vmem:[%s467 + $0x3f0] sm:$0xff]
        %v645 = vld [vmem:[%s467 + $0x3f8] sm:$0xff]
        %vm646 = vcmask 261120
        %v648 = vsel %vm646, %v470, 0
        %v651 = vsel %vm646, %v471, 0
        %653 = vmatprep.subr.mxu0 0.0
        %654 = vmatpush1.msra.mxu0 0.0
        %655 = vmatprep.subr.mxu0 0.0
        %656 = vmatpush1.msra.mxu0 0.0
        %657 = vmatprep.subr.mxu0 0.0
        %658 = vmatpush1.msra.mxu0 0.0
        %659 = vmatprep.subr.mxu0 0.0
        %660 = vmatpush1.msra.mxu0 0.0
        %661 = vmatprep.subr.mxu0 0.0
        %662 = vmatpush1.msra.mxu0 0.0
        %663 = vmatprep.subr.mxu0 0.0
        %664 = vmatpush1.msra.mxu0 0.0
        %665 = vmatprep.subr.mxu0 0.0
        %666 = vmatpush1.msra.mxu0 0.0
        %667 = vmatprep.subr.mxu0 0.0
        %668 = vmatpush1.msra.mxu0 0.0
        %669 = vmatprep.subr.mxu0 0.0
        %670 = vmatpush1.msra.mxu0 0.0
        %671 = vmatprep.subr.mxu0 0.0
        %672 = vmatpush1.msra.mxu0 0.0
        %673 = vmatprep.subr.mxu0 0.0
        %674 = vmatpush1.msra.mxu0 0.0
        %675 = vmatprep.subr.mxu0 0.0
        %676 = vmatpush1.msra.mxu0 0.0
        %677 = vmatprep.subr.mxu0 0.0
        %678 = vmatpush1.msra.mxu0 %v489
        %679 = vmatprep.subr.mxu0 0.0
        %680 = vmatpush1.msra.mxu0 %v488
        %681 = vmatprep.subr.mxu0 0.0
        %682 = vmatpush1.msra.mxu0 %v487
        %683 = vmatprep.subr.mxu0 0.0
        %684 = vmatpush1.msra.mxu0 %v486
        %685 = vmatprep.subr.mxu0 0.0
        %686 = vmatpush2.msra.mxu0 0.0
        %687 = vmatprep.subr.mxu0 0.0
        %688 = vmatpush2.msra.mxu0 0.0
        %689 = vmatprep.subr.mxu0 0.0
        %690 = vmatpush2.msra.mxu0 0.0
        %691 = vmatprep.subr.mxu0 0.0
        %692 = vmatpush2.msra.mxu0 0.0
        %693 = vmatprep.subr.mxu0 0.0
        %694 = vmatpush2.msra.mxu0 0.0
        %695 = vmatprep.subr.mxu0 0.0
        %696 = vmatpush2.msra.mxu0 0.0
        %697 = vmatprep.subr.mxu0 0.0
        %698 = vmatpush2.msra.mxu0 0.0
        %699 = vmatprep.subr.mxu0 0.0
        %700 = vmatpush2.msra.mxu0 0.0
        %701 = vmatprep.subr.mxu0 0.0
        %702 = vmatpush2.msra.mxu0 0.0
        %703 = vmatprep.subr.mxu0 0.0
        %704 = vmatpush2.msra.mxu0 0.0
        %705 = vmatprep.subr.mxu0 0.0
        %706 = vmatpush2.msra.mxu0 0.0
        %707 = vmatprep.subr.mxu0 0.0
        %708 = vmatpush2.msra.mxu0 0.0
        %709 = vmatprep.subr.mxu0 0.0
        %710 = vmatpush2.msra.mxu0 0.0
        %711 = vmatprep.subr.mxu0 0.0
        %712 = vmatpush2.msra.mxu0 0.0
        %713 = vmatprep.subr.mxu0 0.0
        %714 = vmatpush2.msra.mxu0 0.0
        %715 = vmatprep.subr.mxu0 0.0
        %716 = vmatpush2.msra.mxu0 0.0
        %717 = vmatprep.mubr.f32.mxu0 0.0
        %718 = vmatmul.mubr.f32.gmra.mxu0 %v648
        %v719 = vpop.f32.mrf.mxu0
        %v720 = vadd.f32 0.0, %v719
        %v721 = vpop.f32.mrf.mxu0
        %722 = vmatprep.mubr.f32.mxu0 0.0
        %723 = vmatmul.mubr.f32.gmra.mxu0 %v651
        %v724 = vpop.f32.mrf.mxu0
        %v725 = vadd.f32 0.0, %v724
        %v726 = vpop.f32.mrf.mxu0
        %727 = vdwg.mxu0
        %v729 = vsel %vm646, %v472, 0
        %v732 = vsel %vm646, %v473, 0
        %734 = vmatprep.subr.mxu0 0.0
        %735 = vmatpush1.msra.mxu0 0.0
        %736 = vmatprep.subr.mxu0 0.0
        %737 = vmatpush1.msra.mxu0 0.0
        %738 = vmatprep.subr.mxu0 0.0
        %739 = vmatpush1.msra.mxu0 0.0
        %740 = vmatprep.subr.mxu0 0.0
        %741 = vmatpush1.msra.mxu0 0.0
        %742 = vmatprep.subr.mxu0 0.0
        %743 = vmatpush1.msra.mxu0 0.0
        %744 = vmatprep.subr.mxu0 0.0
        %745 = vmatpush1.msra.mxu0 0.0
        %746 = vmatprep.subr.mxu0 0.0
        %747 = vmatpush1.msra.mxu0 0.0
        %748 = vmatprep.subr.mxu0 0.0
        %749 = vmatpush1.msra.mxu0 0.0
        %750 = vmatprep.subr.mxu0 0.0
        %751 = vmatpush1.msra.mxu0 0.0
        %752 = vmatprep.subr.mxu0 0.0
        %753 = vmatpush1.msra.mxu0 0.0
        %754 = vmatprep.subr.mxu0 0.0
        %755 = vmatpush1.msra.mxu0 0.0
        %756 = vmatprep.subr.mxu0 0.0
        %757 = vmatpush1.msra.mxu0 0.0
        %758 = vmatprep.subr.mxu0 0.0
        %759 = vmatpush1.msra.mxu0 %v493
        %760 = vmatprep.subr.mxu0 0.0
        %761 = vmatpush1.msra.mxu0 %v492
        %762 = vmatprep.subr.mxu0 0.0
        %763 = vmatpush1.msra.mxu0 %v491
        %764 = vmatprep.subr.mxu0 0.0
        %765 = vmatpush1.msra.mxu0 %v490
        %766 = vmatprep.subr.mxu0 0.0
        %767 = vmatpush2.msra.mxu0 0.0
        %768 = vmatprep.subr.mxu0 0.0
        %769 = vmatpush2.msra.mxu0 0.0
        %770 = vmatprep.subr.mxu0 0.0
        %771 = vmatpush2.msra.mxu0 0.0
        %772 = vmatprep.subr.mxu0 0.0
        %773 = vmatpush2.msra.mxu0 0.0
        %774 = vmatprep.subr.mxu0 0.0
        %775 = vmatpush2.msra.mxu0 0.0
        %776 = vmatprep.subr.mxu0 0.0
        %777 = vmatpush2.msra.mxu0 0.0
        %778 = vmatprep.subr.mxu0 0.0
        %779 = vmatpush2.msra.mxu0 0.0
        %780 = vmatprep.subr.mxu0 0.0
        %781 = vmatpush2.msra.mxu0 0.0
        %782 = vmatprep.subr.mxu0 0.0
        %783 = vmatpush2.msra.mxu0 0.0
        %784 = vmatprep.subr.mxu0 0.0
        %785 = vmatpush2.msra.mxu0 0.0
        %786 = vmatprep.subr.mxu0 0.0
        %787 = vmatpush2.msra.mxu0 0.0
        %788 = vmatprep.subr.mxu0 0.0
        %789 = vmatpush2.msra.mxu0 0.0
        %790 = vmatprep.subr.mxu0 0.0
        %791 = vmatpush2.msra.mxu0 0.0
        %792 = vmatprep.subr.mxu0 0.0
        %793 = vmatpush2.msra.mxu0 0.0
        %794 = vmatprep.subr.mxu0 0.0
        %795 = vmatpush2.msra.mxu0 0.0
        %796 = vmatprep.subr.mxu0 0.0
        %797 = vmatpush2.msra.mxu0 0.0
        %798 = vmatprep.mubr.f32.mxu0 0.0
        %799 = vmatmul.mubr.f32.gmra.mxu0 %v729
        %v800 = vpop.f32.mrf.mxu0
        %v801 = vadd.f32 0.0, %v800
        %v802 = vpop.f32.mrf.mxu0
        %803 = vmatprep.mubr.f32.mxu0 0.0
        %804 = vmatmul.mubr.f32.gmra.mxu0 %v732
        %v805 = vpop.f32.mrf.mxu0
        %v806 = vadd.f32 0.0, %v805
        %v807 = vpop.f32.mrf.mxu0
        %808 = vdwg.mxu0
        %v810 = vsel %vm646, %v474, 0
        %v813 = vsel %vm646, %v475, 0
        %815 = vmatprep.subr.mxu0 0.0
        %816 = vmatpush1.msra.mxu0 0.0
        %817 = vmatprep.subr.mxu0 0.0
        %818 = vmatpush1.msra.mxu0 0.0
        %819 = vmatprep.subr.mxu0 0.0
        %820 = vmatpush1.msra.mxu0 0.0
        %821 = vmatprep.subr.mxu0 0.0
        %822 = vmatpush1.msra.mxu0 0.0
        %823 = vmatprep.subr.mxu0 0.0
        %824 = vmatpush1.msra.mxu0 0.0
        %825 = vmatprep.subr.mxu0 0.0
        %826 = vmatpush1.msra.mxu0 0.0
        %827 = vmatprep.subr.mxu0 0.0
        %828 = vmatpush1.msra.mxu0 0.0
        %829 = vmatprep.subr.mxu0 0.0
        %830 = vmatpush1.msra.mxu0 0.0
        %831 = vmatprep.subr.mxu0 0.0
        %832 = vmatpush1.msra.mxu0 0.0
        %833 = vmatprep.subr.mxu0 0.0
        %834 = vmatpush1.msra.mxu0 0.0
        %835 = vmatprep.subr.mxu0 0.0
        %836 = vmatpush1.msra.mxu0 0.0
        %837 = vmatprep.subr.mxu0 0.0
        %838 = vmatpush1.msra.mxu0 0.0
        %839 = vmatprep.subr.mxu0 0.0
        %840 = vmatpush1.msra.mxu0 %v497
        %841 = vmatprep.subr.mxu0 0.0
        %842 = vmatpush1.msra.mxu0 %v496
        %843 = vmatprep.subr.mxu0 0.0
        %844 = vmatpush1.msra.mxu0 %v495
        %845 = vmatprep.subr.mxu0 0.0
        %846 = vmatpush1.msra.mxu0 %v494
        %847 = vmatprep.subr.mxu0 0.0
        %848 = vmatpush2.msra.mxu0 0.0
        %849 = vmatprep.subr.mxu0 0.0
        %850 = vmatpush2.msra.mxu0 0.0
        %851 = vmatprep.subr.mxu0 0.0
        %852 = vmatpush2.msra.mxu0 0.0
        %853 = vmatprep.subr.mxu0 0.0
        %854 = vmatpush2.msra.mxu0 0.0
        %855 = vmatprep.subr.mxu0 0.0
        %856 = vmatpush2.msra.mxu0 0.0
        %857 = vmatprep.subr.mxu0 0.0
        %858 = vmatpush2.msra.mxu0 0.0
        %859 = vmatprep.subr.mxu0 0.0
        %860 = vmatpush2.msra.mxu0 0.0
        %861 = vmatprep.subr.mxu0 0.0
        %862 = vmatpush2.msra.mxu0 0.0
        %863 = vmatprep.subr.mxu0 0.0
        %864 = vmatpush2.msra.mxu0 0.0
        %865 = vmatprep.subr.mxu0 0.0
        %866 = vmatpush2.msra.mxu0 0.0
        %867 = vmatprep.subr.mxu0 0.0
        %868 = vmatpush2.msra.mxu0 0.0
        %869 = vmatprep.subr.mxu0 0.0
        %870 = vmatpush2.msra.mxu0 0.0
        %871 = vmatprep.subr.mxu0 0.0
        %872 = vmatpush2.msra.mxu0 0.0
        %873 = vmatprep.subr.mxu0 0.0
        %874 = vmatpush2.msra.mxu0 0.0
        %875 = vmatprep.subr.mxu0 0.0
        %876 = vmatpush2.msra.mxu0 0.0
        %877 = vmatprep.subr.mxu0 0.0
        %878 = vmatpush2.msra.mxu0 0.0
        %879 = vmatprep.mubr.f32.mxu0 0.0
        %880 = vmatmul.mubr.f32.gmra.mxu0 %v810
        %v881 = vpop.f32.mrf.mxu0
        %v882 = vadd.f32 0.0, %v881
        %v883 = vpop.f32.mrf.mxu0
        %884 = vmatprep.mubr.f32.mxu0 0.0
        %885 = vmatmul.mubr.f32.gmra.mxu0 %v813
        %v886 = vpop.f32.mrf.mxu0
        %v887 = vadd.f32 0.0, %v886
        %v888 = vpop.f32.mrf.mxu0
        %889 = vdwg.mxu0
        %v891 = vsel %vm646, %v476, 0
        %v894 = vsel %vm646, %v477, 0
        %896 = vmatprep.subr.mxu0 0.0
        %897 = vmatpush1.msra.mxu0 0.0
        %898 = vmatprep.subr.mxu0 0.0
        %899 = vmatpush1.msra.mxu0 0.0
        %900 = vmatprep.subr.mxu0 0.0
        %901 = vmatpush1.msra.mxu0 0.0
        %902 = vmatprep.subr.mxu0 0.0
        %903 = vmatpush1.msra.mxu0 0.0
        %904 = vmatprep.subr.mxu0 0.0
        %905 = vmatpush1.msra.mxu0 0.0
        %906 = vmatprep.subr.mxu0 0.0
        %907 = vmatpush1.msra.mxu0 0.0
        %908 = vmatprep.subr.mxu0 0.0
        %909 = vmatpush1.msra.mxu0 0.0
        %910 = vmatprep.subr.mxu0 0.0
        %911 = vmatpush1.msra.mxu0 0.0
        %912 = vmatprep.subr.mxu0 0.0
        %913 = vmatpush1.msra.mxu0 0.0
        %914 = vmatprep.subr.mxu0 0.0
        %915 = vmatpush1.msra.mxu0 0.0
        %916 = vmatprep.subr.mxu0 0.0
        %917 = vmatpush1.msra.mxu0 0.0
        %918 = vmatprep.subr.mxu0 0.0
        %919 = vmatpush1.msra.mxu0 0.0
        %920 = vmatprep.subr.mxu0 0.0
        %921 = vmatpush1.msra.mxu0 %v501
        %922 = vmatprep.subr.mxu0 0.0
        %923 = vmatpush1.msra.mxu0 %v500
        %924 = vmatprep.subr.mxu0 0.0
        %925 = vmatpush1.msra.mxu0 %v499
        %926 = vmatprep.subr.mxu0 0.0
        %927 = vmatpush1.msra.mxu0 %v498
        %928 = vmatprep.subr.mxu0 0.0
        %929 = vmatpush2.msra.mxu0 0.0
        %930 = vmatprep.subr.mxu0 0.0
        %931 = vmatpush2.msra.mxu0 0.0
        %932 = vmatprep.subr.mxu0 0.0
        %933 = vmatpush2.msra.mxu0 0.0
        %934 = vmatprep.subr.mxu0 0.0
        %935 = vmatpush2.msra.mxu0 0.0
        %936 = vmatprep.subr.mxu0 0.0
        %937 = vmatpush2.msra.mxu0 0.0
        %938 = vmatprep.subr.mxu0 0.0
        %939 = vmatpush2.msra.mxu0 0.0
        %940 = vmatprep.subr.mxu0 0.0
        %941 = vmatpush2.msra.mxu0 0.0
        %942 = vmatprep.subr.mxu0 0.0
        %943 = vmatpush2.msra.mxu0 0.0
        %944 = vmatprep.subr.mxu0 0.0
        %945 = vmatpush2.msra.mxu0 0.0
        %946 = vmatprep.subr.mxu0 0.0
        %947 = vmatpush2.msra.mxu0 0.0
        %948 = vmatprep.subr.mxu0 0.0
        %949 = vmatpush2.msra.mxu0 0.0
        %950 = vmatprep.subr.mxu0 0.0
        %951 = vmatpush2.msra.mxu0 0.0
        %952 = vmatprep.subr.mxu0 0.0
        %953 = vmatpush2.msra.mxu0 0.0
        %954 = vmatprep.subr.mxu0 0.0
        %955 = vmatpush2.msra.mxu0 0.0
        %956 = vmatprep.subr.mxu0 0.0
        %957 = vmatpush2.msra.mxu0 0.0
        %958 = vmatprep.subr.mxu0 0.0
        %959 = vmatpush2.msra.mxu0 0.0
        %960 = vmatprep.mubr.f32.mxu0 0.0
        %961 = vmatmul.mubr.f32.gmra.mxu0 %v891
        %v962 = vpop.f32.mrf.mxu0
        %v963 = vadd.f32 0.0, %v962
        %v964 = vpop.f32.mrf.mxu0
        %965 = vmatprep.mubr.f32.mxu0 0.0
        %966 = vmatmul.mubr.f32.gmra.mxu0 %v894
        %v967 = vpop.f32.mrf.mxu0
        %v968 = vadd.f32 0.0, %v967
        %v969 = vpop.f32.mrf.mxu0
        %970 = vdwg.mxu0
        %v972 = vsel %vm646, %v478, 0
        %v975 = vsel %vm646, %v479, 0
        %977 = vmatprep.subr.mxu0 0.0
        %978 = vmatpush1.msra.mxu0 0.0
        %979 = vmatprep.subr.mxu0 0.0
        %980 = vmatpush1.msra.mxu0 0.0
        %981 = vmatprep.subr.mxu0 0.0
        %982 = vmatpush1.msra.mxu0 0.0
        %983 = vmatprep.subr.mxu0 0.0
        %984 = vmatpush1.msra.mxu0 0.0
        %985 = vmatprep.subr.mxu0 0.0
        %986 = vmatpush1.msra.mxu0 0.0
        %987 = vmatprep.subr.mxu0 0.0
        %988 = vmatpush1.msra.mxu0 0.0
        %989 = vmatprep.subr.mxu0 0.0
        %990 = vmatpush1.msra.mxu0 0.0
        %991 = vmatprep.subr.mxu0 0.0
        %992 = vmatpush1.msra.mxu0 0.0
        %993 = vmatprep.subr.mxu0 0.0
        %994 = vmatpush1.msra.mxu0 0.0
        %995 = vmatprep.subr.mxu0 0.0
        %996 = vmatpush1.msra.mxu0 0.0
        %997 = vmatprep.subr.mxu0 0.0
        %998 = vmatpush1.msra.mxu0 0.0
        %999 = vmatprep.subr.mxu0 0.0
        %1000 = vmatpush1.msra.mxu0 0.0
        %1001 = vmatprep.subr.mxu0 0.0
        %1002 = vmatpush1.msra.mxu0 %v505
        %1003 = vmatprep.subr.mxu0 0.0
        %1004 = vmatpush1.msra.mxu0 %v504
        %1005 = vmatprep.subr.mxu0 0.0
        %1006 = vmatpush1.msra.mxu0 %v503
        %1007 = vmatprep.subr.mxu0 0.0
        %1008 = vmatpush1.msra.mxu0 %v502
        %1009 = vmatprep.subr.mxu0 0.0
        %1010 = vmatpush2.msra.mxu0 0.0
        %1011 = vmatprep.subr.mxu0 0.0
        %1012 = vmatpush2.msra.mxu0 0.0
        %1013 = vmatprep.subr.mxu0 0.0
        %1014 = vmatpush2.msra.mxu0 0.0
        %1015 = vmatprep.subr.mxu0 0.0
        %1016 = vmatpush2.msra.mxu0 0.0
        %1017 = vmatprep.subr.mxu0 0.0
        %1018 = vmatpush2.msra.mxu0 0.0
        %1019 = vmatprep.subr.mxu0 0.0
        %1020 = vmatpush2.msra.mxu0 0.0
        %1021 = vmatprep.subr.mxu0 0.0
        %1022 = vmatpush2.msra.mxu0 0.0
        %1023 = vmatprep.subr.mxu0 0.0
        %1024 = vmatpush2.msra.mxu0 0.0
        %1025 = vmatprep.subr.mxu0 0.0
        %1026 = vmatpush2.msra.mxu0 0.0
        %1027 = vmatprep.subr.mxu0 0.0
        %1028 = vmatpush2.msra.mxu0 0.0
        %1029 = vmatprep.subr.mxu0 0.0
        %1030 = vmatpush2.msra.mxu0 0.0
        %1031 = vmatprep.subr.mxu0 0.0
        %1032 = vmatpush2.msra.mxu0 0.0
        %1033 = vmatprep.subr.mxu0 0.0
        %1034 = vmatpush2.msra.mxu0 0.0
        %1035 = vmatprep.subr.mxu0 0.0
        %1036 = vmatpush2.msra.mxu0 0.0
        %1037 = vmatprep.subr.mxu0 0.0
        %1038 = vmatpush2.msra.mxu0 0.0
        %1039 = vmatprep.subr.mxu0 0.0
        %1040 = vmatpush2.msra.mxu0 0.0
        %1041 = vmatprep.mubr.f32.mxu0 0.0
        %1042 = vmatmul.mubr.f32.gmra.mxu0 %v972
        %v1043 = vpop.f32.mrf.mxu0
        %v1044 = vadd.f32 0.0, %v1043
        %v1045 = vpop.f32.mrf.mxu0
        %1046 = vmatprep.mubr.f32.mxu0 0.0
        %1047 = vmatmul.mubr.f32.gmra.mxu0 %v975
        %v1048 = vpop.f32.mrf.mxu0
        %v1049 = vadd.f32 0.0, %v1048
        %v1050 = vpop.f32.mrf.mxu0
        %1051 = vdwg.mxu0
        %v1053 = vsel %vm646, %v480, 0
        %v1056 = vsel %vm646, %v481, 0
        %1058 = vmatprep.subr.mxu0 0.0
        %1059 = vmatpush1.msra.mxu0 0.0
        %1060 = vmatprep.subr.mxu0 0.0
        %1061 = vmatpush1.msra.mxu0 0.0
        %1062 = vmatprep.subr.mxu0 0.0
        %1063 = vmatpush1.msra.mxu0 0.0
        %1064 = vmatprep.subr.mxu0 0.0
        %1065 = vmatpush1.msra.mxu0 0.0
        %1066 = vmatprep.subr.mxu0 0.0
        %1067 = vmatpush1.msra.mxu0 0.0
        %1068 = vmatprep.subr.mxu0 0.0
        %1069 = vmatpush1.msra.mxu0 0.0
        %1070 = vmatprep.subr.mxu0 0.0
        %1071 = vmatpush1.msra.mxu0 0.0
        %1072 = vmatprep.subr.mxu0 0.0
        %1073 = vmatpush1.msra.mxu0 0.0
        %1074 = vmatprep.subr.mxu0 0.0
        %1075 = vmatpush1.msra.mxu0 0.0
        %1076 = vmatprep.subr.mxu0 0.0
        %1077 = vmatpush1.msra.mxu0 0.0
        %1078 = vmatprep.subr.mxu0 0.0
        %1079 = vmatpush1.msra.mxu0 0.0
        %1080 = vmatprep.subr.mxu0 0.0
        %1081 = vmatpush1.msra.mxu0 0.0
        %1082 = vmatprep.subr.mxu0 0.0
        %1083 = vmatpush1.msra.mxu0 %v509
        %1084 = vmatprep.subr.mxu0 0.0
        %1085 = vmatpush1.msra.mxu0 %v508
        %1086 = vmatprep.subr.mxu0 0.0
        %1087 = vmatpush1.msra.mxu0 %v507
        %1088 = vmatprep.subr.mxu0 0.0
        %1089 = vmatpush1.msra.mxu0 %v506
        %1090 = vmatprep.subr.mxu0 0.0
        %1091 = vmatpush2.msra.mxu0 0.0
        %1092 = vmatprep.subr.mxu0 0.0
        %1093 = vmatpush2.msra.mxu0 0.0
        %1094 = vmatprep.subr.mxu0 0.0
        %1095 = vmatpush2.msra.mxu0 0.0
        %1096 = vmatprep.subr.mxu0 0.0
        %1097 = vmatpush2.msra.mxu0 0.0
        %1098 = vmatprep.subr.mxu0 0.0
        %1099 = vmatpush2.msra.mxu0 0.0
        %1100 = vmatprep.subr.mxu0 0.0
        %1101 = vmatpush2.msra.mxu0 0.0
        %1102 = vmatprep.subr.mxu0 0.0
        %1103 = vmatpush2.msra.mxu0 0.0
        %1104 = vmatprep.subr.mxu0 0.0
        %1105 = vmatpush2.msra.mxu0 0.0
        %1106 = vmatprep.subr.mxu0 0.0
        %1107 = vmatpush2.msra.mxu0 0.0
        %1108 = vmatprep.subr.mxu0 0.0
        %1109 = vmatpush2.msra.mxu0 0.0
        %1110 = vmatprep.subr.mxu0 0.0
        %1111 = vmatpush2.msra.mxu0 0.0
        %1112 = vmatprep.subr.mxu0 0.0
        %1113 = vmatpush2.msra.mxu0 0.0
        %1114 = vmatprep.subr.mxu0 0.0
        %1115 = vmatpush2.msra.mxu0 0.0
        %1116 = vmatprep.subr.mxu0 0.0
        %1117 = vmatpush2.msra.mxu0 0.0
        %1118 = vmatprep.subr.mxu0 0.0
        %1119 = vmatpush2.msra.mxu0 0.0
        %1120 = vmatprep.subr.mxu0 0.0
        %1121 = vmatpush2.msra.mxu0 0.0
        %1122 = vmatprep.mubr.f32.mxu0 0.0
        %1123 = vmatmul.mubr.f32.gmra.mxu0 %v1053
        %v1124 = vpop.f32.mrf.mxu0
        %v1125 = vadd.f32 0.0, %v1124
        %v1126 = vpop.f32.mrf.mxu0
        %1127 = vmatprep.mubr.f32.mxu0 0.0
        %1128 = vmatmul.mubr.f32.gmra.mxu0 %v1056
        %v1129 = vpop.f32.mrf.mxu0
        %v1130 = vadd.f32 0.0, %v1129
        %v1131 = vpop.f32.mrf.mxu0
        %1132 = vdwg.mxu0
        %v1134 = vsel %vm646, %v482, 0
        %v1137 = vsel %vm646, %v483, 0
        %1139 = vmatprep.subr.mxu0 0.0
        %1140 = vmatpush1.msra.mxu0 0.0
        %1141 = vmatprep.subr.mxu0 0.0
        %1142 = vmatpush1.msra.mxu0 0.0
        %1143 = vmatprep.subr.mxu0 0.0
        %1144 = vmatpush1.msra.mxu0 0.0
        %1145 = vmatprep.subr.mxu0 0.0
        %1146 = vmatpush1.msra.mxu0 0.0
        %1147 = vmatprep.subr.mxu0 0.0
        %1148 = vmatpush1.msra.mxu0 0.0
        %1149 = vmatprep.subr.mxu0 0.0
        %1150 = vmatpush1.msra.mxu0 0.0
        %1151 = vmatprep.subr.mxu0 0.0
        %1152 = vmatpush1.msra.mxu0 0.0
        %1153 = vmatprep.subr.mxu0 0.0
        %1154 = vmatpush1.msra.mxu0 0.0
        %1155 = vmatprep.subr.mxu0 0.0
        %1156 = vmatpush1.msra.mxu0 0.0
        %1157 = vmatprep.subr.mxu0 0.0
        %1158 = vmatpush1.msra.mxu0 0.0
        %1159 = vmatprep.subr.mxu0 0.0
        %1160 = vmatpush1.msra.mxu0 0.0
        %1161 = vmatprep.subr.mxu0 0.0
        %1162 = vmatpush1.msra.mxu0 0.0
        %1163 = vmatprep.subr.mxu0 0.0
        %1164 = vmatpush1.msra.mxu0 %v513
        %1165 = vmatprep.subr.mxu0 0.0
        %1166 = vmatpush1.msra.mxu0 %v512
        %1167 = vmatprep.subr.mxu0 0.0
        %1168 = vmatpush1.msra.mxu0 %v511
        %1169 = vmatprep.subr.mxu0 0.0
        %1170 = vmatpush1.msra.mxu0 %v510
        %1171 = vmatprep.subr.mxu0 0.0
        %1172 = vmatpush2.msra.mxu0 0.0
        %1173 = vmatprep.subr.mxu0 0.0
        %1174 = vmatpush2.msra.mxu0 0.0
        %1175 = vmatprep.subr.mxu0 0.0
        %1176 = vmatpush2.msra.mxu0 0.0
        %1177 = vmatprep.subr.mxu0 0.0
        %1178 = vmatpush2.msra.mxu0 0.0
        %1179 = vmatprep.subr.mxu0 0.0
        %1180 = vmatpush2.msra.mxu0 0.0
        %1181 = vmatprep.subr.mxu0 0.0
        %1182 = vmatpush2.msra.mxu0 0.0
        %1183 = vmatprep.subr.mxu0 0.0
        %1184 = vmatpush2.msra.mxu0 0.0
        %1185 = vmatprep.subr.mxu0 0.0
        %1186 = vmatpush2.msra.mxu0 0.0
        %1187 = vmatprep.subr.mxu0 0.0
        %1188 = vmatpush2.msra.mxu0 0.0
        %1189 = vmatprep.subr.mxu0 0.0
        %1190 = vmatpush2.msra.mxu0 0.0
        %1191 = vmatprep.subr.mxu0 0.0
        %1192 = vmatpush2.msra.mxu0 0.0
        %1193 = vmatprep.subr.mxu0 0.0
        %1194 = vmatpush2.msra.mxu0 0.0
        %1195 = vmatprep.subr.mxu0 0.0
        %1196 = vmatpush2.msra.mxu0 0.0
        %1197 = vmatprep.subr.mxu0 0.0
        %1198 = vmatpush2.msra.mxu0 0.0
        %1199 = vmatprep.subr.mxu0 0.0
        %1200 = vmatpush2.msra.mxu0 0.0
        %1201 = vmatprep.subr.mxu0 0.0
        %1202 = vmatpush2.msra.mxu0 0.0
        %1203 = vmatprep.mubr.f32.mxu0 0.0
        %1204 = vmatmul.mubr.f32.gmra.mxu0 %v1134
        %v1205 = vpop.f32.mrf.mxu0
        %v1206 = vadd.f32 0.0, %v1205
        %v1207 = vpop.f32.mrf.mxu0
        %1208 = vmatprep.mubr.f32.mxu0 0.0
        %1209 = vmatmul.mubr.f32.gmra.mxu0 %v1137
        %v1210 = vpop.f32.mrf.mxu0
        %v1211 = vadd.f32 0.0, %v1210
        %v1212 = vpop.f32.mrf.mxu0
        %1213 = vdwg.mxu0
        %v1215 = vsel %vm646, %v484, 0
        %v1218 = vsel %vm646, %v485, 0
        %1220 = vmatprep.subr.mxu0 0.0
        %1221 = vmatpush1.msra.mxu0 0.0
        %1222 = vmatprep.subr.mxu0 0.0
        %1223 = vmatpush1.msra.mxu0 0.0
        %1224 = vmatprep.subr.mxu0 0.0
        %1225 = vmatpush1.msra.mxu0 0.0
        %1226 = vmatprep.subr.mxu0 0.0
        %1227 = vmatpush1.msra.mxu0 0.0
        %1228 = vmatprep.subr.mxu0 0.0
        %1229 = vmatpush1.msra.mxu0 0.0
        %1230 = vmatprep.subr.mxu0 0.0
        %1231 = vmatpush1.msra.mxu0 0.0
        %1232 = vmatprep.subr.mxu0 0.0
        %1233 = vmatpush1.msra.mxu0 0.0
        %1234 = vmatprep.subr.mxu0 0.0
        %1235 = vmatpush1.msra.mxu0 0.0
        %1236 = vmatprep.subr.mxu0 0.0
        %1237 = vmatpush1.msra.mxu0 0.0
        %1238 = vmatprep.subr.mxu0 0.0
        %1239 = vmatpush1.msra.mxu0 0.0
        %1240 = vmatprep.subr.mxu0 0.0
        %1241 = vmatpush1.msra.mxu0 0.0
        %1242 = vmatprep.subr.mxu0 0.0
        %1243 = vmatpush1.msra.mxu0 0.0
        %1244 = vmatprep.subr.mxu0 0.0
        %1245 = vmatpush1.msra.mxu0 %v517
        %1246 = vmatprep.subr.mxu0 0.0
        %1247 = vmatpush1.msra.mxu0 %v516
        %1248 = vmatprep.subr.mxu0 0.0
        %1249 = vmatpush1.msra.mxu0 %v515
        %1250 = vmatprep.subr.mxu0 0.0
        %1251 = vmatpush1.msra.mxu0 %v514
        %1252 = vmatprep.subr.mxu0 0.0
        %1253 = vmatpush2.msra.mxu0 0.0
        %1254 = vmatprep.subr.mxu0 0.0
        %1255 = vmatpush2.msra.mxu0 0.0
        %1256 = vmatprep.subr.mxu0 0.0
        %1257 = vmatpush2.msra.mxu0 0.0
        %1258 = vmatprep.subr.mxu0 0.0
        %1259 = vmatpush2.msra.mxu0 0.0
        %1260 = vmatprep.subr.mxu0 0.0
        %1261 = vmatpush2.msra.mxu0 0.0
        %1262 = vmatprep.subr.mxu0 0.0
        %1263 = vmatpush2.msra.mxu0 0.0
        %1264 = vmatprep.subr.mxu0 0.0
        %1265 = vmatpush2.msra.mxu0 0.0
        %1266 = vmatprep.subr.mxu0 0.0
        %1267 = vmatpush2.msra.mxu0 0.0
        %1268 = vmatprep.subr.mxu0 0.0
        %1269 = vmatpush2.msra.mxu0 0.0
        %1270 = vmatprep.subr.mxu0 0.0
        %1271 = vmatpush2.msra.mxu0 0.0
        %1272 = vmatprep.subr.mxu0 0.0
        %1273 = vmatpush2.msra.mxu0 0.0
        %1274 = vmatprep.subr.mxu0 0.0
        %1275 = vmatpush2.msra.mxu0 0.0
        %1276 = vmatprep.subr.mxu0 0.0
        %1277 = vmatpush2.msra.mxu0 0.0
        %1278 = vmatprep.subr.mxu0 0.0
        %1279 = vmatpush2.msra.mxu0 0.0
        %1280 = vmatprep.subr.mxu0 0.0
        %1281 = vmatpush2.msra.mxu0 0.0
        %1282 = vmatprep.subr.mxu0 0.0
        %1283 = vmatpush2.msra.mxu0 0.0
        %1284 = vmatprep.mubr.f32.mxu0 0.0
        %1285 = vmatmul.mubr.f32.gmra.mxu0 %v1215
        %v1286 = vpop.f32.mrf.mxu0
        %v1287 = vadd.f32 0.0, %v1286
        %v1288 = vpop.f32.mrf.mxu0
        %1289 = vmatprep.mubr.f32.mxu0 0.0
        %1290 = vmatmul.mubr.f32.gmra.mxu0 %v1218
        %v1291 = vpop.f32.mrf.mxu0
        %v1292 = vadd.f32 0.0, %v1291
        %v1293 = vpop.f32.mrf.mxu0
        %1294 = vdwg.mxu0
        %v1295 = vld [vmem:[%s0] sm:$0xff]
        %v1296 = vcombine.low %v720, %v882
        %v1297 = vcombine.high %v720, %v882
        %v1299 = vunpack.c.l.s4 1983009808
        %v1300 = vunpack.c.0.s8 %v1299
        %v1301 = vlaneseq
        %v1302 = vshrl.u32 %v1301, 7
        %v1303 = vsub.s32 %v1300, %v1302
        %v1304 = vrot.slane %v1296, %v1303
        %v1306 = vunpack.c.l.s4 1983009808
        %v1307 = vunpack.c.0.s8 %v1306
        %v1308 = vlaneseq
        %v1309 = vshrl.u32 %v1308, 7
        %v1310 = vsub.s32 %v1307, %v1309
        %v1311 = vrot.slane %v1297, %v1310
        %v1312 = vcombine.low %v801, %v963
        %v1313 = vcombine.high %v801, %v963
        %v1315 = vunpack.c.l.s4 1983009808
        %v1316 = vunpack.c.0.s8 %v1315
        %v1317 = vlaneseq
        %v1318 = vshrl.u32 %v1317, 7
        %v1319 = vsub.s32 %v1316, %v1318
        %v1320 = vrot.slane %v1312, %v1319
        %v1322 = vunpack.c.l.s4 1983009808
        %v1323 = vunpack.c.0.s8 %v1322
        %v1324 = vlaneseq
        %v1325 = vshrl.u32 %v1324, 7
        %v1326 = vsub.s32 %v1323, %v1325
        %v1327 = vrot.slane %v1313, %v1326
        %v1328 = vcombine.low %v1044, %v1206
        %v1329 = vcombine.high %v1044, %v1206
        %v1331 = vunpack.c.l.s4 1983009808
        %v1332 = vunpack.c.0.s8 %v1331
        %v1333 = vlaneseq
        %v1334 = vshrl.u32 %v1333, 7
        %v1335 = vsub.s32 %v1332, %v1334
        %v1336 = vrot.slane %v1328, %v1335
        %v1338 = vunpack.c.l.s4 1983009808
        %v1339 = vunpack.c.0.s8 %v1338
        %v1340 = vlaneseq
        %v1341 = vshrl.u32 %v1340, 7
        %v1342 = vsub.s32 %v1339, %v1341
        %v1343 = vrot.slane %v1329, %v1342
        %v1344 = vcombine.low %v1125, %v1287
        %v1345 = vcombine.high %v1125, %v1287
        %v1347 = vunpack.c.l.s4 1983009808
        %v1348 = vunpack.c.0.s8 %v1347
        %v1349 = vlaneseq
        %v1350 = vshrl.u32 %v1349, 7
        %v1351 = vsub.s32 %v1348, %v1350
        %v1352 = vrot.slane %v1344, %v1351
        %v1354 = vunpack.c.l.s4 1983009808
        %v1355 = vunpack.c.0.s8 %v1354
        %v1356 = vlaneseq
        %v1357 = vshrl.u32 %v1356, 7
        %v1358 = vsub.s32 %v1355, %v1357
        %v1359 = vrot.slane %v1345, %v1358
        %v1360 = vcombine.low %v1304, %v1320
        %v1361 = vcombine.high %v1304, %v1320
        %v1363 = vunpack.c.l.s4 1934713408
        %v1364 = vunpack.c.0.s8 %v1363
        %v1365 = vlaneseq
        %v1366 = vshrl.u32 %v1365, 7
        %v1367 = vsub.s32 %v1364, %v1366
        %v1368 = vrot.slane %v1360, %v1367
        %v1370 = vunpack.c.l.s4 1934713408
        %v1371 = vunpack.c.0.s8 %v1370
        %v1372 = vlaneseq
        %v1373 = vshrl.u32 %v1372, 7
        %v1374 = vsub.s32 %v1371, %v1373
        %v1375 = vrot.slane %v1361, %v1374
        %v1376 = vcombine.low %v1311, %v1327
        %v1377 = vcombine.high %v1311, %v1327
        %v1379 = vunpack.c.l.s4 1934713408
        %v1380 = vunpack.c.0.s8 %v1379
        %v1381 = vlaneseq
        %v1382 = vshrl.u32 %v1381, 7
        %v1383 = vsub.s32 %v1380, %v1382
        %v1384 = vrot.slane %v1376, %v1383
        %v1386 = vunpack.c.l.s4 1934713408
        %v1387 = vunpack.c.0.s8 %v1386
        %v1388 = vlaneseq
        %v1389 = vshrl.u32 %v1388, 7
        %v1390 = vsub.s32 %v1387, %v1389
        %v1391 = vrot.slane %v1377, %v1390
        %v1392 = vcombine.low %v1336, %v1352
        %v1393 = vcombine.high %v1336, %v1352
        %v1395 = vunpack.c.l.s4 1934713408
        %v1396 = vunpack.c.0.s8 %v1395
        %v1397 = vlaneseq
        %v1398 = vshrl.u32 %v1397, 7
        %v1399 = vsub.s32 %v1396, %v1398
        %v1400 = vrot.slane %v1392, %v1399
        %v1402 = vunpack.c.l.s4 1934713408
        %v1403 = vunpack.c.0.s8 %v1402
        %v1404 = vlaneseq
        %v1405 = vshrl.u32 %v1404, 7
        %v1406 = vsub.s32 %v1403, %v1405
        %v1407 = vrot.slane %v1393, %v1406
        %v1408 = vcombine.low %v1343, %v1359
        %v1409 = vcombine.high %v1343, %v1359
        %v1411 = vunpack.c.l.s4 1934713408
        %v1412 = vunpack.c.0.s8 %v1411
        %v1413 = vlaneseq
        %v1414 = vshrl.u32 %v1413, 7
        %v1415 = vsub.s32 %v1412, %v1414
        %v1416 = vrot.slane %v1408, %v1415
        %v1418 = vunpack.c.l.s4 1934713408
        %v1419 = vunpack.c.0.s8 %v1418
        %v1420 = vlaneseq
        %v1421 = vshrl.u32 %v1420, 7
        %v1422 = vsub.s32 %v1419, %v1421
        %v1423 = vrot.slane %v1409, %v1422
        %v1424 = vcombine.low %v1368, %v1400
        %v1425 = vcombine.high %v1368, %v1400
        %v1426 = vcombine.low %v1375, %v1407
        %v1427 = vcombine.high %v1375, %v1407
        %v1428 = vcombine.low %v1384, %v1416
        %v1429 = vcombine.high %v1384, %v1416
        %v1430 = vcombine.low %v1391, %v1423
        %v1431 = vcombine.high %v1391, %v1423
        %v1432 = vcombine.low %v725, %v887
        %v1433 = vcombine.high %v725, %v887
        %v1435 = vunpack.c.l.s4 1983009808
        %v1436 = vunpack.c.0.s8 %v1435
        %v1437 = vlaneseq
        %v1438 = vshrl.u32 %v1437, 7
        %v1439 = vsub.s32 %v1436, %v1438
        %v1440 = vrot.slane %v1432, %v1439
        %v1442 = vunpack.c.l.s4 1983009808
        %v1443 = vunpack.c.0.s8 %v1442
        %v1444 = vlaneseq
        %v1445 = vshrl.u32 %v1444, 7
        %v1446 = vsub.s32 %v1443, %v1445
        %v1447 = vrot.slane %v1433, %v1446
        %v1448 = vcombine.low %v806, %v968
        %v1449 = vcombine.high %v806, %v968
        %v1451 = vunpack.c.l.s4 1983009808
        %v1452 = vunpack.c.0.s8 %v1451
        %v1453 = vlaneseq
        %v1454 = vshrl.u32 %v1453, 7
        %v1455 = vsub.s32 %v1452, %v1454
        %v1456 = vrot.slane %v1448, %v1455
        %v1458 = vunpack.c.l.s4 1983009808
        %v1459 = vunpack.c.0.s8 %v1458
        %v1460 = vlaneseq
        %v1461 = vshrl.u32 %v1460, 7
        %v1462 = vsub.s32 %v1459, %v1461
        %v1463 = vrot.slane %v1449, %v1462
        %v1464 = vcombine.low %v1049, %v1211
        %v1465 = vcombine.high %v1049, %v1211
        %v1467 = vunpack.c.l.s4 1983009808
        %v1468 = vunpack.c.0.s8 %v1467
        %v1469 = vlaneseq
        %v1470 = vshrl.u32 %v1469, 7
        %v1471 = vsub.s32 %v1468, %v1470
        %v1472 = vrot.slane %v1464, %v1471
        %v1474 = vunpack.c.l.s4 1983009808
        %v1475 = vunpack.c.0.s8 %v1474
        %v1476 = vlaneseq
        %v1477 = vshrl.u32 %v1476, 7
        %v1478 = vsub.s32 %v1475, %v1477
        %v1479 = vrot.slane %v1465, %v1478
        %v1480 = vcombine.low %v1130, %v1292
        %v1481 = vcombine.high %v1130, %v1292
        %v1483 = vunpack.c.l.s4 1983009808
        %v1484 = vunpack.c.0.s8 %v1483
        %v1485 = vlaneseq
        %v1486 = vshrl.u32 %v1485, 7
        %v1487 = vsub.s32 %v1484, %v1486
        %v1488 = vrot.slane %v1480, %v1487
        %v1490 = vunpack.c.l.s4 1983009808
        %v1491 = vunpack.c.0.s8 %v1490
        %v1492 = vlaneseq
        %v1493 = vshrl.u32 %v1492, 7
        %v1494 = vsub.s32 %v1491, %v1493
        %v1495 = vrot.slane %v1481, %v1494
        %v1496 = vcombine.low %v1440, %v1456
        %v1497 = vcombine.high %v1440, %v1456
        %v1499 = vunpack.c.l.s4 1934713408
        %v1500 = vunpack.c.0.s8 %v1499
        %v1501 = vlaneseq
        %v1502 = vshrl.u32 %v1501, 7
        %v1503 = vsub.s32 %v1500, %v1502
        %v1504 = vrot.slane %v1496, %v1503
        %v1506 = vunpack.c.l.s4 1934713408
        %v1507 = vunpack.c.0.s8 %v1506
        %v1508 = vlaneseq
        %v1509 = vshrl.u32 %v1508, 7
        %v1510 = vsub.s32 %v1507, %v1509
        %v1511 = vrot.slane %v1497, %v1510
        %v1512 = vcombine.low %v1447, %v1463
        %v1513 = vcombine.high %v1447, %v1463
        %v1515 = vunpack.c.l.s4 1934713408
        %v1516 = vunpack.c.0.s8 %v1515
        %v1517 = vlaneseq
        %v1518 = vshrl.u32 %v1517, 7
        %v1519 = vsub.s32 %v1516, %v1518
        %v1520 = vrot.slane %v1512, %v1519
        %v1522 = vunpack.c.l.s4 1934713408
        %v1523 = vunpack.c.0.s8 %v1522
        %v1524 = vlaneseq
        %v1525 = vshrl.u32 %v1524, 7
        %v1526 = vsub.s32 %v1523, %v1525
        %v1527 = vrot.slane %v1513, %v1526
        %v1528 = vcombine.low %v1472, %v1488
        %v1529 = vcombine.high %v1472, %v1488
        %v1531 = vunpack.c.l.s4 1934713408
        %v1532 = vunpack.c.0.s8 %v1531
        %v1533 = vlaneseq
        %v1534 = vshrl.u32 %v1533, 7
        %v1535 = vsub.s32 %v1532, %v1534
        %v1536 = vrot.slane %v1528, %v1535
        %v1538 = vunpack.c.l.s4 1934713408
        %v1539 = vunpack.c.0.s8 %v1538
        %v1540 = vlaneseq
        %v1541 = vshrl.u32 %v1540, 7
        %v1542 = vsub.s32 %v1539, %v1541
        %v1543 = vrot.slane %v1529, %v1542
        %v1544 = vcombine.low %v1479, %v1495
        %v1545 = vcombine.high %v1479, %v1495
        %v1547 = vunpack.c.l.s4 1934713408
        %v1548 = vunpack.c.0.s8 %v1547
        %v1549 = vlaneseq
        %v1550 = vshrl.u32 %v1549, 7
        %v1551 = vsub.s32 %v1548, %v1550
        %v1552 = vrot.slane %v1544, %v1551
        %v1554 = vunpack.c.l.s4 1934713408
        %v1555 = vunpack.c.0.s8 %v1554
        %v1556 = vlaneseq
        %v1557 = vshrl.u32 %v1556, 7
        %v1558 = vsub.s32 %v1555, %v1557
        %v1559 = vrot.slane %v1545, %v1558
        %v1560 = vcombine.low %v1504, %v1536
        %v1561 = vcombine.high %v1504, %v1536
        %v1562 = vcombine.low %v1511, %v1543
        %v1563 = vcombine.high %v1511, %v1543
        %v1564 = vcombine.low %v1520, %v1552
        %v1565 = vcombine.high %v1520, %v1552
        %v1566 = vcombine.low %v1527, %v1559
        %v1567 = vcombine.high %v1527, %v1559
        %vm1568 = vcmask 64512
        %v1570 = vsel %vm1568, %v1295, 0
        %1572 = vmatprep.subr.mxu0 0.0
        %1573 = vmatpush1.msra.mxu0 0.0
        %1574 = vmatprep.subr.mxu0 0.0
        %1575 = vmatpush1.msra.mxu0 0.0
        %1576 = vmatprep.subr.mxu0 0.0
        %1577 = vmatpush1.msra.mxu0 0.0
        %1578 = vmatprep.subr.mxu0 0.0
        %1579 = vmatpush1.msra.mxu0 0.0
        %1580 = vmatprep.subr.mxu0 0.0
        %1581 = vmatpush1.msra.mxu0 0.0
        %1582 = vmatprep.subr.mxu0 0.0
        %1583 = vmatpush1.msra.mxu0 0.0
        %1584 = vmatprep.subr.mxu0 0.0
        %1585 = vmatpush1.msra.mxu0 0.0
        %1586 = vmatprep.subr.mxu0 0.0
        %1587 = vmatpush1.msra.mxu0 0.0
        %1588 = vmatprep.subr.mxu0 0.0
        %1589 = vmatpush1.msra.mxu0 0.0
        %1590 = vmatprep.subr.mxu0 0.0
        %1591 = vmatpush1.msra.mxu0 0.0
        %1592 = vmatprep.subr.mxu0 0.0
        %1593 = vmatpush1.msra.mxu0 0.0
        %1594 = vmatprep.subr.mxu0 0.0
        %1595 = vmatpush1.msra.mxu0 0.0
        %1596 = vmatprep.subr.mxu0 0.0
        %1597 = vmatpush1.msra.mxu0 0.0
        %1598 = vmatprep.subr.mxu0 0.0
        %1599 = vmatpush1.msra.mxu0 0.0
        %1600 = vmatprep.subr.mxu0 0.0
        %1601 = vmatpush1.msra.mxu0 0.0
        %1602 = vmatprep.subr.mxu0 %v1425
        %1603 = vmatpush1.msra.mxu0 %v1424
        %1604 = vmatprep.subr.mxu0 0.0
        %1605 = vmatpush2.msra.mxu0 0.0
        %1606 = vmatprep.subr.mxu0 0.0
        %1607 = vmatpush2.msra.mxu0 0.0
        %1608 = vmatprep.subr.mxu0 0.0
        %1609 = vmatpush2.msra.mxu0 0.0
        %1610 = vmatprep.subr.mxu0 0.0
        %1611 = vmatpush2.msra.mxu0 0.0
        %1612 = vmatprep.subr.mxu0 0.0
        %1613 = vmatpush2.msra.mxu0 0.0
        %1614 = vmatprep.subr.mxu0 0.0
        %1615 = vmatpush2.msra.mxu0 0.0
        %1616 = vmatprep.subr.mxu0 0.0
        %1617 = vmatpush2.msra.mxu0 0.0
        %1618 = vmatprep.subr.mxu0 0.0
        %1619 = vmatpush2.msra.mxu0 0.0
        %1620 = vmatprep.subr.mxu0 0.0
        %1621 = vmatpush2.msra.mxu0 0.0
        %1622 = vmatprep.subr.mxu0 0.0
        %1623 = vmatpush2.msra.mxu0 0.0
        %1624 = vmatprep.subr.mxu0 0.0
        %1625 = vmatpush2.msra.mxu0 0.0
        %1626 = vmatprep.subr.mxu0 0.0
        %1627 = vmatpush2.msra.mxu0 0.0
        %1628 = vmatprep.subr.mxu0 0.0
        %1629 = vmatpush2.msra.mxu0 0.0
        %1630 = vmatprep.subr.mxu0 0.0
        %1631 = vmatpush2.msra.mxu0 0.0
        %1632 = vmatprep.subr.mxu0 0.0
        %1633 = vmatpush2.msra.mxu0 0.0
        %1634 = vmatprep.subr.mxu0 0.0
        %1635 = vmatpush2.msra.mxu0 0.0
        %1636 = vmatprep.mubr.f32.mxu0 0.0
        %1637 = vmatmul.mubr.f32.gmra.mxu0 %v1570
        %v1638 = vpop.f32.mrf.mxu0
        %v1639 = vadd.f32 0.0, %v1638
        %v1640 = vpop.f32.mrf.mxu0
        %v1641 = vadd.f32 0.0, %v1640
        %1642 = vdwg.mxu0
        %1643 = vmatprep.subr.mxu0 0.0
        %1644 = vmatpush1.msra.mxu0 0.0
        %1645 = vmatprep.subr.mxu0 0.0
        %1646 = vmatpush1.msra.mxu0 0.0
        %1647 = vmatprep.subr.mxu0 0.0
        %1648 = vmatpush1.msra.mxu0 0.0
        %1649 = vmatprep.subr.mxu0 0.0
        %1650 = vmatpush1.msra.mxu0 0.0
        %1651 = vmatprep.subr.mxu0 0.0
        %1652 = vmatpush1.msra.mxu0 0.0
        %1653 = vmatprep.subr.mxu0 0.0
        %1654 = vmatpush1.msra.mxu0 0.0
        %1655 = vmatprep.subr.mxu0 0.0
        %1656 = vmatpush1.msra.mxu0 0.0
        %1657 = vmatprep.subr.mxu0 0.0
        %1658 = vmatpush1.msra.mxu0 0.0
        %1659 = vmatprep.subr.mxu0 0.0
        %1660 = vmatpush1.msra.mxu0 0.0
        %1661 = vmatprep.subr.mxu0 0.0
        %1662 = vmatpush1.msra.mxu0 0.0
        %1663 = vmatprep.subr.mxu0 0.0
        %1664 = vmatpush1.msra.mxu0 0.0
        %1665 = vmatprep.subr.mxu0 0.0
        %1666 = vmatpush1.msra.mxu0 0.0
        %1667 = vmatprep.subr.mxu0 0.0
        %1668 = vmatpush1.msra.mxu0 0.0
        %1669 = vmatprep.subr.mxu0 0.0
        %1670 = vmatpush1.msra.mxu0 0.0
        %1671 = vmatprep.subr.mxu0 0.0
        %1672 = vmatpush1.msra.mxu0 0.0
        %1673 = vmatprep.subr.mxu0 %v1427
        %1674 = vmatpush1.msra.mxu0 %v1426
        %1675 = vmatprep.subr.mxu0 0.0
        %1676 = vmatpush2.msra.mxu0 0.0
        %1677 = vmatprep.subr.mxu0 0.0
        %1678 = vmatpush2.msra.mxu0 0.0
        %1679 = vmatprep.subr.mxu0 0.0
        %1680 = vmatpush2.msra.mxu0 0.0
        %1681 = vmatprep.subr.mxu0 0.0
        %1682 = vmatpush2.msra.mxu0 0.0
        %1683 = vmatprep.subr.mxu0 0.0
        %1684 = vmatpush2.msra.mxu0 0.0
        %1685 = vmatprep.subr.mxu0 0.0
        %1686 = vmatpush2.msra.mxu0 0.0
        %1687 = vmatprep.subr.mxu0 0.0
        %1688 = vmatpush2.msra.mxu0 0.0
        %1689 = vmatprep.subr.mxu0 0.0
        %1690 = vmatpush2.msra.mxu0 0.0
        %1691 = vmatprep.subr.mxu0 0.0
        %1692 = vmatpush2.msra.mxu0 0.0
        %1693 = vmatprep.subr.mxu0 0.0
        %1694 = vmatpush2.msra.mxu0 0.0
        %1695 = vmatprep.subr.mxu0 0.0
        %1696 = vmatpush2.msra.mxu0 0.0
        %1697 = vmatprep.subr.mxu0 0.0
        %1698 = vmatpush2.msra.mxu0 0.0
        %1699 = vmatprep.subr.mxu0 0.0
        %1700 = vmatpush2.msra.mxu0 0.0
        %1701 = vmatprep.subr.mxu0 0.0
        %1702 = vmatpush2.msra.mxu0 0.0
        %1703 = vmatprep.subr.mxu0 0.0
        %1704 = vmatpush2.msra.mxu0 0.0
        %1705 = vmatprep.subr.mxu0 0.0
        %1706 = vmatpush2.msra.mxu0 0.0
        %1707 = vmatprep.mubr.f32.mxu0 0.0
        %1708 = vmatmul.mubr.f32.gmra.mxu0 %v1570
        %v1709 = vpop.f32.mrf.mxu0
        %v1710 = vadd.f32 0.0, %v1709
        %v1711 = vpop.f32.mrf.mxu0
        %v1712 = vadd.f32 0.0, %v1711
        %1713 = vdwg.mxu0
        %1714 = vmatprep.subr.mxu0 0.0
        %1715 = vmatpush1.msra.mxu0 0.0
        %1716 = vmatprep.subr.mxu0 0.0
        %1717 = vmatpush1.msra.mxu0 0.0
        %1718 = vmatprep.subr.mxu0 0.0
        %1719 = vmatpush1.msra.mxu0 0.0
        %1720 = vmatprep.subr.mxu0 0.0
        %1721 = vmatpush1.msra.mxu0 0.0
        %1722 = vmatprep.subr.mxu0 0.0
        %1723 = vmatpush1.msra.mxu0 0.0
        %1724 = vmatprep.subr.mxu0 0.0
        %1725 = vmatpush1.msra.mxu0 0.0
        %1726 = vmatprep.subr.mxu0 0.0
        %1727 = vmatpush1.msra.mxu0 0.0
        %1728 = vmatprep.subr.mxu0 0.0
        %1729 = vmatpush1.msra.mxu0 0.0
        %1730 = vmatprep.subr.mxu0 0.0
        %1731 = vmatpush1.msra.mxu0 0.0
        %1732 = vmatprep.subr.mxu0 0.0
        %1733 = vmatpush1.msra.mxu0 0.0
        %1734 = vmatprep.subr.mxu0 0.0
        %1735 = vmatpush1.msra.mxu0 0.0
        %1736 = vmatprep.subr.mxu0 0.0
        %1737 = vmatpush1.msra.mxu0 0.0
        %1738 = vmatprep.subr.mxu0 0.0
        %1739 = vmatpush1.msra.mxu0 0.0
        %1740 = vmatprep.subr.mxu0 0.0
        %1741 = vmatpush1.msra.mxu0 0.0
        %1742 = vmatprep.subr.mxu0 0.0
        %1743 = vmatpush1.msra.mxu0 0.0
        %1744 = vmatprep.subr.mxu0 %v1429
        %1745 = vmatpush1.msra.mxu0 %v1428
        %1746 = vmatprep.subr.mxu0 0.0
        %1747 = vmatpush2.msra.mxu0 0.0
        %1748 = vmatprep.subr.mxu0 0.0
        %1749 = vmatpush2.msra.mxu0 0.0
        %1750 = vmatprep.subr.mxu0 0.0
        %1751 = vmatpush2.msra.mxu0 0.0
        %1752 = vmatprep.subr.mxu0 0.0
        %1753 = vmatpush2.msra.mxu0 0.0
        %1754 = vmatprep.subr.mxu0 0.0
        %1755 = vmatpush2.msra.mxu0 0.0
        %1756 = vmatprep.subr.mxu0 0.0
        %1757 = vmatpush2.msra.mxu0 0.0
        %1758 = vmatprep.subr.mxu0 0.0
        %1759 = vmatpush2.msra.mxu0 0.0
        %1760 = vmatprep.subr.mxu0 0.0
        %1761 = vmatpush2.msra.mxu0 0.0
        %1762 = vmatprep.subr.mxu0 0.0
        %1763 = vmatpush2.msra.mxu0 0.0
        %1764 = vmatprep.subr.mxu0 0.0
        %1765 = vmatpush2.msra.mxu0 0.0
        %1766 = vmatprep.subr.mxu0 0.0
        %1767 = vmatpush2.msra.mxu0 0.0
        %1768 = vmatprep.subr.mxu0 0.0
        %1769 = vmatpush2.msra.mxu0 0.0
        %1770 = vmatprep.subr.mxu0 0.0
        %1771 = vmatpush2.msra.mxu0 0.0
        %1772 = vmatprep.subr.mxu0 0.0
        %1773 = vmatpush2.msra.mxu0 0.0
        %1774 = vmatprep.subr.mxu0 0.0
        %1775 = vmatpush2.msra.mxu0 0.0
        %1776 = vmatprep.subr.mxu0 0.0
        %1777 = vmatpush2.msra.mxu0 0.0
        %1778 = vmatprep.mubr.f32.mxu0 0.0
        %1779 = vmatmul.mubr.f32.gmra.mxu0 %v1570
        %v1780 = vpop.f32.mrf.mxu0
        %v1781 = vadd.f32 0.0, %v1780
        %v1782 = vpop.f32.mrf.mxu0
        %v1783 = vadd.f32 0.0, %v1782
        %1784 = vdwg.mxu0
        %1785 = vmatprep.subr.mxu0 0.0
        %1786 = vmatpush1.msra.mxu0 0.0
        %1787 = vmatprep.subr.mxu0 0.0
        %1788 = vmatpush1.msra.mxu0 0.0
        %1789 = vmatprep.subr.mxu0 0.0
        %1790 = vmatpush1.msra.mxu0 0.0
        %1791 = vmatprep.subr.mxu0 0.0
        %1792 = vmatpush1.msra.mxu0 0.0
        %1793 = vmatprep.subr.mxu0 0.0
        %1794 = vmatpush1.msra.mxu0 0.0
        %1795 = vmatprep.subr.mxu0 0.0
        %1796 = vmatpush1.msra.mxu0 0.0
        %1797 = vmatprep.subr.mxu0 0.0
        %1798 = vmatpush1.msra.mxu0 0.0
        %1799 = vmatprep.subr.mxu0 0.0
        %1800 = vmatpush1.msra.mxu0 0.0
        %1801 = vmatprep.subr.mxu0 0.0
        %1802 = vmatpush1.msra.mxu0 0.0
        %1803 = vmatprep.subr.mxu0 0.0
        %1804 = vmatpush1.msra.mxu0 0.0
        %1805 = vmatprep.subr.mxu0 0.0
        %1806 = vmatpush1.msra.mxu0 0.0
        %1807 = vmatprep.subr.mxu0 0.0
        %1808 = vmatpush1.msra.mxu0 0.0
        %1809 = vmatprep.subr.mxu0 0.0
        %1810 = vmatpush1.msra.mxu0 0.0
        %1811 = vmatprep.subr.mxu0 0.0
        %1812 = vmatpush1.msra.mxu0 0.0
        %1813 = vmatprep.subr.mxu0 0.0
        %1814 = vmatpush1.msra.mxu0 0.0
        %1815 = vmatprep.subr.mxu0 %v1431
        %1816 = vmatpush1.msra.mxu0 %v1430
        %1817 = vmatprep.subr.mxu0 0.0
        %1818 = vmatpush2.msra.mxu0 0.0
        %1819 = vmatprep.subr.mxu0 0.0
        %1820 = vmatpush2.msra.mxu0 0.0
        %1821 = vmatprep.subr.mxu0 0.0
        %1822 = vmatpush2.msra.mxu0 0.0
        %1823 = vmatprep.subr.mxu0 0.0
        %1824 = vmatpush2.msra.mxu0 0.0
        %1825 = vmatprep.subr.mxu0 0.0
        %1826 = vmatpush2.msra.mxu0 0.0
        %1827 = vmatprep.subr.mxu0 0.0
        %1828 = vmatpush2.msra.mxu0 0.0
        %1829 = vmatprep.subr.mxu0 0.0
        %1830 = vmatpush2.msra.mxu0 0.0
        %1831 = vmatprep.subr.mxu0 0.0
        %1832 = vmatpush2.msra.mxu0 0.0
        %1833 = vmatprep.subr.mxu0 0.0
        %1834 = vmatpush2.msra.mxu0 0.0
        %1835 = vmatprep.subr.mxu0 0.0
        %1836 = vmatpush2.msra.mxu0 0.0
        %1837 = vmatprep.subr.mxu0 0.0
        %1838 = vmatpush2.msra.mxu0 0.0
        %1839 = vmatprep.subr.mxu0 0.0
        %1840 = vmatpush2.msra.mxu0 0.0
        %1841 = vmatprep.subr.mxu0 0.0
        %1842 = vmatpush2.msra.mxu0 0.0
        %1843 = vmatprep.subr.mxu0 0.0
        %1844 = vmatpush2.msra.mxu0 0.0
        %1845 = vmatprep.subr.mxu0 0.0
        %1846 = vmatpush2.msra.mxu0 0.0
        %1847 = vmatprep.subr.mxu0 0.0
        %1848 = vmatpush2.msra.mxu0 0.0
        %1849 = vmatprep.mubr.f32.mxu0 0.0
        %1850 = vmatmul.mubr.f32.gmra.mxu0 %v1570
        %v1851 = vpop.f32.mrf.mxu0
        %v1852 = vadd.f32 0.0, %v1851
        %v1853 = vpop.f32.mrf.mxu0
        %v1854 = vadd.f32 0.0, %v1853
        %1855 = vdwg.mxu0
        %1856 = vmatprep.subr.mxu0 0.0
        %1857 = vmatpush1.msra.mxu0 0.0
        %1858 = vmatprep.subr.mxu0 0.0
        %1859 = vmatpush1.msra.mxu0 0.0
        %1860 = vmatprep.subr.mxu0 0.0
        %1861 = vmatpush1.msra.mxu0 0.0
        %1862 = vmatprep.subr.mxu0 0.0
        %1863 = vmatpush1.msra.mxu0 0.0
        %1864 = vmatprep.subr.mxu0 0.0
        %1865 = vmatpush1.msra.mxu0 0.0
        %1866 = vmatprep.subr.mxu0 0.0
        %1867 = vmatpush1.msra.mxu0 0.0
        %1868 = vmatprep.subr.mxu0 0.0
        %1869 = vmatpush1.msra.mxu0 0.0
        %1870 = vmatprep.subr.mxu0 0.0
        %1871 = vmatpush1.msra.mxu0 0.0
        %1872 = vmatprep.subr.mxu0 0.0
        %1873 = vmatpush1.msra.mxu0 0.0
        %1874 = vmatprep.subr.mxu0 0.0
        %1875 = vmatpush1.msra.mxu0 0.0
        %1876 = vmatprep.subr.mxu0 0.0
        %1877 = vmatpush1.msra.mxu0 0.0
        %1878 = vmatprep.subr.mxu0 0.0
        %1879 = vmatpush1.msra.mxu0 0.0
        %1880 = vmatprep.subr.mxu0 0.0
        %1881 = vmatpush1.msra.mxu0 0.0
        %1882 = vmatprep.subr.mxu0 0.0
        %1883 = vmatpush1.msra.mxu0 0.0
        %1884 = vmatprep.subr.mxu0 0.0
        %1885 = vmatpush1.msra.mxu0 0.0
        %1886 = vmatprep.subr.mxu0 %v1561
        %1887 = vmatpush1.msra.mxu0 %v1560
        %1888 = vmatprep.subr.mxu0 0.0
        %1889 = vmatpush2.msra.mxu0 0.0
        %1890 = vmatprep.subr.mxu0 0.0
        %1891 = vmatpush2.msra.mxu0 0.0
        %1892 = vmatprep.subr.mxu0 0.0
        %1893 = vmatpush2.msra.mxu0 0.0
        %1894 = vmatprep.subr.mxu0 0.0
        %1895 = vmatpush2.msra.mxu0 0.0
        %1896 = vmatprep.subr.mxu0 0.0
        %1897 = vmatpush2.msra.mxu0 0.0
        %1898 = vmatprep.subr.mxu0 0.0
        %1899 = vmatpush2.msra.mxu0 0.0
        %1900 = vmatprep.subr.mxu0 0.0
        %1901 = vmatpush2.msra.mxu0 0.0
        %1902 = vmatprep.subr.mxu0 0.0
        %1903 = vmatpush2.msra.mxu0 0.0
        %1904 = vmatprep.subr.mxu0 0.0
        %1905 = vmatpush2.msra.mxu0 0.0
        %1906 = vmatprep.subr.mxu0 0.0
        %1907 = vmatpush2.msra.mxu0 0.0
        %1908 = vmatprep.subr.mxu0 0.0
        %1909 = vmatpush2.msra.mxu0 0.0
        %1910 = vmatprep.subr.mxu0 0.0
        %1911 = vmatpush2.msra.mxu0 0.0
        %1912 = vmatprep.subr.mxu0 0.0
        %1913 = vmatpush2.msra.mxu0 0.0
        %1914 = vmatprep.subr.mxu0 0.0
        %1915 = vmatpush2.msra.mxu0 0.0
        %1916 = vmatprep.subr.mxu0 0.0
        %1917 = vmatpush2.msra.mxu0 0.0
        %1918 = vmatprep.subr.mxu0 0.0
        %1919 = vmatpush2.msra.mxu0 0.0
        %1920 = vmatprep.mubr.f32.mxu0 0.0
        %1921 = vmatmul.mubr.f32.gmra.mxu0 %v1570
        %v1922 = vpop.f32.mrf.mxu0
        %v1923 = vadd.f32 0.0, %v1922
        %v1924 = vpop.f32.mrf.mxu0
        %v1925 = vadd.f32 0.0, %v1924
        %1926 = vdwg.mxu0
        %1927 = vmatprep.subr.mxu0 0.0
        %1928 = vmatpush1.msra.mxu0 0.0
        %1929 = vmatprep.subr.mxu0 0.0
        %1930 = vmatpush1.msra.mxu0 0.0
        %1931 = vmatprep.subr.mxu0 0.0
        %1932 = vmatpush1.msra.mxu0 0.0
        %1933 = vmatprep.subr.mxu0 0.0
        %1934 = vmatpush1.msra.mxu0 0.0
        %1935 = vmatprep.subr.mxu0 0.0
        %1936 = vmatpush1.msra.mxu0 0.0
        %1937 = vmatprep.subr.mxu0 0.0
        %1938 = vmatpush1.msra.mxu0 0.0
        %1939 = vmatprep.subr.mxu0 0.0
        %1940 = vmatpush1.msra.mxu0 0.0
        %1941 = vmatprep.subr.mxu0 0.0
        %1942 = vmatpush1.msra.mxu0 0.0
        %1943 = vmatprep.subr.mxu0 0.0
        %1944 = vmatpush1.msra.mxu0 0.0
        %1945 = vmatprep.subr.mxu0 0.0
        %1946 = vmatpush1.msra.mxu0 0.0
        %1947 = vmatprep.subr.mxu0 0.0
        %1948 = vmatpush1.msra.mxu0 0.0
        %1949 = vmatprep.subr.mxu0 0.0
        %1950 = vmatpush1.msra.mxu0 0.0
        %1951 = vmatprep.subr.mxu0 0.0
        %1952 = vmatpush1.msra.mxu0 0.0
        %1953 = vmatprep.subr.mxu0 0.0
        %1954 = vmatpush1.msra.mxu0 0.0
        %1955 = vmatprep.subr.mxu0 0.0
        %1956 = vmatpush1.msra.mxu0 0.0
        %1957 = vmatprep.subr.mxu0 %v1563
        %1958 = vmatpush1.msra.mxu0 %v1562
        %1959 = vmatprep.subr.mxu0 0.0
        %1960 = vmatpush2.msra.mxu0 0.0
        %1961 = vmatprep.subr.mxu0 0.0
        %1962 = vmatpush2.msra.mxu0 0.0
        %1963 = vmatprep.subr.mxu0 0.0
        %1964 = vmatpush2.msra.mxu0 0.0
        %1965 = vmatprep.subr.mxu0 0.0
        %1966 = vmatpush2.msra.mxu0 0.0
        %1967 = vmatprep.subr.mxu0 0.0
        %1968 = vmatpush2.msra.mxu0 0.0
        %1969 = vmatprep.subr.mxu0 0.0
        %1970 = vmatpush2.msra.mxu0 0.0
        %1971 = vmatprep.subr.mxu0 0.0
        %1972 = vmatpush2.msra.mxu0 0.0
        %1973 = vmatprep.subr.mxu0 0.0
        %1974 = vmatpush2.msra.mxu0 0.0
        %1975 = vmatprep.subr.mxu0 0.0
        %1976 = vmatpush2.msra.mxu0 0.0
        %1977 = vmatprep.subr.mxu0 0.0
        %1978 = vmatpush2.msra.mxu0 0.0
        %1979 = vmatprep.subr.mxu0 0.0
        %1980 = vmatpush2.msra.mxu0 0.0
        %1981 = vmatprep.subr.mxu0 0.0
        %1982 = vmatpush2.msra.mxu0 0.0
        %1983 = vmatprep.subr.mxu0 0.0
        %1984 = vmatpush2.msra.mxu0 0.0
        %1985 = vmatprep.subr.mxu0 0.0
        %1986 = vmatpush2.msra.mxu0 0.0
        %1987 = vmatprep.subr.mxu0 0.0
        %1988 = vmatpush2.msra.mxu0 0.0
        %1989 = vmatprep.subr.mxu0 0.0
        %1990 = vmatpush2.msra.mxu0 0.0
        %1991 = vmatprep.mubr.f32.mxu0 0.0
        %1992 = vmatmul.mubr.f32.gmra.mxu0 %v1570
        %v1993 = vpop.f32.mrf.mxu0
        %v1994 = vadd.f32 0.0, %v1993
        %v1995 = vpop.f32.mrf.mxu0
        %v1996 = vadd.f32 0.0, %v1995
        %1997 = vdwg.mxu0
        %1998 = vmatprep.subr.mxu0 0.0
        %1999 = vmatpush1.msra.mxu0 0.0
        %2000 = vmatprep.subr.mxu0 0.0
        %2001 = vmatpush1.msra.mxu0 0.0
        %2002 = vmatprep.subr.mxu0 0.0
        %2003 = vmatpush1.msra.mxu0 0.0
        %2004 = vmatprep.subr.mxu0 0.0
        %2005 = vmatpush1.msra.mxu0 0.0
        %2006 = vmatprep.subr.mxu0 0.0
        %2007 = vmatpush1.msra.mxu0 0.0
        %2008 = vmatprep.subr.mxu0 0.0
        %2009 = vmatpush1.msra.mxu0 0.0
        %2010 = vmatprep.subr.mxu0 0.0
        %2011 = vmatpush1.msra.mxu0 0.0
        %2012 = vmatprep.subr.mxu0 0.0
        %2013 = vmatpush1.msra.mxu0 0.0
        %2014 = vmatprep.subr.mxu0 0.0
        %2015 = vmatpush1.msra.mxu0 0.0
        %2016 = vmatprep.subr.mxu0 0.0
        %2017 = vmatpush1.msra.mxu0 0.0
        %2018 = vmatprep.subr.mxu0 0.0
        %2019 = vmatpush1.msra.mxu0 0.0
        %2020 = vmatprep.subr.mxu0 0.0
        %2021 = vmatpush1.msra.mxu0 0.0
        %2022 = vmatprep.subr.mxu0 0.0
        %2023 = vmatpush1.msra.mxu0 0.0
        %2024 = vmatprep.subr.mxu0 0.0
        %2025 = vmatpush1.msra.mxu0 0.0
        %2026 = vmatprep.subr.mxu0 0.0
        %2027 = vmatpush1.msra.mxu0 0.0
        %2028 = vmatprep.subr.mxu0 %v1565
        %2029 = vmatpush1.msra.mxu0 %v1564
        %2030 = vmatprep.subr.mxu0 0.0
        %2031 = vmatpush2.msra.mxu0 0.0
        %2032 = vmatprep.subr.mxu0 0.0
        %2033 = vmatpush2.msra.mxu0 0.0
        %2034 = vmatprep.subr.mxu0 0.0
        %2035 = vmatpush2.msra.mxu0 0.0
        %2036 = vmatprep.subr.mxu0 0.0
        %2037 = vmatpush2.msra.mxu0 0.0
        %2038 = vmatprep.subr.mxu0 0.0
        %2039 = vmatpush2.msra.mxu0 0.0
        %2040 = vmatprep.subr.mxu0 0.0
        %2041 = vmatpush2.msra.mxu0 0.0
        %2042 = vmatprep.subr.mxu0 0.0
        %2043 = vmatpush2.msra.mxu0 0.0
        %2044 = vmatprep.subr.mxu0 0.0
        %2045 = vmatpush2.msra.mxu0 0.0
        %2046 = vmatprep.subr.mxu0 0.0
        %2047 = vmatpush2.msra.mxu0 0.0
        %2048 = vmatprep.subr.mxu0 0.0
        %2049 = vmatpush2.msra.mxu0 0.0
        %2050 = vmatprep.subr.mxu0 0.0
        %2051 = vmatpush2.msra.mxu0 0.0
        %2052 = vmatprep.subr.mxu0 0.0
        %2053 = vmatpush2.msra.mxu0 0.0
        %2054 = vmatprep.subr.mxu0 0.0
        %2055 = vmatpush2.msra.mxu0 0.0
        %2056 = vmatprep.subr.mxu0 0.0
        %2057 = vmatpush2.msra.mxu0 0.0
        %2058 = vmatprep.subr.mxu0 0.0
        %2059 = vmatpush2.msra.mxu0 0.0
        %2060 = vmatprep.subr.mxu0 0.0
        %2061 = vmatpush2.msra.mxu0 0.0
        %2062 = vmatprep.mubr.f32.mxu0 0.0
        %2063 = vmatmul.mubr.f32.gmra.mxu0 %v1570
        %v2064 = vpop.f32.mrf.mxu0
        %v2065 = vadd.f32 0.0, %v2064
        %v2066 = vpop.f32.mrf.mxu0
        %v2067 = vadd.f32 0.0, %v2066
        %2068 = vdwg.mxu0
        %2069 = vmatprep.subr.mxu0 0.0
        %2070 = vmatpush1.msra.mxu0 0.0
        %2071 = vmatprep.subr.mxu0 0.0
        %2072 = vmatpush1.msra.mxu0 0.0
        %2073 = vmatprep.subr.mxu0 0.0
        %2074 = vmatpush1.msra.mxu0 0.0
        %2075 = vmatprep.subr.mxu0 0.0
        %2076 = vmatpush1.msra.mxu0 0.0
        %2077 = vmatprep.subr.mxu0 0.0
        %2078 = vmatpush1.msra.mxu0 0.0
        %2079 = vmatprep.subr.mxu0 0.0
        %2080 = vmatpush1.msra.mxu0 0.0
        %2081 = vmatprep.subr.mxu0 0.0
        %2082 = vmatpush1.msra.mxu0 0.0
        %2083 = vmatprep.subr.mxu0 0.0
        %2084 = vmatpush1.msra.mxu0 0.0
        %2085 = vmatprep.subr.mxu0 0.0
        %2086 = vmatpush1.msra.mxu0 0.0
        %2087 = vmatprep.subr.mxu0 0.0
        %2088 = vmatpush1.msra.mxu0 0.0
        %2089 = vmatprep.subr.mxu0 0.0
        %2090 = vmatpush1.msra.mxu0 0.0
        %2091 = vmatprep.subr.mxu0 0.0
        %2092 = vmatpush1.msra.mxu0 0.0
        %2093 = vmatprep.subr.mxu0 0.0
        %2094 = vmatpush1.msra.mxu0 0.0
        %2095 = vmatprep.subr.mxu0 0.0
        %2096 = vmatpush1.msra.mxu0 0.0
        %2097 = vmatprep.subr.mxu0 0.0
        %2098 = vmatpush1.msra.mxu0 0.0
        %2099 = vmatprep.subr.mxu0 %v1567
        %2100 = vmatpush1.msra.mxu0 %v1566
        %2101 = vmatprep.subr.mxu0 0.0
        %2102 = vmatpush2.msra.mxu0 0.0
        %2103 = vmatprep.subr.mxu0 0.0
        %2104 = vmatpush2.msra.mxu0 0.0
        %2105 = vmatprep.subr.mxu0 0.0
        %2106 = vmatpush2.msra.mxu0 0.0
        %2107 = vmatprep.subr.mxu0 0.0
        %2108 = vmatpush2.msra.mxu0 0.0
        %2109 = vmatprep.subr.mxu0 0.0
        %2110 = vmatpush2.msra.mxu0 0.0
        %2111 = vmatprep.subr.mxu0 0.0
        %2112 = vmatpush2.msra.mxu0 0.0
        %2113 = vmatprep.subr.mxu0 0.0
        %2114 = vmatpush2.msra.mxu0 0.0
        %2115 = vmatprep.subr.mxu0 0.0
        %2116 = vmatpush2.msra.mxu0 0.0
        %2117 = vmatprep.subr.mxu0 0.0
        %2118 = vmatpush2.msra.mxu0 0.0
        %2119 = vmatprep.subr.mxu0 0.0
        %2120 = vmatpush2.msra.mxu0 0.0
        %2121 = vmatprep.subr.mxu0 0.0
        %2122 = vmatpush2.msra.mxu0 0.0
        %2123 = vmatprep.subr.mxu0 0.0
        %2124 = vmatpush2.msra.mxu0 0.0
        %2125 = vmatprep.subr.mxu0 0.0
        %2126 = vmatpush2.msra.mxu0 0.0
        %2127 = vmatprep.subr.mxu0 0.0
        %2128 = vmatpush2.msra.mxu0 0.0
        %2129 = vmatprep.subr.mxu0 0.0
        %2130 = vmatpush2.msra.mxu0 0.0
        %2131 = vmatprep.subr.mxu0 0.0
        %2132 = vmatpush2.msra.mxu0 0.0
        %2133 = vmatprep.mubr.f32.mxu0 0.0
        %2134 = vmatmul.mubr.f32.gmra.mxu0 %v1570
        %v2135 = vpop.f32.mrf.mxu0
        %v2136 = vadd.f32 0.0, %v2135
        %v2137 = vpop.f32.mrf.mxu0
        %v2138 = vadd.f32 0.0, %v2137
        %2139 = vdwg.mxu0
        %v2140 = vcombine.low %v1639, %v1710
        %v2141 = vcombine.high %v1639, %v1710
        %v2143 = vunpack.c.l.s4 1983009808
        %v2144 = vunpack.c.0.s8 %v2143
        %v2145 = vlaneseq
        %v2146 = vshrl.u32 %v2145, 7
        %v2147 = vsub.s32 %v2144, %v2146
        %v2148 = vrot.slane %v2140, %v2147
        %v2150 = vunpack.c.l.s4 1983009808
        %v2151 = vunpack.c.0.s8 %v2150
        %v2152 = vlaneseq
        %v2153 = vshrl.u32 %v2152, 7
        %v2154 = vsub.s32 %v2151, %v2153
        %v2155 = vrot.slane %v2141, %v2154
        %v2156 = vcombine.low %v1641, %v1712
        %v2157 = vcombine.high %v1641, %v1712
        %v2159 = vunpack.c.l.s4 1983009808
        %v2160 = vunpack.c.0.s8 %v2159
        %v2161 = vlaneseq
        %v2162 = vshrl.u32 %v2161, 7
        %v2163 = vsub.s32 %v2160, %v2162
        %v2164 = vrot.slane %v2156, %v2163
        %v2166 = vunpack.c.l.s4 1983009808
        %v2167 = vunpack.c.0.s8 %v2166
        %v2168 = vlaneseq
        %v2169 = vshrl.u32 %v2168, 7
        %v2170 = vsub.s32 %v2167, %v2169
        %v2171 = vrot.slane %v2157, %v2170
        %v2172 = vcombine.low %v1781, %v1852
        %v2173 = vcombine.high %v1781, %v1852
        %v2175 = vunpack.c.l.s4 1983009808
        %v2176 = vunpack.c.0.s8 %v2175
        %v2177 = vlaneseq
        %v2178 = vshrl.u32 %v2177, 7
        %v2179 = vsub.s32 %v2176, %v2178
        %v2180 = vrot.slane %v2172, %v2179
        %v2182 = vunpack.c.l.s4 1983009808
        %v2183 = vunpack.c.0.s8 %v2182
        %v2184 = vlaneseq
        %v2185 = vshrl.u32 %v2184, 7
        %v2186 = vsub.s32 %v2183, %v2185
        %v2187 = vrot.slane %v2173, %v2186
        %v2188 = vcombine.low %v1783, %v1854
        %v2189 = vcombine.high %v1783, %v1854
        %v2191 = vunpack.c.l.s4 1983009808
        %v2192 = vunpack.c.0.s8 %v2191
        %v2193 = vlaneseq
        %v2194 = vshrl.u32 %v2193, 7
        %v2195 = vsub.s32 %v2192, %v2194
        %v2196 = vrot.slane %v2188, %v2195
        %v2198 = vunpack.c.l.s4 1983009808
        %v2199 = vunpack.c.0.s8 %v2198
        %v2200 = vlaneseq
        %v2201 = vshrl.u32 %v2200, 7
        %v2202 = vsub.s32 %v2199, %v2201
        %v2203 = vrot.slane %v2189, %v2202
        %v2204 = vcombine.low %v2148, %v2164
        %v2205 = vcombine.high %v2148, %v2164
        %v2207 = vunpack.c.l.s4 1934713408
        %v2208 = vunpack.c.0.s8 %v2207
        %v2209 = vlaneseq
        %v2210 = vshrl.u32 %v2209, 7
        %v2211 = vsub.s32 %v2208, %v2210
        %v2212 = vrot.slane %v2204, %v2211
        %v2214 = vunpack.c.l.s4 1934713408
        %v2215 = vunpack.c.0.s8 %v2214
        %v2216 = vlaneseq
        %v2217 = vshrl.u32 %v2216, 7
        %v2218 = vsub.s32 %v2215, %v2217
        %v2219 = vrot.slane %v2205, %v2218
        %v2220 = vcombine.low %v2155, %v2171
        %v2221 = vcombine.high %v2155, %v2171
        %v2223 = vunpack.c.l.s4 1934713408
        %v2224 = vunpack.c.0.s8 %v2223
        %v2225 = vlaneseq
        %v2226 = vshrl.u32 %v2225, 7
        %v2227 = vsub.s32 %v2224, %v2226
        %v2228 = vrot.slane %v2220, %v2227
        %v2230 = vunpack.c.l.s4 1934713408
        %v2231 = vunpack.c.0.s8 %v2230
        %v2232 = vlaneseq
        %v2233 = vshrl.u32 %v2232, 7
        %v2234 = vsub.s32 %v2231, %v2233
        %v2235 = vrot.slane %v2221, %v2234
        %v2236 = vcombine.low %v2180, %v2196
        %v2237 = vcombine.high %v2180, %v2196
        %v2239 = vunpack.c.l.s4 1934713408
        %v2240 = vunpack.c.0.s8 %v2239
        %v2241 = vlaneseq
        %v2242 = vshrl.u32 %v2241, 7
        %v2243 = vsub.s32 %v2240, %v2242
        %v2244 = vrot.slane %v2236, %v2243
        %v2246 = vunpack.c.l.s4 1934713408
        %v2247 = vunpack.c.0.s8 %v2246
        %v2248 = vlaneseq
        %v2249 = vshrl.u32 %v2248, 7
        %v2250 = vsub.s32 %v2247, %v2249
        %v2251 = vrot.slane %v2237, %v2250
        %v2252 = vcombine.low %v2187, %v2203
        %v2253 = vcombine.high %v2187, %v2203
        %v2255 = vunpack.c.l.s4 1934713408
        %v2256 = vunpack.c.0.s8 %v2255
        %v2257 = vlaneseq
        %v2258 = vshrl.u32 %v2257, 7
        %v2259 = vsub.s32 %v2256, %v2258
        %v2260 = vrot.slane %v2252, %v2259
        %v2262 = vunpack.c.l.s4 1934713408
        %v2263 = vunpack.c.0.s8 %v2262
        %v2264 = vlaneseq
        %v2265 = vshrl.u32 %v2264, 7
        %v2266 = vsub.s32 %v2263, %v2265
        %v2267 = vrot.slane %v2253, %v2266
        %v2268 = vcombine.low %v2212, %v2244
        %v2269 = vcombine.high %v2212, %v2244
        %v2270 = vcombine.low %v2219, %v2251
        %v2271 = vcombine.high %v2219, %v2251
        %v2272 = vcombine.low %v2228, %v2260
        %v2273 = vcombine.high %v2228, %v2260
        %v2274 = vcombine.low %v2235, %v2267
        %v2275 = vcombine.high %v2235, %v2267
        %v2276 = vcombine.low %v1923, %v1994
        %v2277 = vcombine.high %v1923, %v1994
        %v2279 = vunpack.c.l.s4 1983009808
        %v2280 = vunpack.c.0.s8 %v2279
        %v2281 = vlaneseq
        %v2282 = vshrl.u32 %v2281, 7
        %v2283 = vsub.s32 %v2280, %v2282
        %v2284 = vrot.slane %v2276, %v2283
        %v2286 = vunpack.c.l.s4 1983009808
        %v2287 = vunpack.c.0.s8 %v2286
        %v2288 = vlaneseq
        %v2289 = vshrl.u32 %v2288, 7
        %v2290 = vsub.s32 %v2287, %v2289
        %v2291 = vrot.slane %v2277, %v2290
        %v2292 = vcombine.low %v1925, %v1996
        %v2293 = vcombine.high %v1925, %v1996
        %v2295 = vunpack.c.l.s4 1983009808
        %v2296 = vunpack.c.0.s8 %v2295
        %v2297 = vlaneseq
        %v2298 = vshrl.u32 %v2297, 7
        %v2299 = vsub.s32 %v2296, %v2298
        %v2300 = vrot.slane %v2292, %v2299
        %v2302 = vunpack.c.l.s4 1983009808
        %v2303 = vunpack.c.0.s8 %v2302
        %v2304 = vlaneseq
        %v2305 = vshrl.u32 %v2304, 7
        %v2306 = vsub.s32 %v2303, %v2305
        %v2307 = vrot.slane %v2293, %v2306
        %v2308 = vcombine.low %v2065, %v2136
        %v2309 = vcombine.high %v2065, %v2136
        %v2311 = vunpack.c.l.s4 1983009808
        %v2312 = vunpack.c.0.s8 %v2311
        %v2313 = vlaneseq
        %v2314 = vshrl.u32 %v2313, 7
        %v2315 = vsub.s32 %v2312, %v2314
        %v2316 = vrot.slane %v2308, %v2315
        %v2318 = vunpack.c.l.s4 1983009808
        %v2319 = vunpack.c.0.s8 %v2318
        %v2320 = vlaneseq
        %v2321 = vshrl.u32 %v2320, 7
        %v2322 = vsub.s32 %v2319, %v2321
        %v2323 = vrot.slane %v2309, %v2322
        %v2324 = vcombine.low %v2067, %v2138
        %v2325 = vcombine.high %v2067, %v2138
        %v2327 = vunpack.c.l.s4 1983009808
        %v2328 = vunpack.c.0.s8 %v2327
        %v2329 = vlaneseq
        %v2330 = vshrl.u32 %v2329, 7
        %v2331 = vsub.s32 %v2328, %v2330
        %v2332 = vrot.slane %v2324, %v2331
        %v2334 = vunpack.c.l.s4 1983009808
        %v2335 = vunpack.c.0.s8 %v2334
        %v2336 = vlaneseq
        %v2337 = vshrl.u32 %v2336, 7
        %v2338 = vsub.s32 %v2335, %v2337
        %v2339 = vrot.slane %v2325, %v2338
        %v2340 = vcombine.low %v2284, %v2300
        %v2341 = vcombine.high %v2284, %v2300
        %v2343 = vunpack.c.l.s4 1934713408
        %v2344 = vunpack.c.0.s8 %v2343
        %v2345 = vlaneseq
        %v2346 = vshrl.u32 %v2345, 7
        %v2347 = vsub.s32 %v2344, %v2346
        %v2348 = vrot.slane %v2340, %v2347
        %v2350 = vunpack.c.l.s4 1934713408
        %v2351 = vunpack.c.0.s8 %v2350
        %v2352 = vlaneseq
        %v2353 = vshrl.u32 %v2352, 7
        %v2354 = vsub.s32 %v2351, %v2353
        %v2355 = vrot.slane %v2341, %v2354
        %v2356 = vcombine.low %v2291, %v2307
        %v2357 = vcombine.high %v2291, %v2307
        %v2359 = vunpack.c.l.s4 1934713408
        %v2360 = vunpack.c.0.s8 %v2359
        %v2361 = vlaneseq
        %v2362 = vshrl.u32 %v2361, 7
        %v2363 = vsub.s32 %v2360, %v2362
        %v2364 = vrot.slane %v2356, %v2363
        %v2366 = vunpack.c.l.s4 1934713408
        %v2367 = vunpack.c.0.s8 %v2366
        %v2368 = vlaneseq
        %v2369 = vshrl.u32 %v2368, 7
        %v2370 = vsub.s32 %v2367, %v2369
        %v2371 = vrot.slane %v2357, %v2370
        %v2372 = vcombine.low %v2316, %v2332
        %v2373 = vcombine.high %v2316, %v2332
        %v2375 = vunpack.c.l.s4 1934713408
        %v2376 = vunpack.c.0.s8 %v2375
        %v2377 = vlaneseq
        %v2378 = vshrl.u32 %v2377, 7
        %v2379 = vsub.s32 %v2376, %v2378
        %v2380 = vrot.slane %v2372, %v2379
        %v2382 = vunpack.c.l.s4 1934713408
        %v2383 = vunpack.c.0.s8 %v2382
        %v2384 = vlaneseq
        %v2385 = vshrl.u32 %v2384, 7
        %v2386 = vsub.s32 %v2383, %v2385
        %v2387 = vrot.slane %v2373, %v2386
        %v2388 = vcombine.low %v2323, %v2339
        %v2389 = vcombine.high %v2323, %v2339
        %v2391 = vunpack.c.l.s4 1934713408
        %v2392 = vunpack.c.0.s8 %v2391
        %v2393 = vlaneseq
        %v2394 = vshrl.u32 %v2393, 7
        %v2395 = vsub.s32 %v2392, %v2394
        %v2396 = vrot.slane %v2388, %v2395
        %v2398 = vunpack.c.l.s4 1934713408
        %v2399 = vunpack.c.0.s8 %v2398
        %v2400 = vlaneseq
        %v2401 = vshrl.u32 %v2400, 7
        %v2402 = vsub.s32 %v2399, %v2401
        %v2403 = vrot.slane %v2389, %v2402
        %v2404 = vcombine.low %v2348, %v2380
        %v2405 = vcombine.high %v2348, %v2380
        %v2406 = vcombine.low %v2355, %v2387
        %v2407 = vcombine.high %v2355, %v2387
        %v2408 = vcombine.low %v2364, %v2396
        %v2409 = vcombine.high %v2364, %v2396
        %v2410 = vcombine.low %v2371, %v2403
        %v2411 = vcombine.high %v2371, %v2403
        %v2412 = vld [vmem:[%s450] sm:$0x1]
        %v2413 = vunpack.c.l.bf16 %v2412
        %v2414 = vld [vmem:[%s455] sm:$0xf]
        %v2415 = vld [vmem:[%s455 + $0x4] sm:$0xf]
        %v2416 = vunpack.c.l.bf16 %v2414
        %v2417 = vunpack.c.l.bf16 %v2415
        %v2418 = vlaneseq
        %v2419 = vshrl.u32 %v2418, 7
        %v2420 = vsub.s32 0, %v2419
        %v2421 = vrot.slane %v2413, %v2420
        %v2422 = vadd.f32 %v2421, %v2416
        %v2423 = vadd.f32 %v2421, %v2417
        %v2424 = vadd.f32 %v2268, %v2422
        %v2425 = vadd.f32 %v2404, %v2423
        %v2426 = vadd.f32 %v2269, %v2422
        %v2427 = vadd.f32 %v2405, %v2423
        %v2428 = vadd.f32 %v2270, %v2422
        %v2429 = vadd.f32 %v2406, %v2423
        %v2430 = vadd.f32 %v2271, %v2422
        %v2431 = vadd.f32 %v2407, %v2423
        %v2432 = vadd.f32 %v2272, %v2422
        %v2433 = vadd.f32 %v2408, %v2423
        %v2434 = vadd.f32 %v2273, %v2422
        %v2435 = vadd.f32 %v2409, %v2423
        %v2436 = vadd.f32 %v2274, %v2422
        %v2437 = vadd.f32 %v2410, %v2423
        %v2438 = vadd.f32 %v2275, %v2422
        %v2439 = vadd.f32 %v2411, %v2423
        %2440 = vmax.xlane.f32.xlu0 %v2424
        %v2441 = vpop.xlane.xlu0 %2440
        %2442 = vmax.xlane.f32.xlu0 %v2425
        %v2443 = vpop.xlane.xlu0 %2442
        %2444 = vmax.xlane.f32.xlu0 %v2426
        %v2445 = vpop.xlane.xlu0 %2444
        %2446 = vmax.xlane.f32.xlu0 %v2427
        %v2447 = vpop.xlane.xlu0 %2446
        %2448 = vmax.xlane.f32.xlu0 %v2428
        %v2449 = vpop.xlane.xlu0 %2448
        %2450 = vmax.xlane.f32.xlu0 %v2429
        %v2451 = vpop.xlane.xlu0 %2450
        %2452 = vmax.xlane.f32.xlu0 %v2430
        %v2453 = vpop.xlane.xlu0 %2452
        %2454 = vmax.xlane.f32.xlu0 %v2431
        %v2455 = vpop.xlane.xlu0 %2454
        %2456 = vmax.xlane.f32.xlu0 %v2432
        %v2457 = vpop.xlane.xlu0 %2456
        %2458 = vmax.xlane.f32.xlu0 %v2433
        %v2459 = vpop.xlane.xlu0 %2458
        %2460 = vmax.xlane.f32.xlu0 %v2434
        %v2461 = vpop.xlane.xlu0 %2460
        %2462 = vmax.xlane.f32.xlu0 %v2435
        %v2463 = vpop.xlane.xlu0 %2462
        %2464 = vmax.xlane.f32.xlu0 %v2436
        %v2465 = vpop.xlane.xlu0 %2464
        %2466 = vmax.xlane.f32.xlu0 %v2437
        %v2467 = vpop.xlane.xlu0 %2466
        %2468 = vmax.xlane.f32.xlu0 %v2438
        %v2469 = vpop.xlane.xlu0 %2468
        %2470 = vmax.xlane.f32.xlu0 %v2439
        %v2471 = vpop.xlane.xlu0 %2470
        %v2472 = vsub.f32 %v2424, %v2441
        %v2473 = vsub.f32 %v2425, %v2443
        %v2474 = vsub.f32 %v2426, %v2445
        %v2475 = vsub.f32 %v2427, %v2447
        %v2476 = vsub.f32 %v2428, %v2449
        %v2477 = vsub.f32 %v2429, %v2451
        %v2478 = vsub.f32 %v2430, %v2453
        %v2479 = vsub.f32 %v2431, %v2455
        %v2480 = vsub.f32 %v2432, %v2457
        %v2481 = vsub.f32 %v2433, %v2459
        %v2482 = vsub.f32 %v2434, %v2461
        %v2483 = vsub.f32 %v2435, %v2463
        %v2484 = vsub.f32 %v2436, %v2465
        %v2485 = vsub.f32 %v2437, %v2467
        %v2486 = vsub.f32 %v2438, %v2469
        %v2487 = vsub.f32 %v2439, %v2471
        %v2488 = vmul.f32 %v2472, 1.442695
        %v2489 = vpow.pop %v2488
        %v2490 = vmul.f32 %v2473, 1.442695
        %v2491 = vpow.pop %v2490
        %v2492 = vmul.f32 %v2474, 1.442695
        %v2493 = vpow.pop %v2492
        %v2494 = vmul.f32 %v2475, 1.442695
        %v2495 = vpow.pop %v2494
        %v2496 = vmul.f32 %v2476, 1.442695
        %v2497 = vpow.pop %v2496
        %v2498 = vmul.f32 %v2477, 1.442695
        %v2499 = vpow.pop %v2498
        %v2500 = vmul.f32 %v2478, 1.442695
        %v2501 = vpow.pop %v2500
        %v2502 = vmul.f32 %v2479, 1.442695
        %v2503 = vpow.pop %v2502
        %v2504 = vmul.f32 %v2480, 1.442695
        %v2505 = vpow.pop %v2504
        %v2506 = vmul.f32 %v2481, 1.442695
        %v2507 = vpow.pop %v2506
        %v2508 = vmul.f32 %v2482, 1.442695
        %v2509 = vpow.pop %v2508
        %v2510 = vmul.f32 %v2483, 1.442695
        %v2511 = vpow.pop %v2510
        %v2512 = vmul.f32 %v2484, 1.442695
        %v2513 = vpow.pop %v2512
        %v2514 = vmul.f32 %v2485, 1.442695
        %v2515 = vpow.pop %v2514
        %v2516 = vmul.f32 %v2486, 1.442695
        %v2517 = vpow.pop %v2516
        %v2518 = vmul.f32 %v2487, 1.442695
        %v2519 = vpow.pop %v2518
        %2520 = vadd.xlane.f32.xlu0 %v2489
        %v2521 = vpop.xlane.xlu0 %2520
        %2522 = vadd.xlane.f32.xlu0 %v2491
        %v2523 = vpop.xlane.xlu0 %2522
        %2524 = vadd.xlane.f32.xlu0 %v2493
        %v2525 = vpop.xlane.xlu0 %2524
        %2526 = vadd.xlane.f32.xlu0 %v2495
        %v2527 = vpop.xlane.xlu0 %2526
        %2528 = vadd.xlane.f32.xlu0 %v2497
        %v2529 = vpop.xlane.xlu0 %2528
        %2530 = vadd.xlane.f32.xlu0 %v2499
        %v2531 = vpop.xlane.xlu0 %2530
        %2532 = vadd.xlane.f32.xlu0 %v2501
        %v2533 = vpop.xlane.xlu0 %2532
        %2534 = vadd.xlane.f32.xlu0 %v2503
        %v2535 = vpop.xlane.xlu0 %2534
        %2536 = vadd.xlane.f32.xlu0 %v2505
        %v2537 = vpop.xlane.xlu0 %2536
        %2538 = vadd.xlane.f32.xlu0 %v2507
        %v2539 = vpop.xlane.xlu0 %2538
        %2540 = vadd.xlane.f32.xlu0 %v2509
        %v2541 = vpop.xlane.xlu0 %2540
        %2542 = vadd.xlane.f32.xlu0 %v2511
        %v2543 = vpop.xlane.xlu0 %2542
        %2544 = vadd.xlane.f32.xlu0 %v2513
        %v2545 = vpop.xlane.xlu0 %2544
        %2546 = vadd.xlane.f32.xlu0 %v2515
        %v2547 = vpop.xlane.xlu0 %2546
        %2548 = vadd.xlane.f32.xlu0 %v2517
        %v2549 = vpop.xlane.xlu0 %2548
        %2550 = vadd.xlane.f32.xlu0 %v2519
        %v2551 = vpop.xlane.xlu0 %2550
        %v2552 = vrcp.pop %v2521
        %v2553 = vrcp.pop %v2523
        %v2554 = vrcp.pop %v2525
        %v2555 = vrcp.pop %v2527
        %v2556 = vrcp.pop %v2529
        %v2557 = vrcp.pop %v2531
        %v2558 = vrcp.pop %v2533
        %v2559 = vrcp.pop %v2535
        %v2560 = vrcp.pop %v2537
        %v2561 = vrcp.pop %v2539
        %v2562 = vrcp.pop %v2541
        %v2563 = vrcp.pop %v2543
        %v2564 = vrcp.pop %v2545
        %v2565 = vrcp.pop %v2547
        %v2566 = vrcp.pop %v2549
        %v2567 = vrcp.pop %v2551
        %v2568 = vmul.f32 %v2489, %v2552
        %v2569 = vmul.f32 %v2491, %v2553
        %v2570 = vmul.f32 %v2493, %v2554
        %v2571 = vmul.f32 %v2495, %v2555
        %v2572 = vmul.f32 %v2497, %v2556
        %v2573 = vmul.f32 %v2499, %v2557
        %v2574 = vmul.f32 %v2501, %v2558
        %v2575 = vmul.f32 %v2503, %v2559
        %v2576 = vmul.f32 %v2505, %v2560
        %v2577 = vmul.f32 %v2507, %v2561
        %v2578 = vmul.f32 %v2509, %v2562
        %v2579 = vmul.f32 %v2511, %v2563
        %v2580 = vmul.f32 %v2513, %v2564
        %v2581 = vmul.f32 %v2515, %v2565
        %v2582 = vmul.f32 %v2517, %v2566
        %v2583 = vmul.f32 %v2519, %v2567
        %v2584 = vld [vmem:[%s1] sm:$0xf]
        %v2585 = vpack.c.bf16 %v2569, %v2568
        %v2586 = vpack.c.bf16 %v2571, %v2570
        %v2587 = vpack.c.bf16 %v2573, %v2572
        %v2588 = vpack.c.bf16 %v2575, %v2574
        %v2589 = vpack.c.bf16 %v2577, %v2576
        %v2590 = vpack.c.bf16 %v2579, %v2578
        %v2591 = vpack.c.bf16 %v2581, %v2580
        %v2592 = vpack.c.bf16 %v2583, %v2582
        %v2595 = vpack.i.b16 %v2586, %v2585
        %v2597 = vshrl.u32 %v2585, 16
        %v2598 = vshrl.u32 %v2586, 16
        %v2599 = vpack.i.b16 %v2598, %v2597
        %v2603 = vpack.i.b16 %v2588, %v2587
        %v2605 = vshrl.u32 %v2587, 16
        %v2606 = vshrl.u32 %v2588, 16
        %v2607 = vpack.i.b16 %v2606, %v2605
        %v2611 = vpack.i.b16 %v2590, %v2589
        %v2613 = vshrl.u32 %v2589, 16
        %v2614 = vshrl.u32 %v2590, 16
        %v2615 = vpack.i.b16 %v2614, %v2613
        %v2619 = vpack.i.b16 %v2592, %v2591
        %v2621 = vshrl.u32 %v2591, 16
        %v2622 = vshrl.u32 %v2592, 16
        %v2623 = vpack.i.b16 %v2622, %v2621
        %v2625 = vcombine.low %v2595, %v2611
        %v2626 = vcombine.high %v2595, %v2611
        %v2628 = vunpack.c.l.s4 1983009808
        %v2629 = vunpack.c.0.s8 %v2628
        %v2630 = vlaneseq
        %v2631 = vshrl.u32 %v2630, 7
        %v2632 = vsub.s32 %v2629, %v2631
        %v2633 = vrot.slane %v2625, %v2632
        %v2635 = vunpack.c.l.s4 1983009808
        %v2636 = vunpack.c.0.s8 %v2635
        %v2637 = vlaneseq
        %v2638 = vshrl.u32 %v2637, 7
        %v2639 = vsub.s32 %v2636, %v2638
        %v2640 = vrot.slane %v2626, %v2639
        %v2641 = vcombine.low %v2603, %v2619
        %v2642 = vcombine.high %v2603, %v2619
        %v2644 = vunpack.c.l.s4 1983009808
        %v2645 = vunpack.c.0.s8 %v2644
        %v2646 = vlaneseq
        %v2647 = vshrl.u32 %v2646, 7
        %v2648 = vsub.s32 %v2645, %v2647
        %v2649 = vrot.slane %v2641, %v2648
        %v2651 = vunpack.c.l.s4 1983009808
        %v2652 = vunpack.c.0.s8 %v2651
        %v2653 = vlaneseq
        %v2654 = vshrl.u32 %v2653, 7
        %v2655 = vsub.s32 %v2652, %v2654
        %v2656 = vrot.slane %v2642, %v2655
        %v2657 = vcombine.low %v2633, %v2649
        %v2658 = vcombine.high %v2633, %v2649
        %v2660 = vunpack.c.l.s4 1934713408
        %v2661 = vunpack.c.0.s8 %v2660
        %v2662 = vlaneseq
        %v2663 = vshrl.u32 %v2662, 7
        %v2664 = vsub.s32 %v2661, %v2663
        %v2665 = vrot.slane %v2657, %v2664
        %v2667 = vunpack.c.l.s4 1934713408
        %v2668 = vunpack.c.0.s8 %v2667
        %v2669 = vlaneseq
        %v2670 = vshrl.u32 %v2669, 7
        %v2671 = vsub.s32 %v2668, %v2670
        %v2672 = vrot.slane %v2658, %v2671
        %v2673 = vcombine.low %v2640, %v2656
        %v2674 = vcombine.high %v2640, %v2656
        %v2676 = vunpack.c.l.s4 1934713408
        %v2677 = vunpack.c.0.s8 %v2676
        %v2678 = vlaneseq
        %v2679 = vshrl.u32 %v2678, 7
        %v2680 = vsub.s32 %v2677, %v2679
        %v2681 = vrot.slane %v2673, %v2680
        %v2683 = vunpack.c.l.s4 1934713408
        %v2684 = vunpack.c.0.s8 %v2683
        %v2685 = vlaneseq
        %v2686 = vshrl.u32 %v2685, 7
        %v2687 = vsub.s32 %v2684, %v2686
        %v2688 = vrot.slane %v2674, %v2687
        %v2689 = vcombine.high %v2665, 0
        %v2690 = vcombine.high %v2672, 0
        %v2691 = vcombine.high %v2681, 0
        %v2692 = vcombine.high %v2688, 0
        %v2693 = vcombine.low %v2599, %v2615
        %v2694 = vcombine.high %v2599, %v2615
        %v2696 = vunpack.c.l.s4 1983009808
        %v2697 = vunpack.c.0.s8 %v2696
        %v2698 = vlaneseq
        %v2699 = vshrl.u32 %v2698, 7
        %v2700 = vsub.s32 %v2697, %v2699
        %v2701 = vrot.slane %v2693, %v2700
        %v2703 = vunpack.c.l.s4 1983009808
        %v2704 = vunpack.c.0.s8 %v2703
        %v2705 = vlaneseq
        %v2706 = vshrl.u32 %v2705, 7
        %v2707 = vsub.s32 %v2704, %v2706
        %v2708 = vrot.slane %v2694, %v2707
        %v2709 = vcombine.low %v2607, %v2623
        %v2710 = vcombine.high %v2607, %v2623
        %v2712 = vunpack.c.l.s4 1983009808
        %v2713 = vunpack.c.0.s8 %v2712
        %v2714 = vlaneseq
        %v2715 = vshrl.u32 %v2714, 7
        %v2716 = vsub.s32 %v2713, %v2715
        %v2717 = vrot.slane %v2709, %v2716
        %v2719 = vunpack.c.l.s4 1983009808
        %v2720 = vunpack.c.0.s8 %v2719
        %v2721 = vlaneseq
        %v2722 = vshrl.u32 %v2721, 7
        %v2723 = vsub.s32 %v2720, %v2722
        %v2724 = vrot.slane %v2710, %v2723
        %v2725 = vcombine.low %v2701, %v2717
        %v2726 = vcombine.high %v2701, %v2717
        %v2728 = vunpack.c.l.s4 1934713408
        %v2729 = vunpack.c.0.s8 %v2728
        %v2730 = vlaneseq
        %v2731 = vshrl.u32 %v2730, 7
        %v2732 = vsub.s32 %v2729, %v2731
        %v2733 = vrot.slane %v2725, %v2732
        %v2735 = vunpack.c.l.s4 1934713408
        %v2736 = vunpack.c.0.s8 %v2735
        %v2737 = vlaneseq
        %v2738 = vshrl.u32 %v2737, 7
        %v2739 = vsub.s32 %v2736, %v2738
        %v2740 = vrot.slane %v2726, %v2739
        %v2741 = vcombine.low %v2708, %v2724
        %v2742 = vcombine.high %v2708, %v2724
        %v2744 = vunpack.c.l.s4 1934713408
        %v2745 = vunpack.c.0.s8 %v2744
        %v2746 = vlaneseq
        %v2747 = vshrl.u32 %v2746, 7
        %v2748 = vsub.s32 %v2745, %v2747
        %v2749 = vrot.slane %v2741, %v2748
        %v2751 = vunpack.c.l.s4 1934713408
        %v2752 = vunpack.c.0.s8 %v2751
        %v2753 = vlaneseq
        %v2754 = vshrl.u32 %v2753, 7
        %v2755 = vsub.s32 %v2752, %v2754
        %v2756 = vrot.slane %v2742, %v2755
        %v2757 = vcombine.high %v2733, 0
        %v2758 = vcombine.high %v2740, 0
        %v2759 = vcombine.high %v2749, 0
        %v2760 = vcombine.high %v2756, 0
        %v2762 = vsel %vm1568, %v2584, 0
        %vm2764 = vcmask 1043456
        %v2766 = vsel %vm2764, %v2665, 0
        %v2769 = vsel %vm2764, %v2733, 0
        %v2772 = vsel %vm2764, %v2689, 0
        %v2775 = vsel %vm2764, %v2757, 0
        %v2778 = vsel %vm2764, %v2672, 0
        %v2781 = vsel %vm2764, %v2740, 0
        %v2784 = vsel %vm2764, %v2690, 0
        %v2787 = vsel %vm2764, %v2758, 0
        %v2790 = vsel %vm2764, %v2681, 0
        %v2793 = vsel %vm2764, %v2749, 0
        %v2796 = vsel %vm2764, %v2691, 0
        %v2799 = vsel %vm2764, %v2759, 0
        %v2802 = vsel %vm2764, %v2688, 0
        %v2805 = vsel %vm2764, %v2756, 0
        %v2808 = vsel %vm2764, %v2692, 0
        %v2811 = vsel %vm2764, %v2760, 0
        %2813 = vmatprep.subr.bf16.mxu0 0
        %2814 = vmatpush1.bf16.msra.mxu0 0
        %2815 = vmatprep.subr.bf16.mxu0 0
        %2816 = vmatpush1.bf16.msra.mxu0 0
        %2817 = vmatprep.subr.bf16.mxu0 0
        %2818 = vmatpush1.bf16.msra.mxu0 0
        %2819 = vmatprep.subr.bf16.mxu0 0
        %2820 = vmatpush1.bf16.msra.mxu0 0
        %2821 = vmatprep.subr.bf16.mxu0 0
        %2822 = vmatpush1.bf16.msra.mxu0 0
        %2823 = vmatprep.subr.bf16.mxu0 0
        %2824 = vmatpush1.bf16.msra.mxu0 0
        %2825 = vmatprep.subr.bf16.mxu0 0
        %2826 = vmatpush1.bf16.msra.mxu0 0
        %2827 = vmatprep.subr.bf16.mxu0 %v2769
        %2828 = vmatpush1.bf16.msra.mxu0 %v2766
        %2829 = vmatprep.subr.bf16.mxu0 0
        %2830 = vmatpush2.bf16.msra.mxu0 0
        %2831 = vmatprep.subr.bf16.mxu0 0
        %2832 = vmatpush2.bf16.msra.mxu0 0
        %2833 = vmatprep.subr.bf16.mxu0 0
        %2834 = vmatpush2.bf16.msra.mxu0 0
        %2835 = vmatprep.subr.bf16.mxu0 0
        %2836 = vmatpush2.bf16.msra.mxu0 0
        %2837 = vmatprep.subr.bf16.mxu0 0
        %2838 = vmatpush2.bf16.msra.mxu0 0
        %2839 = vmatprep.subr.bf16.mxu0 0
        %2840 = vmatpush2.bf16.msra.mxu0 0
        %2841 = vmatprep.subr.bf16.mxu0 0
        %2842 = vmatpush2.bf16.msra.mxu0 0
        %2843 = vmatprep.subr.bf16.mxu0 0
        %2844 = vmatpush2.bf16.msra.mxu0 0
        %2845 = vmatprep.mubr.bf16.mxu0 0
        %2846 = vmatmul.mubr.bf16.gmra.mxu0 %v2762
        %v2847 = vpop.f32.mrf.mxu0
        %v2848 = vadd.f32 0.0, %v2847
        %v2849 = vpop.f32.mrf.mxu0
        %v2850 = vadd.f32 0.0, %v2849
        %v2851 = vpop.f32.mrf.mxu0
        %v2852 = vpop.f32.mrf.mxu0
        %2853 = vdwg.mxu0
        %2854 = vmatprep.subr.bf16.mxu0 0
        %2855 = vmatpush1.bf16.msra.mxu0 0
        %2856 = vmatprep.subr.bf16.mxu0 0
        %2857 = vmatpush1.bf16.msra.mxu0 0
        %2858 = vmatprep.subr.bf16.mxu0 0
        %2859 = vmatpush1.bf16.msra.mxu0 0
        %2860 = vmatprep.subr.bf16.mxu0 0
        %2861 = vmatpush1.bf16.msra.mxu0 0
        %2862 = vmatprep.subr.bf16.mxu0 0
        %2863 = vmatpush1.bf16.msra.mxu0 0
        %2864 = vmatprep.subr.bf16.mxu0 0
        %2865 = vmatpush1.bf16.msra.mxu0 0
        %2866 = vmatprep.subr.bf16.mxu0 0
        %2867 = vmatpush1.bf16.msra.mxu0 0
        %2868 = vmatprep.subr.bf16.mxu0 %v2775
        %2869 = vmatpush1.bf16.msra.mxu0 %v2772
        %2870 = vmatprep.subr.bf16.mxu0 0
        %2871 = vmatpush2.bf16.msra.mxu0 0
        %2872 = vmatprep.subr.bf16.mxu0 0
        %2873 = vmatpush2.bf16.msra.mxu0 0
        %2874 = vmatprep.subr.bf16.mxu0 0
        %2875 = vmatpush2.bf16.msra.mxu0 0
        %2876 = vmatprep.subr.bf16.mxu0 0
        %2877 = vmatpush2.bf16.msra.mxu0 0
        %2878 = vmatprep.subr.bf16.mxu0 0
        %2879 = vmatpush2.bf16.msra.mxu0 0
        %2880 = vmatprep.subr.bf16.mxu0 0
        %2881 = vmatpush2.bf16.msra.mxu0 0
        %2882 = vmatprep.subr.bf16.mxu0 0
        %2883 = vmatpush2.bf16.msra.mxu0 0
        %2884 = vmatprep.subr.bf16.mxu0 0
        %2885 = vmatpush2.bf16.msra.mxu0 0
        %2886 = vmatprep.mubr.bf16.mxu0 0
        %2887 = vmatmul.mubr.bf16.gmra.mxu0 %v2762
        %v2888 = vpop.f32.mrf.mxu0
        %v2889 = vadd.f32 0.0, %v2888
        %v2890 = vpop.f32.mrf.mxu0
        %v2891 = vadd.f32 0.0, %v2890
        %v2892 = vpop.f32.mrf.mxu0
        %v2893 = vpop.f32.mrf.mxu0
        %2894 = vdwg.mxu0
        %2895 = vmatprep.subr.bf16.mxu0 0
        %2896 = vmatpush1.bf16.msra.mxu0 0
        %2897 = vmatprep.subr.bf16.mxu0 0
        %2898 = vmatpush1.bf16.msra.mxu0 0
        %2899 = vmatprep.subr.bf16.mxu0 0
        %2900 = vmatpush1.bf16.msra.mxu0 0
        %2901 = vmatprep.subr.bf16.mxu0 0
        %2902 = vmatpush1.bf16.msra.mxu0 0
        %2903 = vmatprep.subr.bf16.mxu0 0
        %2904 = vmatpush1.bf16.msra.mxu0 0
        %2905 = vmatprep.subr.bf16.mxu0 0
        %2906 = vmatpush1.bf16.msra.mxu0 0
        %2907 = vmatprep.subr.bf16.mxu0 0
        %2908 = vmatpush1.bf16.msra.mxu0 0
        %2909 = vmatprep.subr.bf16.mxu0 %v2781
        %2910 = vmatpush1.bf16.msra.mxu0 %v2778
        %2911 = vmatprep.subr.bf16.mxu0 0
        %2912 = vmatpush2.bf16.msra.mxu0 0
        %2913 = vmatprep.subr.bf16.mxu0 0
        %2914 = vmatpush2.bf16.msra.mxu0 0
        %2915 = vmatprep.subr.bf16.mxu0 0
        %2916 = vmatpush2.bf16.msra.mxu0 0
        %2917 = vmatprep.subr.bf16.mxu0 0
        %2918 = vmatpush2.bf16.msra.mxu0 0
        %2919 = vmatprep.subr.bf16.mxu0 0
        %2920 = vmatpush2.bf16.msra.mxu0 0
        %2921 = vmatprep.subr.bf16.mxu0 0
        %2922 = vmatpush2.bf16.msra.mxu0 0
        %2923 = vmatprep.subr.bf16.mxu0 0
        %2924 = vmatpush2.bf16.msra.mxu0 0
        %2925 = vmatprep.subr.bf16.mxu0 0
        %2926 = vmatpush2.bf16.msra.mxu0 0
        %2927 = vmatprep.mubr.bf16.mxu0 0
        %2928 = vmatmul.mubr.bf16.gmra.mxu0 %v2762
        %v2929 = vpop.f32.mrf.mxu0
        %v2930 = vadd.f32 0.0, %v2929
        %v2931 = vpop.f32.mrf.mxu0
        %v2932 = vadd.f32 0.0, %v2931
        %v2933 = vpop.f32.mrf.mxu0
        %v2934 = vpop.f32.mrf.mxu0
        %2935 = vdwg.mxu0
        %2936 = vmatprep.subr.bf16.mxu0 0
        %2937 = vmatpush1.bf16.msra.mxu0 0
        %2938 = vmatprep.subr.bf16.mxu0 0
        %2939 = vmatpush1.bf16.msra.mxu0 0
        %2940 = vmatprep.subr.bf16.mxu0 0
        %2941 = vmatpush1.bf16.msra.mxu0 0
        %2942 = vmatprep.subr.bf16.mxu0 0
        %2943 = vmatpush1.bf16.msra.mxu0 0
        %2944 = vmatprep.subr.bf16.mxu0 0
        %2945 = vmatpush1.bf16.msra.mxu0 0
        %2946 = vmatprep.subr.bf16.mxu0 0
        %2947 = vmatpush1.bf16.msra.mxu0 0
        %2948 = vmatprep.subr.bf16.mxu0 0
        %2949 = vmatpush1.bf16.msra.mxu0 0
        %2950 = vmatprep.subr.bf16.mxu0 %v2787
        %2951 = vmatpush1.bf16.msra.mxu0 %v2784
        %2952 = vmatprep.subr.bf16.mxu0 0
        %2953 = vmatpush2.bf16.msra.mxu0 0
        %2954 = vmatprep.subr.bf16.mxu0 0
        %2955 = vmatpush2.bf16.msra.mxu0 0
        %2956 = vmatprep.subr.bf16.mxu0 0
        %2957 = vmatpush2.bf16.msra.mxu0 0
        %2958 = vmatprep.subr.bf16.mxu0 0
        %2959 = vmatpush2.bf16.msra.mxu0 0
        %2960 = vmatprep.subr.bf16.mxu0 0
        %2961 = vmatpush2.bf16.msra.mxu0 0
        %2962 = vmatprep.subr.bf16.mxu0 0
        %2963 = vmatpush2.bf16.msra.mxu0 0
        %2964 = vmatprep.subr.bf16.mxu0 0
        %2965 = vmatpush2.bf16.msra.mxu0 0
        %2966 = vmatprep.subr.bf16.mxu0 0
        %2967 = vmatpush2.bf16.msra.mxu0 0
        %2968 = vmatprep.mubr.bf16.mxu0 0
        %2969 = vmatmul.mubr.bf16.gmra.mxu0 %v2762
        %v2970 = vpop.f32.mrf.mxu0
        %v2971 = vadd.f32 0.0, %v2970
        %v2972 = vpop.f32.mrf.mxu0
        %v2973 = vadd.f32 0.0, %v2972
        %v2974 = vpop.f32.mrf.mxu0
        %v2975 = vpop.f32.mrf.mxu0
        %2976 = vdwg.mxu0
        %2977 = vmatprep.subr.bf16.mxu0 0
        %2978 = vmatpush1.bf16.msra.mxu0 0
        %2979 = vmatprep.subr.bf16.mxu0 0
        %2980 = vmatpush1.bf16.msra.mxu0 0
        %2981 = vmatprep.subr.bf16.mxu0 0
        %2982 = vmatpush1.bf16.msra.mxu0 0
        %2983 = vmatprep.subr.bf16.mxu0 0
        %2984 = vmatpush1.bf16.msra.mxu0 0
        %2985 = vmatprep.subr.bf16.mxu0 0
        %2986 = vmatpush1.bf16.msra.mxu0 0
        %2987 = vmatprep.subr.bf16.mxu0 0
        %2988 = vmatpush1.bf16.msra.mxu0 0
        %2989 = vmatprep.subr.bf16.mxu0 0
        %2990 = vmatpush1.bf16.msra.mxu0 0
        %2991 = vmatprep.subr.bf16.mxu0 %v2793
        %2992 = vmatpush1.bf16.msra.mxu0 %v2790
        %2993 = vmatprep.subr.bf16.mxu0 0
        %2994 = vmatpush2.bf16.msra.mxu0 0
        %2995 = vmatprep.subr.bf16.mxu0 0
        %2996 = vmatpush2.bf16.msra.mxu0 0
        %2997 = vmatprep.subr.bf16.mxu0 0
        %2998 = vmatpush2.bf16.msra.mxu0 0
        %2999 = vmatprep.subr.bf16.mxu0 0
        %3000 = vmatpush2.bf16.msra.mxu0 0
        %3001 = vmatprep.subr.bf16.mxu0 0
        %3002 = vmatpush2.bf16.msra.mxu0 0
        %3003 = vmatprep.subr.bf16.mxu0 0
        %3004 = vmatpush2.bf16.msra.mxu0 0
        %3005 = vmatprep.subr.bf16.mxu0 0
        %3006 = vmatpush2.bf16.msra.mxu0 0
        %3007 = vmatprep.subr.bf16.mxu0 0
        %3008 = vmatpush2.bf16.msra.mxu0 0
        %3009 = vmatprep.mubr.bf16.mxu0 0
        %3010 = vmatmul.mubr.bf16.gmra.mxu0 %v2762
        %v3011 = vpop.f32.mrf.mxu0
        %v3012 = vadd.f32 0.0, %v3011
        %v3013 = vpop.f32.mrf.mxu0
        %v3014 = vadd.f32 0.0, %v3013
        %v3015 = vpop.f32.mrf.mxu0
        %v3016 = vpop.f32.mrf.mxu0
        %3017 = vdwg.mxu0
        %3018 = vmatprep.subr.bf16.mxu0 0
        %3019 = vmatpush1.bf16.msra.mxu0 0
        %3020 = vmatprep.subr.bf16.mxu0 0
        %3021 = vmatpush1.bf16.msra.mxu0 0
        %3022 = vmatprep.subr.bf16.mxu0 0
        %3023 = vmatpush1.bf16.msra.mxu0 0
        %3024 = vmatprep.subr.bf16.mxu0 0
        %3025 = vmatpush1.bf16.msra.mxu0 0
        %3026 = vmatprep.subr.bf16.mxu0 0
        %3027 = vmatpush1.bf16.msra.mxu0 0
        %3028 = vmatprep.subr.bf16.mxu0 0
        %3029 = vmatpush1.bf16.msra.mxu0 0
        %3030 = vmatprep.subr.bf16.mxu0 0
        %3031 = vmatpush1.bf16.msra.mxu0 0
        %3032 = vmatprep.subr.bf16.mxu0 %v2799
        %3033 = vmatpush1.bf16.msra.mxu0 %v2796
        %3034 = vmatprep.subr.bf16.mxu0 0
        %3035 = vmatpush2.bf16.msra.mxu0 0
        %3036 = vmatprep.subr.bf16.mxu0 0
        %3037 = vmatpush2.bf16.msra.mxu0 0
        %3038 = vmatprep.subr.bf16.mxu0 0
        %3039 = vmatpush2.bf16.msra.mxu0 0
        %3040 = vmatprep.subr.bf16.mxu0 0
        %3041 = vmatpush2.bf16.msra.mxu0 0
        %3042 = vmatprep.subr.bf16.mxu0 0
        %3043 = vmatpush2.bf16.msra.mxu0 0
        %3044 = vmatprep.subr.bf16.mxu0 0
        %3045 = vmatpush2.bf16.msra.mxu0 0
        %3046 = vmatprep.subr.bf16.mxu0 0
        %3047 = vmatpush2.bf16.msra.mxu0 0
        %3048 = vmatprep.subr.bf16.mxu0 0
        %3049 = vmatpush2.bf16.msra.mxu0 0
        %3050 = vmatprep.mubr.bf16.mxu0 0
        %3051 = vmatmul.mubr.bf16.gmra.mxu0 %v2762
        %v3052 = vpop.f32.mrf.mxu0
        %v3053 = vadd.f32 0.0, %v3052
        %v3054 = vpop.f32.mrf.mxu0
        %v3055 = vadd.f32 0.0, %v3054
        %v3056 = vpop.f32.mrf.mxu0
        %v3057 = vpop.f32.mrf.mxu0
        %3058 = vdwg.mxu0
        %3059 = vmatprep.subr.bf16.mxu0 0
        %3060 = vmatpush1.bf16.msra.mxu0 0
        %3061 = vmatprep.subr.bf16.mxu0 0
        %3062 = vmatpush1.bf16.msra.mxu0 0
        %3063 = vmatprep.subr.bf16.mxu0 0
        %3064 = vmatpush1.bf16.msra.mxu0 0
        %3065 = vmatprep.subr.bf16.mxu0 0
        %3066 = vmatpush1.bf16.msra.mxu0 0
        %3067 = vmatprep.subr.bf16.mxu0 0
        %3068 = vmatpush1.bf16.msra.mxu0 0
        %3069 = vmatprep.subr.bf16.mxu0 0
        %3070 = vmatpush1.bf16.msra.mxu0 0
        %3071 = vmatprep.subr.bf16.mxu0 0
        %3072 = vmatpush1.bf16.msra.mxu0 0
        %3073 = vmatprep.subr.bf16.mxu0 %v2805
        %3074 = vmatpush1.bf16.msra.mxu0 %v2802
        %3075 = vmatprep.subr.bf16.mxu0 0
        %3076 = vmatpush2.bf16.msra.mxu0 0
        %3077 = vmatprep.subr.bf16.mxu0 0
        %3078 = vmatpush2.bf16.msra.mxu0 0
        %3079 = vmatprep.subr.bf16.mxu0 0
        %3080 = vmatpush2.bf16.msra.mxu0 0
        %3081 = vmatprep.subr.bf16.mxu0 0
        %3082 = vmatpush2.bf16.msra.mxu0 0
        %3083 = vmatprep.subr.bf16.mxu0 0
        %3084 = vmatpush2.bf16.msra.mxu0 0
        %3085 = vmatprep.subr.bf16.mxu0 0
        %3086 = vmatpush2.bf16.msra.mxu0 0
        %3087 = vmatprep.subr.bf16.mxu0 0
        %3088 = vmatpush2.bf16.msra.mxu0 0
        %3089 = vmatprep.subr.bf16.mxu0 0
        %3090 = vmatpush2.bf16.msra.mxu0 0
        %3091 = vmatprep.mubr.bf16.mxu0 0
        %3092 = vmatmul.mubr.bf16.gmra.mxu0 %v2762
        %v3093 = vpop.f32.mrf.mxu0
        %v3094 = vadd.f32 0.0, %v3093
        %v3095 = vpop.f32.mrf.mxu0
        %v3096 = vadd.f32 0.0, %v3095
        %v3097 = vpop.f32.mrf.mxu0
        %v3098 = vpop.f32.mrf.mxu0
        %3099 = vdwg.mxu0
        %3100 = vmatprep.subr.bf16.mxu0 0
        %3101 = vmatpush1.bf16.msra.mxu0 0
        %3102 = vmatprep.subr.bf16.mxu0 0
        %3103 = vmatpush1.bf16.msra.mxu0 0
        %3104 = vmatprep.subr.bf16.mxu0 0
        %3105 = vmatpush1.bf16.msra.mxu0 0
        %3106 = vmatprep.subr.bf16.mxu0 0
        %3107 = vmatpush1.bf16.msra.mxu0 0
        %3108 = vmatprep.subr.bf16.mxu0 0
        %3109 = vmatpush1.bf16.msra.mxu0 0
        %3110 = vmatprep.subr.bf16.mxu0 0
        %3111 = vmatpush1.bf16.msra.mxu0 0
        %3112 = vmatprep.subr.bf16.mxu0 0
        %3113 = vmatpush1.bf16.msra.mxu0 0
        %3114 = vmatprep.subr.bf16.mxu0 %v2811
        %3115 = vmatpush1.bf16.msra.mxu0 %v2808
        %3116 = vmatprep.subr.bf16.mxu0 0
        %3117 = vmatpush2.bf16.msra.mxu0 0
        %3118 = vmatprep.subr.bf16.mxu0 0
        %3119 = vmatpush2.bf16.msra.mxu0 0
        %3120 = vmatprep.subr.bf16.mxu0 0
        %3121 = vmatpush2.bf16.msra.mxu0 0
        %3122 = vmatprep.subr.bf16.mxu0 0
        %3123 = vmatpush2.bf16.msra.mxu0 0
        %3124 = vmatprep.subr.bf16.mxu0 0
        %3125 = vmatpush2.bf16.msra.mxu0 0
        %3126 = vmatprep.subr.bf16.mxu0 0
        %3127 = vmatpush2.bf16.msra.mxu0 0
        %3128 = vmatprep.subr.bf16.mxu0 0
        %3129 = vmatpush2.bf16.msra.mxu0 0
        %3130 = vmatprep.subr.bf16.mxu0 0
        %3131 = vmatpush2.bf16.msra.mxu0 0
        %3132 = vmatprep.mubr.bf16.mxu0 0
        %3133 = vmatmul.mubr.bf16.gmra.mxu0 %v2762
        %v3134 = vpop.f32.mrf.mxu0
        %v3135 = vadd.f32 0.0, %v3134
        %v3136 = vpop.f32.mrf.mxu0
        %v3137 = vadd.f32 0.0, %v3136
        %v3138 = vpop.f32.mrf.mxu0
        %v3139 = vpop.f32.mrf.mxu0
        %3140 = vdwg.mxu0
        %v3141 = vcombine.low %v2848, %v2889
        %v3142 = vcombine.high %v2848, %v2889
        %v3144 = vunpack.c.l.s4 1983009808
        %v3145 = vunpack.c.0.s8 %v3144
        %v3146 = vlaneseq
        %v3147 = vshrl.u32 %v3146, 7
        %v3148 = vsub.s32 %v3145, %v3147
        %v3149 = vrot.slane %v3141, %v3148
        %v3151 = vunpack.c.l.s4 1983009808
        %v3152 = vunpack.c.0.s8 %v3151
        %v3153 = vlaneseq
        %v3154 = vshrl.u32 %v3153, 7
        %v3155 = vsub.s32 %v3152, %v3154
        %v3156 = vrot.slane %v3142, %v3155
        %v3157 = vcombine.low %v2850, %v2891
        %v3158 = vcombine.high %v2850, %v2891
        %v3160 = vunpack.c.l.s4 1983009808
        %v3161 = vunpack.c.0.s8 %v3160
        %v3162 = vlaneseq
        %v3163 = vshrl.u32 %v3162, 7
        %v3164 = vsub.s32 %v3161, %v3163
        %v3165 = vrot.slane %v3157, %v3164
        %v3167 = vunpack.c.l.s4 1983009808
        %v3168 = vunpack.c.0.s8 %v3167
        %v3169 = vlaneseq
        %v3170 = vshrl.u32 %v3169, 7
        %v3171 = vsub.s32 %v3168, %v3170
        %v3172 = vrot.slane %v3158, %v3171
        %v3173 = vcombine.low %v2930, %v2971
        %v3174 = vcombine.high %v2930, %v2971
        %v3176 = vunpack.c.l.s4 1983009808
        %v3177 = vunpack.c.0.s8 %v3176
        %v3178 = vlaneseq
        %v3179 = vshrl.u32 %v3178, 7
        %v3180 = vsub.s32 %v3177, %v3179
        %v3181 = vrot.slane %v3173, %v3180
        %v3183 = vunpack.c.l.s4 1983009808
        %v3184 = vunpack.c.0.s8 %v3183
        %v3185 = vlaneseq
        %v3186 = vshrl.u32 %v3185, 7
        %v3187 = vsub.s32 %v3184, %v3186
        %v3188 = vrot.slane %v3174, %v3187
        %v3189 = vcombine.low %v2932, %v2973
        %v3190 = vcombine.high %v2932, %v2973
        %v3192 = vunpack.c.l.s4 1983009808
        %v3193 = vunpack.c.0.s8 %v3192
        %v3194 = vlaneseq
        %v3195 = vshrl.u32 %v3194, 7
        %v3196 = vsub.s32 %v3193, %v3195
        %v3197 = vrot.slane %v3189, %v3196
        %v3199 = vunpack.c.l.s4 1983009808
        %v3200 = vunpack.c.0.s8 %v3199
        %v3201 = vlaneseq
        %v3202 = vshrl.u32 %v3201, 7
        %v3203 = vsub.s32 %v3200, %v3202
        %v3204 = vrot.slane %v3190, %v3203
        %v3205 = vcombine.low %v3149, %v3165
        %v3206 = vcombine.high %v3149, %v3165
        %v3208 = vunpack.c.l.s4 1934713408
        %v3209 = vunpack.c.0.s8 %v3208
        %v3210 = vlaneseq
        %v3211 = vshrl.u32 %v3210, 7
        %v3212 = vsub.s32 %v3209, %v3211
        %v3213 = vrot.slane %v3205, %v3212
        %v3215 = vunpack.c.l.s4 1934713408
        %v3216 = vunpack.c.0.s8 %v3215
        %v3217 = vlaneseq
        %v3218 = vshrl.u32 %v3217, 7
        %v3219 = vsub.s32 %v3216, %v3218
        %v3220 = vrot.slane %v3206, %v3219
        %v3221 = vcombine.low %v3156, %v3172
        %v3222 = vcombine.high %v3156, %v3172
        %v3224 = vunpack.c.l.s4 1934713408
        %v3225 = vunpack.c.0.s8 %v3224
        %v3226 = vlaneseq
        %v3227 = vshrl.u32 %v3226, 7
        %v3228 = vsub.s32 %v3225, %v3227
        %v3229 = vrot.slane %v3221, %v3228
        %v3231 = vunpack.c.l.s4 1934713408
        %v3232 = vunpack.c.0.s8 %v3231
        %v3233 = vlaneseq
        %v3234 = vshrl.u32 %v3233, 7
        %v3235 = vsub.s32 %v3232, %v3234
        %v3236 = vrot.slane %v3222, %v3235
        %v3237 = vcombine.low %v3181, %v3197
        %v3238 = vcombine.high %v3181, %v3197
        %v3240 = vunpack.c.l.s4 1934713408
        %v3241 = vunpack.c.0.s8 %v3240
        %v3242 = vlaneseq
        %v3243 = vshrl.u32 %v3242, 7
        %v3244 = vsub.s32 %v3241, %v3243
        %v3245 = vrot.slane %v3237, %v3244
        %v3247 = vunpack.c.l.s4 1934713408
        %v3248 = vunpack.c.0.s8 %v3247
        %v3249 = vlaneseq
        %v3250 = vshrl.u32 %v3249, 7
        %v3251 = vsub.s32 %v3248, %v3250
        %v3252 = vrot.slane %v3238, %v3251
        %v3253 = vcombine.low %v3188, %v3204
        %v3254 = vcombine.high %v3188, %v3204
        %v3256 = vunpack.c.l.s4 1934713408
        %v3257 = vunpack.c.0.s8 %v3256
        %v3258 = vlaneseq
        %v3259 = vshrl.u32 %v3258, 7
        %v3260 = vsub.s32 %v3257, %v3259
        %v3261 = vrot.slane %v3253, %v3260
        %v3263 = vunpack.c.l.s4 1934713408
        %v3264 = vunpack.c.0.s8 %v3263
        %v3265 = vlaneseq
        %v3266 = vshrl.u32 %v3265, 7
        %v3267 = vsub.s32 %v3264, %v3266
        %v3268 = vrot.slane %v3254, %v3267
        %v3269 = vcombine.low %v3213, %v3245
        %v3270 = vcombine.high %v3213, %v3245
        %v3271 = vcombine.low %v3220, %v3252
        %v3272 = vcombine.high %v3220, %v3252
        %v3273 = vcombine.low %v3229, %v3261
        %v3274 = vcombine.high %v3229, %v3261
        %v3275 = vcombine.low %v3236, %v3268
        %v3276 = vcombine.high %v3236, %v3268
        %v3277 = vcombine.low %v3012, %v3053
        %v3278 = vcombine.high %v3012, %v3053
        %v3280 = vunpack.c.l.s4 1983009808
        %v3281 = vunpack.c.0.s8 %v3280
        %v3282 = vlaneseq
        %v3283 = vshrl.u32 %v3282, 7
        %v3284 = vsub.s32 %v3281, %v3283
        %v3285 = vrot.slane %v3277, %v3284
        %v3287 = vunpack.c.l.s4 1983009808
        %v3288 = vunpack.c.0.s8 %v3287
        %v3289 = vlaneseq
        %v3290 = vshrl.u32 %v3289, 7
        %v3291 = vsub.s32 %v3288, %v3290
        %v3292 = vrot.slane %v3278, %v3291
        %v3293 = vcombine.low %v3014, %v3055
        %v3294 = vcombine.high %v3014, %v3055
        %v3296 = vunpack.c.l.s4 1983009808
        %v3297 = vunpack.c.0.s8 %v3296
        %v3298 = vlaneseq
        %v3299 = vshrl.u32 %v3298, 7
        %v3300 = vsub.s32 %v3297, %v3299
        %v3301 = vrot.slane %v3293, %v3300
        %v3303 = vunpack.c.l.s4 1983009808
        %v3304 = vunpack.c.0.s8 %v3303
        %v3305 = vlaneseq
        %v3306 = vshrl.u32 %v3305, 7
        %v3307 = vsub.s32 %v3304, %v3306
        %v3308 = vrot.slane %v3294, %v3307
        %v3309 = vcombine.low %v3094, %v3135
        %v3310 = vcombine.high %v3094, %v3135
        %v3312 = vunpack.c.l.s4 1983009808
        %v3313 = vunpack.c.0.s8 %v3312
        %v3314 = vlaneseq
        %v3315 = vshrl.u32 %v3314, 7
        %v3316 = vsub.s32 %v3313, %v3315
        %v3317 = vrot.slane %v3309, %v3316
        %v3319 = vunpack.c.l.s4 1983009808
        %v3320 = vunpack.c.0.s8 %v3319
        %v3321 = vlaneseq
        %v3322 = vshrl.u32 %v3321, 7
        %v3323 = vsub.s32 %v3320, %v3322
        %v3324 = vrot.slane %v3310, %v3323
        %v3325 = vcombine.low %v3096, %v3137
        %v3326 = vcombine.high %v3096, %v3137
        %v3328 = vunpack.c.l.s4 1983009808
        %v3329 = vunpack.c.0.s8 %v3328
        %v3330 = vlaneseq
        %v3331 = vshrl.u32 %v3330, 7
        %v3332 = vsub.s32 %v3329, %v3331
        %v3333 = vrot.slane %v3325, %v3332
        %v3335 = vunpack.c.l.s4 1983009808
        %v3336 = vunpack.c.0.s8 %v3335
        %v3337 = vlaneseq
        %v3338 = vshrl.u32 %v3337, 7
        %v3339 = vsub.s32 %v3336, %v3338
        %v3340 = vrot.slane %v3326, %v3339
        %v3341 = vcombine.low %v3285, %v3301
        %v3342 = vcombine.high %v3285, %v3301
        %v3344 = vunpack.c.l.s4 1934713408
        %v3345 = vunpack.c.0.s8 %v3344
        %v3346 = vlaneseq
        %v3347 = vshrl.u32 %v3346, 7
        %v3348 = vsub.s32 %v3345, %v3347
        %v3349 = vrot.slane %v3341, %v3348
        %v3351 = vunpack.c.l.s4 1934713408
        %v3352 = vunpack.c.0.s8 %v3351
        %v3353 = vlaneseq
        %v3354 = vshrl.u32 %v3353, 7
        %v3355 = vsub.s32 %v3352, %v3354
        %v3356 = vrot.slane %v3342, %v3355
        %v3357 = vcombine.low %v3292, %v3308
        %v3358 = vcombine.high %v3292, %v3308
        %v3360 = vunpack.c.l.s4 1934713408
        %v3361 = vunpack.c.0.s8 %v3360
        %v3362 = vlaneseq
        %v3363 = vshrl.u32 %v3362, 7
        %v3364 = vsub.s32 %v3361, %v3363
        %v3365 = vrot.slane %v3357, %v3364
        %v3367 = vunpack.c.l.s4 1934713408
        %v3368 = vunpack.c.0.s8 %v3367
        %v3369 = vlaneseq
        %v3370 = vshrl.u32 %v3369, 7
        %v3371 = vsub.s32 %v3368, %v3370
        %v3372 = vrot.slane %v3358, %v3371
        %v3373 = vcombine.low %v3317, %v3333
        %v3374 = vcombine.high %v3317, %v3333
        %v3376 = vunpack.c.l.s4 1934713408
        %v3377 = vunpack.c.0.s8 %v3376
        %v3378 = vlaneseq
        %v3379 = vshrl.u32 %v3378, 7
        %v3380 = vsub.s32 %v3377, %v3379
        %v3381 = vrot.slane %v3373, %v3380
        %v3383 = vunpack.c.l.s4 1934713408
        %v3384 = vunpack.c.0.s8 %v3383
        %v3385 = vlaneseq
        %v3386 = vshrl.u32 %v3385, 7
        %v3387 = vsub.s32 %v3384, %v3386
        %v3388 = vrot.slane %v3374, %v3387
        %v3389 = vcombine.low %v3324, %v3340
        %v3390 = vcombine.high %v3324, %v3340
        %v3392 = vunpack.c.l.s4 1934713408
        %v3393 = vunpack.c.0.s8 %v3392
        %v3394 = vlaneseq
        %v3395 = vshrl.u32 %v3394, 7
        %v3396 = vsub.s32 %v3393, %v3395
        %v3397 = vrot.slane %v3389, %v3396
        %v3399 = vunpack.c.l.s4 1934713408
        %v3400 = vunpack.c.0.s8 %v3399
        %v3401 = vlaneseq
        %v3402 = vshrl.u32 %v3401, 7
        %v3403 = vsub.s32 %v3400, %v3402
        %v3404 = vrot.slane %v3390, %v3403
        %v3405 = vcombine.low %v3349, %v3381
        %v3406 = vcombine.high %v3349, %v3381
        %v3407 = vcombine.low %v3356, %v3388
        %v3408 = vcombine.high %v3356, %v3388
        %v3409 = vcombine.low %v3365, %v3397
        %v3410 = vcombine.high %v3365, %v3397
        %v3411 = vcombine.low %v3372, %v3404
        %v3412 = vcombine.high %v3372, %v3404
        %3413 = vmatprep.subr.mxu0 0.0
        %3414 = vmatpush1.msra.mxu0 %v533
        %3415 = vmatprep.subr.mxu0 0.0
        %3416 = vmatpush1.msra.mxu0 %v532
        %3417 = vmatprep.subr.mxu0 0.0
        %3418 = vmatpush1.msra.mxu0 %v531
        %3419 = vmatprep.subr.mxu0 0.0
        %3420 = vmatpush1.msra.mxu0 %v530
        %3421 = vmatprep.subr.mxu0 0.0
        %3422 = vmatpush1.msra.mxu0 %v529
        %3423 = vmatprep.subr.mxu0 0.0
        %3424 = vmatpush1.msra.mxu0 %v528
        %3425 = vmatprep.subr.mxu0 0.0
        %3426 = vmatpush1.msra.mxu0 %v527
        %3427 = vmatprep.subr.mxu0 0.0
        %3428 = vmatpush1.msra.mxu0 %v526
        %3429 = vmatprep.subr.mxu0 0.0
        %3430 = vmatpush1.msra.mxu0 %v525
        %3431 = vmatprep.subr.mxu0 0.0
        %3432 = vmatpush1.msra.mxu0 %v524
        %3433 = vmatprep.subr.mxu0 0.0
        %3434 = vmatpush1.msra.mxu0 %v523
        %3435 = vmatprep.subr.mxu0 0.0
        %3436 = vmatpush1.msra.mxu0 %v522
        %3437 = vmatprep.subr.mxu0 0.0
        %3438 = vmatpush1.msra.mxu0 %v521
        %3439 = vmatprep.subr.mxu0 0.0
        %3440 = vmatpush1.msra.mxu0 %v520
        %3441 = vmatprep.subr.mxu0 0.0
        %3442 = vmatpush1.msra.mxu0 %v519
        %3443 = vmatprep.subr.mxu0 0.0
        %3444 = vmatpush1.msra.mxu0 %v518
        %3445 = vmatprep.subr.mxu0 0.0
        %3446 = vmatpush2.msra.mxu0 0.0
        %3447 = vmatprep.subr.mxu0 0.0
        %3448 = vmatpush2.msra.mxu0 0.0
        %3449 = vmatprep.subr.mxu0 0.0
        %3450 = vmatpush2.msra.mxu0 0.0
        %3451 = vmatprep.subr.mxu0 0.0
        %3452 = vmatpush2.msra.mxu0 0.0
        %3453 = vmatprep.subr.mxu0 0.0
        %3454 = vmatpush2.msra.mxu0 0.0
        %3455 = vmatprep.subr.mxu0 0.0
        %3456 = vmatpush2.msra.mxu0 0.0
        %3457 = vmatprep.subr.mxu0 0.0
        %3458 = vmatpush2.msra.mxu0 0.0
        %3459 = vmatprep.subr.mxu0 0.0
        %3460 = vmatpush2.msra.mxu0 0.0
        %3461 = vmatprep.subr.mxu0 0.0
        %3462 = vmatpush2.msra.mxu0 0.0
        %3463 = vmatprep.subr.mxu0 0.0
        %3464 = vmatpush2.msra.mxu0 0.0
        %3465 = vmatprep.subr.mxu0 0.0
        %3466 = vmatpush2.msra.mxu0 0.0
        %3467 = vmatprep.subr.mxu0 0.0
        %3468 = vmatpush2.msra.mxu0 0.0
        %3469 = vmatprep.subr.mxu0 0.0
        %3470 = vmatpush2.msra.mxu0 0.0
        %3471 = vmatprep.subr.mxu0 0.0
        %3472 = vmatpush2.msra.mxu0 0.0
        %3473 = vmatprep.subr.mxu0 0.0
        %3474 = vmatpush2.msra.mxu0 0.0
        %3475 = vmatprep.subr.mxu0 0.0
        %3476 = vmatpush2.msra.mxu0 0.0
        %3477 = vmatprep.mubr.f32.mxu0 0.0
        %3478 = vmatmul.mubr.f32.gmra.mxu0 %v3269
        %v3479 = vpop.f32.mrf.mxu0
        %v3480 = vadd.f32 0.0, %v3479
        %v3481 = vpop.f32.mrf.mxu0
        %3482 = vmatprep.mubr.f32.mxu0 0.0
        %3483 = vmatmul.mubr.f32.gmra.mxu0 %v3405
        %v3484 = vpop.f32.mrf.mxu0
        %v3485 = vadd.f32 0.0, %v3484
        %v3486 = vpop.f32.mrf.mxu0
        %3487 = vdwg.mxu0
        %3488 = vmatprep.subr.mxu0 0.0
        %3489 = vmatpush1.msra.mxu0 %v549
        %3490 = vmatprep.subr.mxu0 0.0
        %3491 = vmatpush1.msra.mxu0 %v548
        %3492 = vmatprep.subr.mxu0 0.0
        %3493 = vmatpush1.msra.mxu0 %v547
        %3494 = vmatprep.subr.mxu0 0.0
        %3495 = vmatpush1.msra.mxu0 %v546
        %3496 = vmatprep.subr.mxu0 0.0
        %3497 = vmatpush1.msra.mxu0 %v545
        %3498 = vmatprep.subr.mxu0 0.0
        %3499 = vmatpush1.msra.mxu0 %v544
        %3500 = vmatprep.subr.mxu0 0.0
        %3501 = vmatpush1.msra.mxu0 %v543
        %3502 = vmatprep.subr.mxu0 0.0
        %3503 = vmatpush1.msra.mxu0 %v542
        %3504 = vmatprep.subr.mxu0 0.0
        %3505 = vmatpush1.msra.mxu0 %v541
        %3506 = vmatprep.subr.mxu0 0.0
        %3507 = vmatpush1.msra.mxu0 %v540
        %3508 = vmatprep.subr.mxu0 0.0
        %3509 = vmatpush1.msra.mxu0 %v539
        %3510 = vmatprep.subr.mxu0 0.0
        %3511 = vmatpush1.msra.mxu0 %v538
        %3512 = vmatprep.subr.mxu0 0.0
        %3513 = vmatpush1.msra.mxu0 %v537
        %3514 = vmatprep.subr.mxu0 0.0
        %3515 = vmatpush1.msra.mxu0 %v536
        %3516 = vmatprep.subr.mxu0 0.0
        %3517 = vmatpush1.msra.mxu0 %v535
        %3518 = vmatprep.subr.mxu0 0.0
        %3519 = vmatpush1.msra.mxu0 %v534
        %3520 = vmatprep.subr.mxu0 0.0
        %3521 = vmatpush2.msra.mxu0 0.0
        %3522 = vmatprep.subr.mxu0 0.0
        %3523 = vmatpush2.msra.mxu0 0.0
        %3524 = vmatprep.subr.mxu0 0.0
        %3525 = vmatpush2.msra.mxu0 0.0
        %3526 = vmatprep.subr.mxu0 0.0
        %3527 = vmatpush2.msra.mxu0 0.0
        %3528 = vmatprep.subr.mxu0 0.0
        %3529 = vmatpush2.msra.mxu0 0.0
        %3530 = vmatprep.subr.mxu0 0.0
        %3531 = vmatpush2.msra.mxu0 0.0
        %3532 = vmatprep.subr.mxu0 0.0
        %3533 = vmatpush2.msra.mxu0 0.0
        %3534 = vmatprep.subr.mxu0 0.0
        %3535 = vmatpush2.msra.mxu0 0.0
        %3536 = vmatprep.subr.mxu0 0.0
        %3537 = vmatpush2.msra.mxu0 0.0
        %3538 = vmatprep.subr.mxu0 0.0
        %3539 = vmatpush2.msra.mxu0 0.0
        %3540 = vmatprep.subr.mxu0 0.0
        %3541 = vmatpush2.msra.mxu0 0.0
        %3542 = vmatprep.subr.mxu0 0.0
        %3543 = vmatpush2.msra.mxu0 0.0
        %3544 = vmatprep.subr.mxu0 0.0
        %3545 = vmatpush2.msra.mxu0 0.0
        %3546 = vmatprep.subr.mxu0 0.0
        %3547 = vmatpush2.msra.mxu0 0.0
        %3548 = vmatprep.subr.mxu0 0.0
        %3549 = vmatpush2.msra.mxu0 0.0
        %3550 = vmatprep.subr.mxu0 0.0
        %3551 = vmatpush2.msra.mxu0 0.0
        %3552 = vmatprep.mubr.f32.mxu0 0.0
        %3553 = vmatmul.mubr.f32.gmra.mxu0 %v3270
        %v3554 = vpop.f32.mrf.mxu0
        %v3555 = vadd.f32 0.0, %v3554
        %v3556 = vpop.f32.mrf.mxu0
        %3557 = vmatprep.mubr.f32.mxu0 0.0
        %3558 = vmatmul.mubr.f32.gmra.mxu0 %v3406
        %v3559 = vpop.f32.mrf.mxu0
        %v3560 = vadd.f32 0.0, %v3559
        %v3561 = vpop.f32.mrf.mxu0
        %3562 = vdwg.mxu0
        %3563 = vmatprep.subr.mxu0 0.0
        %3564 = vmatpush1.msra.mxu0 %v565
        %3565 = vmatprep.subr.mxu0 0.0
        %3566 = vmatpush1.msra.mxu0 %v564
        %3567 = vmatprep.subr.mxu0 0.0
        %3568 = vmatpush1.msra.mxu0 %v563
        %3569 = vmatprep.subr.mxu0 0.0
        %3570 = vmatpush1.msra.mxu0 %v562
        %3571 = vmatprep.subr.mxu0 0.0
        %3572 = vmatpush1.msra.mxu0 %v561
        %3573 = vmatprep.subr.mxu0 0.0
        %3574 = vmatpush1.msra.mxu0 %v560
        %3575 = vmatprep.subr.mxu0 0.0
        %3576 = vmatpush1.msra.mxu0 %v559
        %3577 = vmatprep.subr.mxu0 0.0
        %3578 = vmatpush1.msra.mxu0 %v558
        %3579 = vmatprep.subr.mxu0 0.0
        %3580 = vmatpush1.msra.mxu0 %v557
        %3581 = vmatprep.subr.mxu0 0.0
        %3582 = vmatpush1.msra.mxu0 %v556
        %3583 = vmatprep.subr.mxu0 0.0
        %3584 = vmatpush1.msra.mxu0 %v555
        %3585 = vmatprep.subr.mxu0 0.0
        %3586 = vmatpush1.msra.mxu0 %v554
        %3587 = vmatprep.subr.mxu0 0.0
        %3588 = vmatpush1.msra.mxu0 %v553
        %3589 = vmatprep.subr.mxu0 0.0
        %3590 = vmatpush1.msra.mxu0 %v552
        %3591 = vmatprep.subr.mxu0 0.0
        %3592 = vmatpush1.msra.mxu0 %v551
        %3593 = vmatprep.subr.mxu0 0.0
        %3594 = vmatpush1.msra.mxu0 %v550
        %3595 = vmatprep.subr.mxu0 0.0
        %3596 = vmatpush2.msra.mxu0 0.0
        %3597 = vmatprep.subr.mxu0 0.0
        %3598 = vmatpush2.msra.mxu0 0.0
        %3599 = vmatprep.subr.mxu0 0.0
        %3600 = vmatpush2.msra.mxu0 0.0
        %3601 = vmatprep.subr.mxu0 0.0
        %3602 = vmatpush2.msra.mxu0 0.0
        %3603 = vmatprep.subr.mxu0 0.0
        %3604 = vmatpush2.msra.mxu0 0.0
        %3605 = vmatprep.subr.mxu0 0.0
        %3606 = vmatpush2.msra.mxu0 0.0
        %3607 = vmatprep.subr.mxu0 0.0
        %3608 = vmatpush2.msra.mxu0 0.0
        %3609 = vmatprep.subr.mxu0 0.0
        %3610 = vmatpush2.msra.mxu0 0.0
        %3611 = vmatprep.subr.mxu0 0.0
        %3612 = vmatpush2.msra.mxu0 0.0
        %3613 = vmatprep.subr.mxu0 0.0
        %3614 = vmatpush2.msra.mxu0 0.0
        %3615 = vmatprep.subr.mxu0 0.0
        %3616 = vmatpush2.msra.mxu0 0.0
        %3617 = vmatprep.subr.mxu0 0.0
        %3618 = vmatpush2.msra.mxu0 0.0
        %3619 = vmatprep.subr.mxu0 0.0
        %3620 = vmatpush2.msra.mxu0 0.0
        %3621 = vmatprep.subr.mxu0 0.0
        %3622 = vmatpush2.msra.mxu0 0.0
        %3623 = vmatprep.subr.mxu0 0.0
        %3624 = vmatpush2.msra.mxu0 0.0
        %3625 = vmatprep.subr.mxu0 0.0
        %3626 = vmatpush2.msra.mxu0 0.0
        %3627 = vmatprep.mubr.f32.mxu0 0.0
        %3628 = vmatmul.mubr.f32.gmra.mxu0 %v3271
        %v3629 = vpop.f32.mrf.mxu0
        %v3630 = vadd.f32 0.0, %v3629
        %v3631 = vpop.f32.mrf.mxu0
        %3632 = vmatprep.mubr.f32.mxu0 0.0
        %3633 = vmatmul.mubr.f32.gmra.mxu0 %v3407
        %v3634 = vpop.f32.mrf.mxu0
        %v3635 = vadd.f32 0.0, %v3634
        %v3636 = vpop.f32.mrf.mxu0
        %3637 = vdwg.mxu0
        %3638 = vmatprep.subr.mxu0 0.0
        %3639 = vmatpush1.msra.mxu0 %v581
        %3640 = vmatprep.subr.mxu0 0.0
        %3641 = vmatpush1.msra.mxu0 %v580
        %3642 = vmatprep.subr.mxu0 0.0
        %3643 = vmatpush1.msra.mxu0 %v579
        %3644 = vmatprep.subr.mxu0 0.0
        %3645 = vmatpush1.msra.mxu0 %v578
        %3646 = vmatprep.subr.mxu0 0.0
        %3647 = vmatpush1.msra.mxu0 %v577
        %3648 = vmatprep.subr.mxu0 0.0
        %3649 = vmatpush1.msra.mxu0 %v576
        %3650 = vmatprep.subr.mxu0 0.0
        %3651 = vmatpush1.msra.mxu0 %v575
        %3652 = vmatprep.subr.mxu0 0.0
        %3653 = vmatpush1.msra.mxu0 %v574
        %3654 = vmatprep.subr.mxu0 0.0
        %3655 = vmatpush1.msra.mxu0 %v573
        %3656 = vmatprep.subr.mxu0 0.0
        %3657 = vmatpush1.msra.mxu0 %v572
        %3658 = vmatprep.subr.mxu0 0.0
        %3659 = vmatpush1.msra.mxu0 %v571
        %3660 = vmatprep.subr.mxu0 0.0
        %3661 = vmatpush1.msra.mxu0 %v570
        %3662 = vmatprep.subr.mxu0 0.0
        %3663 = vmatpush1.msra.mxu0 %v569
        %3664 = vmatprep.subr.mxu0 0.0
        %3665 = vmatpush1.msra.mxu0 %v568
        %3666 = vmatprep.subr.mxu0 0.0
        %3667 = vmatpush1.msra.mxu0 %v567
        %3668 = vmatprep.subr.mxu0 0.0
        %3669 = vmatpush1.msra.mxu0 %v566
        %3670 = vmatprep.subr.mxu0 0.0
        %3671 = vmatpush2.msra.mxu0 0.0
        %3672 = vmatprep.subr.mxu0 0.0
        %3673 = vmatpush2.msra.mxu0 0.0
        %3674 = vmatprep.subr.mxu0 0.0
        %3675 = vmatpush2.msra.mxu0 0.0
        %3676 = vmatprep.subr.mxu0 0.0
        %3677 = vmatpush2.msra.mxu0 0.0
        %3678 = vmatprep.subr.mxu0 0.0
        %3679 = vmatpush2.msra.mxu0 0.0
        %3680 = vmatprep.subr.mxu0 0.0
        %3681 = vmatpush2.msra.mxu0 0.0
        %3682 = vmatprep.subr.mxu0 0.0
        %3683 = vmatpush2.msra.mxu0 0.0
        %3684 = vmatprep.subr.mxu0 0.0
        %3685 = vmatpush2.msra.mxu0 0.0
        %3686 = vmatprep.subr.mxu0 0.0
        %3687 = vmatpush2.msra.mxu0 0.0
        %3688 = vmatprep.subr.mxu0 0.0
        %3689 = vmatpush2.msra.mxu0 0.0
        %3690 = vmatprep.subr.mxu0 0.0
        %3691 = vmatpush2.msra.mxu0 0.0
        %3692 = vmatprep.subr.mxu0 0.0
        %3693 = vmatpush2.msra.mxu0 0.0
        %3694 = vmatprep.subr.mxu0 0.0
        %3695 = vmatpush2.msra.mxu0 0.0
        %3696 = vmatprep.subr.mxu0 0.0
        %3697 = vmatpush2.msra.mxu0 0.0
        %3698 = vmatprep.subr.mxu0 0.0
        %3699 = vmatpush2.msra.mxu0 0.0
        %3700 = vmatprep.subr.mxu0 0.0
        %3701 = vmatpush2.msra.mxu0 0.0
        %3702 = vmatprep.mubr.f32.mxu0 0.0
        %3703 = vmatmul.mubr.f32.gmra.mxu0 %v3272
        %v3704 = vpop.f32.mrf.mxu0
        %v3705 = vadd.f32 0.0, %v3704
        %v3706 = vpop.f32.mrf.mxu0
        %3707 = vmatprep.mubr.f32.mxu0 0.0
        %3708 = vmatmul.mubr.f32.gmra.mxu0 %v3408
        %v3709 = vpop.f32.mrf.mxu0
        %v3710 = vadd.f32 0.0, %v3709
        %v3711 = vpop.f32.mrf.mxu0
        %3712 = vdwg.mxu0
        %3713 = vmatprep.subr.mxu0 0.0
        %3714 = vmatpush1.msra.mxu0 %v597
        %3715 = vmatprep.subr.mxu0 0.0
        %3716 = vmatpush1.msra.mxu0 %v596
        %3717 = vmatprep.subr.mxu0 0.0
        %3718 = vmatpush1.msra.mxu0 %v595
        %3719 = vmatprep.subr.mxu0 0.0
        %3720 = vmatpush1.msra.mxu0 %v594
        %3721 = vmatprep.subr.mxu0 0.0
        %3722 = vmatpush1.msra.mxu0 %v593
        %3723 = vmatprep.subr.mxu0 0.0
        %3724 = vmatpush1.msra.mxu0 %v592
        %3725 = vmatprep.subr.mxu0 0.0
        %3726 = vmatpush1.msra.mxu0 %v591
        %3727 = vmatprep.subr.mxu0 0.0
        %3728 = vmatpush1.msra.mxu0 %v590
        %3729 = vmatprep.subr.mxu0 0.0
        %3730 = vmatpush1.msra.mxu0 %v589
        %3731 = vmatprep.subr.mxu0 0.0
        %3732 = vmatpush1.msra.mxu0 %v588
        %3733 = vmatprep.subr.mxu0 0.0
        %3734 = vmatpush1.msra.mxu0 %v587
        %3735 = vmatprep.subr.mxu0 0.0
        %3736 = vmatpush1.msra.mxu0 %v586
        %3737 = vmatprep.subr.mxu0 0.0
        %3738 = vmatpush1.msra.mxu0 %v585
        %3739 = vmatprep.subr.mxu0 0.0
        %3740 = vmatpush1.msra.mxu0 %v584
        %3741 = vmatprep.subr.mxu0 0.0
        %3742 = vmatpush1.msra.mxu0 %v583
        %3743 = vmatprep.subr.mxu0 0.0
        %3744 = vmatpush1.msra.mxu0 %v582
        %3745 = vmatprep.subr.mxu0 0.0
        %3746 = vmatpush2.msra.mxu0 0.0
        %3747 = vmatprep.subr.mxu0 0.0
        %3748 = vmatpush2.msra.mxu0 0.0
        %3749 = vmatprep.subr.mxu0 0.0
        %3750 = vmatpush2.msra.mxu0 0.0
        %3751 = vmatprep.subr.mxu0 0.0
        %3752 = vmatpush2.msra.mxu0 0.0
        %3753 = vmatprep.subr.mxu0 0.0
        %3754 = vmatpush2.msra.mxu0 0.0
        %3755 = vmatprep.subr.mxu0 0.0
        %3756 = vmatpush2.msra.mxu0 0.0
        %3757 = vmatprep.subr.mxu0 0.0
        %3758 = vmatpush2.msra.mxu0 0.0
        %3759 = vmatprep.subr.mxu0 0.0
        %3760 = vmatpush2.msra.mxu0 0.0
        %3761 = vmatprep.subr.mxu0 0.0
        %3762 = vmatpush2.msra.mxu0 0.0
        %3763 = vmatprep.subr.mxu0 0.0
        %3764 = vmatpush2.msra.mxu0 0.0
        %3765 = vmatprep.subr.mxu0 0.0
        %3766 = vmatpush2.msra.mxu0 0.0
        %3767 = vmatprep.subr.mxu0 0.0
        %3768 = vmatpush2.msra.mxu0 0.0
        %3769 = vmatprep.subr.mxu0 0.0
        %3770 = vmatpush2.msra.mxu0 0.0
        %3771 = vmatprep.subr.mxu0 0.0
        %3772 = vmatpush2.msra.mxu0 0.0
        %3773 = vmatprep.subr.mxu0 0.0
        %3774 = vmatpush2.msra.mxu0 0.0
        %3775 = vmatprep.subr.mxu0 0.0
        %3776 = vmatpush2.msra.mxu0 0.0
        %3777 = vmatprep.mubr.f32.mxu0 0.0
        %3778 = vmatmul.mubr.f32.gmra.mxu0 %v3273
        %v3779 = vpop.f32.mrf.mxu0
        %v3780 = vadd.f32 0.0, %v3779
        %v3781 = vpop.f32.mrf.mxu0
        %3782 = vmatprep.mubr.f32.mxu0 0.0
        %3783 = vmatmul.mubr.f32.gmra.mxu0 %v3409
        %v3784 = vpop.f32.mrf.mxu0
        %v3785 = vadd.f32 0.0, %v3784
        %v3786 = vpop.f32.mrf.mxu0
        %3787 = vdwg.mxu0
        %3788 = vmatprep.subr.mxu0 0.0
        %3789 = vmatpush1.msra.mxu0 %v613
        %3790 = vmatprep.subr.mxu0 0.0
        %3791 = vmatpush1.msra.mxu0 %v612
        %3792 = vmatprep.subr.mxu0 0.0
        %3793 = vmatpush1.msra.mxu0 %v611
        %3794 = vmatprep.subr.mxu0 0.0
        %3795 = vmatpush1.msra.mxu0 %v610
        %3796 = vmatprep.subr.mxu0 0.0
        %3797 = vmatpush1.msra.mxu0 %v609
        %3798 = vmatprep.subr.mxu0 0.0
        %3799 = vmatpush1.msra.mxu0 %v608
        %3800 = vmatprep.subr.mxu0 0.0
        %3801 = vmatpush1.msra.mxu0 %v607
        %3802 = vmatprep.subr.mxu0 0.0
        %3803 = vmatpush1.msra.mxu0 %v606
        %3804 = vmatprep.subr.mxu0 0.0
        %3805 = vmatpush1.msra.mxu0 %v605
        %3806 = vmatprep.subr.mxu0 0.0
        %3807 = vmatpush1.msra.mxu0 %v604
        %3808 = vmatprep.subr.mxu0 0.0
        %3809 = vmatpush1.msra.mxu0 %v603
        %3810 = vmatprep.subr.mxu0 0.0
        %3811 = vmatpush1.msra.mxu0 %v602
        %3812 = vmatprep.subr.mxu0 0.0
        %3813 = vmatpush1.msra.mxu0 %v601
        %3814 = vmatprep.subr.mxu0 0.0
        %3815 = vmatpush1.msra.mxu0 %v600
        %3816 = vmatprep.subr.mxu0 0.0
        %3817 = vmatpush1.msra.mxu0 %v599
        %3818 = vmatprep.subr.mxu0 0.0
        %3819 = vmatpush1.msra.mxu0 %v598
        %3820 = vmatprep.subr.mxu0 0.0
        %3821 = vmatpush2.msra.mxu0 0.0
        %3822 = vmatprep.subr.mxu0 0.0
        %3823 = vmatpush2.msra.mxu0 0.0
        %3824 = vmatprep.subr.mxu0 0.0
        %3825 = vmatpush2.msra.mxu0 0.0
        %3826 = vmatprep.subr.mxu0 0.0
        %3827 = vmatpush2.msra.mxu0 0.0
        %3828 = vmatprep.subr.mxu0 0.0
        %3829 = vmatpush2.msra.mxu0 0.0
        %3830 = vmatprep.subr.mxu0 0.0
        %3831 = vmatpush2.msra.mxu0 0.0
        %3832 = vmatprep.subr.mxu0 0.0
        %3833 = vmatpush2.msra.mxu0 0.0
        %3834 = vmatprep.subr.mxu0 0.0
        %3835 = vmatpush2.msra.mxu0 0.0
        %3836 = vmatprep.subr.mxu0 0.0
        %3837 = vmatpush2.msra.mxu0 0.0
        %3838 = vmatprep.subr.mxu0 0.0
        %3839 = vmatpush2.msra.mxu0 0.0
        %3840 = vmatprep.subr.mxu0 0.0
        %3841 = vmatpush2.msra.mxu0 0.0
        %3842 = vmatprep.subr.mxu0 0.0
        %3843 = vmatpush2.msra.mxu0 0.0
        %3844 = vmatprep.subr.mxu0 0.0
        %3845 = vmatpush2.msra.mxu0 0.0
        %3846 = vmatprep.subr.mxu0 0.0
        %3847 = vmatpush2.msra.mxu0 0.0
        %3848 = vmatprep.subr.mxu0 0.0
        %3849 = vmatpush2.msra.mxu0 0.0
        %3850 = vmatprep.subr.mxu0 0.0
        %3851 = vmatpush2.msra.mxu0 0.0
        %3852 = vmatprep.mubr.f32.mxu0 0.0
        %3853 = vmatmul.mubr.f32.gmra.mxu0 %v3274
        %v3854 = vpop.f32.mrf.mxu0
        %v3855 = vadd.f32 0.0, %v3854
        %v3856 = vpop.f32.mrf.mxu0
        %3857 = vmatprep.mubr.f32.mxu0 0.0
        %3858 = vmatmul.mubr.f32.gmra.mxu0 %v3410
        %v3859 = vpop.f32.mrf.mxu0
        %v3860 = vadd.f32 0.0, %v3859
        %v3861 = vpop.f32.mrf.mxu0
        %3862 = vdwg.mxu0
        %3863 = vmatprep.subr.mxu0 0.0
        %3864 = vmatpush1.msra.mxu0 %v629
        %3865 = vmatprep.subr.mxu0 0.0
        %3866 = vmatpush1.msra.mxu0 %v628
        %3867 = vmatprep.subr.mxu0 0.0
        %3868 = vmatpush1.msra.mxu0 %v627
        %3869 = vmatprep.subr.mxu0 0.0
        %3870 = vmatpush1.msra.mxu0 %v626
        %3871 = vmatprep.subr.mxu0 0.0
        %3872 = vmatpush1.msra.mxu0 %v625
        %3873 = vmatprep.subr.mxu0 0.0
        %3874 = vmatpush1.msra.mxu0 %v624
        %3875 = vmatprep.subr.mxu0 0.0
        %3876 = vmatpush1.msra.mxu0 %v623
        %3877 = vmatprep.subr.mxu0 0.0
        %3878 = vmatpush1.msra.mxu0 %v622
        %3879 = vmatprep.subr.mxu0 0.0
        %3880 = vmatpush1.msra.mxu0 %v621
        %3881 = vmatprep.subr.mxu0 0.0
        %3882 = vmatpush1.msra.mxu0 %v620
        %3883 = vmatprep.subr.mxu0 0.0
        %3884 = vmatpush1.msra.mxu0 %v619
        %3885 = vmatprep.subr.mxu0 0.0
        %3886 = vmatpush1.msra.mxu0 %v618
        %3887 = vmatprep.subr.mxu0 0.0
        %3888 = vmatpush1.msra.mxu0 %v617
        %3889 = vmatprep.subr.mxu0 0.0
        %3890 = vmatpush1.msra.mxu0 %v616
        %3891 = vmatprep.subr.mxu0 0.0
        %3892 = vmatpush1.msra.mxu0 %v615
        %3893 = vmatprep.subr.mxu0 0.0
        %3894 = vmatpush1.msra.mxu0 %v614
        %3895 = vmatprep.subr.mxu0 0.0
        %3896 = vmatpush2.msra.mxu0 0.0
        %3897 = vmatprep.subr.mxu0 0.0
        %3898 = vmatpush2.msra.mxu0 0.0
        %3899 = vmatprep.subr.mxu0 0.0
        %3900 = vmatpush2.msra.mxu0 0.0
        %3901 = vmatprep.subr.mxu0 0.0
        %3902 = vmatpush2.msra.mxu0 0.0
        %3903 = vmatprep.subr.mxu0 0.0
        %3904 = vmatpush2.msra.mxu0 0.0
        %3905 = vmatprep.subr.mxu0 0.0
        %3906 = vmatpush2.msra.mxu0 0.0
        %3907 = vmatprep.subr.mxu0 0.0
        %3908 = vmatpush2.msra.mxu0 0.0
        %3909 = vmatprep.subr.mxu0 0.0
        %3910 = vmatpush2.msra.mxu0 0.0
        %3911 = vmatprep.subr.mxu0 0.0
        %3912 = vmatpush2.msra.mxu0 0.0
        %3913 = vmatprep.subr.mxu0 0.0
        %3914 = vmatpush2.msra.mxu0 0.0
        %3915 = vmatprep.subr.mxu0 0.0
        %3916 = vmatpush2.msra.mxu0 0.0
        %3917 = vmatprep.subr.mxu0 0.0
        %3918 = vmatpush2.msra.mxu0 0.0
        %3919 = vmatprep.subr.mxu0 0.0
        %3920 = vmatpush2.msra.mxu0 0.0
        %3921 = vmatprep.subr.mxu0 0.0
        %3922 = vmatpush2.msra.mxu0 0.0
        %3923 = vmatprep.subr.mxu0 0.0
        %3924 = vmatpush2.msra.mxu0 0.0
        %3925 = vmatprep.subr.mxu0 0.0
        %3926 = vmatpush2.msra.mxu0 0.0
        %3927 = vmatprep.mubr.f32.mxu0 0.0
        %3928 = vmatmul.mubr.f32.gmra.mxu0 %v3275
        %v3929 = vpop.f32.mrf.mxu0
        %v3930 = vadd.f32 0.0, %v3929
        %v3931 = vpop.f32.mrf.mxu0
        %3932 = vmatprep.mubr.f32.mxu0 0.0
        %3933 = vmatmul.mubr.f32.gmra.mxu0 %v3411
        %v3934 = vpop.f32.mrf.mxu0
        %v3935 = vadd.f32 0.0, %v3934
        %v3936 = vpop.f32.mrf.mxu0
        %3937 = vdwg.mxu0
        %3938 = vmatprep.subr.mxu0 0.0
        %3939 = vmatpush1.msra.mxu0 %v645
        %3940 = vmatprep.subr.mxu0 0.0
        %3941 = vmatpush1.msra.mxu0 %v644
        %3942 = vmatprep.subr.mxu0 0.0
        %3943 = vmatpush1.msra.mxu0 %v643
        %3944 = vmatprep.subr.mxu0 0.0
        %3945 = vmatpush1.msra.mxu0 %v642
        %3946 = vmatprep.subr.mxu0 0.0
        %3947 = vmatpush1.msra.mxu0 %v641
        %3948 = vmatprep.subr.mxu0 0.0
        %3949 = vmatpush1.msra.mxu0 %v640
        %3950 = vmatprep.subr.mxu0 0.0
        %3951 = vmatpush1.msra.mxu0 %v639
        %3952 = vmatprep.subr.mxu0 0.0
        %3953 = vmatpush1.msra.mxu0 %v638
        %3954 = vmatprep.subr.mxu0 0.0
        %3955 = vmatpush1.msra.mxu0 %v637
        %3956 = vmatprep.subr.mxu0 0.0
        %3957 = vmatpush1.msra.mxu0 %v636
        %3958 = vmatprep.subr.mxu0 0.0
        %3959 = vmatpush1.msra.mxu0 %v635
        %3960 = vmatprep.subr.mxu0 0.0
        %3961 = vmatpush1.msra.mxu0 %v634
        %3962 = vmatprep.subr.mxu0 0.0
        %3963 = vmatpush1.msra.mxu0 %v633
        %3964 = vmatprep.subr.mxu0 0.0
        %3965 = vmatpush1.msra.mxu0 %v632
        %3966 = vmatprep.subr.mxu0 0.0
        %3967 = vmatpush1.msra.mxu0 %v631
        %3968 = vmatprep.subr.mxu0 0.0
        %3969 = vmatpush1.msra.mxu0 %v630
        %3970 = vmatprep.subr.mxu0 0.0
        %3971 = vmatpush2.msra.mxu0 0.0
        %3972 = vmatprep.subr.mxu0 0.0
        %3973 = vmatpush2.msra.mxu0 0.0
        %3974 = vmatprep.subr.mxu0 0.0
        %3975 = vmatpush2.msra.mxu0 0.0
        %3976 = vmatprep.subr.mxu0 0.0
        %3977 = vmatpush2.msra.mxu0 0.0
        %3978 = vmatprep.subr.mxu0 0.0
        %3979 = vmatpush2.msra.mxu0 0.0
        %3980 = vmatprep.subr.mxu0 0.0
        %3981 = vmatpush2.msra.mxu0 0.0
        %3982 = vmatprep.subr.mxu0 0.0
        %3983 = vmatpush2.msra.mxu0 0.0
        %3984 = vmatprep.subr.mxu0 0.0
        %3985 = vmatpush2.msra.mxu0 0.0
        %3986 = vmatprep.subr.mxu0 0.0
        %3987 = vmatpush2.msra.mxu0 0.0
        %3988 = vmatprep.subr.mxu0 0.0
        %3989 = vmatpush2.msra.mxu0 0.0
        %3990 = vmatprep.subr.mxu0 0.0
        %3991 = vmatpush2.msra.mxu0 0.0
        %3992 = vmatprep.subr.mxu0 0.0
        %3993 = vmatpush2.msra.mxu0 0.0
        %3994 = vmatprep.subr.mxu0 0.0
        %3995 = vmatpush2.msra.mxu0 0.0
        %3996 = vmatprep.subr.mxu0 0.0
        %3997 = vmatpush2.msra.mxu0 0.0
        %3998 = vmatprep.subr.mxu0 0.0
        %3999 = vmatpush2.msra.mxu0 0.0
        %4000 = vmatprep.subr.mxu0 0.0
        %4001 = vmatpush2.msra.mxu0 0.0
        %4002 = vmatprep.mubr.f32.mxu0 0.0
        %4003 = vmatmul.mubr.f32.gmra.mxu0 %v3276
        %v4004 = vpop.f32.mrf.mxu0
        %v4005 = vadd.f32 0.0, %v4004
        %v4006 = vpop.f32.mrf.mxu0
        %4007 = vmatprep.mubr.f32.mxu0 0.0
        %4008 = vmatmul.mubr.f32.gmra.mxu0 %v3412
        %v4009 = vpop.f32.mrf.mxu0
        %v4010 = vadd.f32 0.0, %v4009
        %v4011 = vpop.f32.mrf.mxu0
        %4012 = vdwg.mxu0
        %4015 = vrot.lane.b32.xlu0 %v3555, 32
        %v4016 = vpop.permute.xlu0 %4015
        %4017 = vrot.lane.b32.xlu0 %v3560, 32
        %v4018 = vpop.permute.xlu0 %4017
        %4023 = vrot.lane.b32.xlu0 %v3630, 64
        %v4024 = vpop.permute.xlu0 %4023
        %4025 = vrot.lane.b32.xlu0 %v3635, 64
        %v4026 = vpop.permute.xlu0 %4025
        %4031 = vrot.lane.b32.xlu0 %v3705, 96
        %v4032 = vpop.permute.xlu0 %4031
        %4033 = vrot.lane.b32.xlu0 %v3710, 96
        %v4034 = vpop.permute.xlu0 %4033
        %4039 = vrot.lane.b32.xlu0 %v3855, 32
        %v4040 = vpop.permute.xlu0 %4039
        %4041 = vrot.lane.b32.xlu0 %v3860, 32
        %v4042 = vpop.permute.xlu0 %4041
        %4047 = vrot.lane.b32.xlu0 %v3930, 64
        %v4048 = vpop.permute.xlu0 %4047
        %4049 = vrot.lane.b32.xlu0 %v3935, 64
        %v4050 = vpop.permute.xlu0 %4049
        %4055 = vrot.lane.b32.xlu0 %v4005, 96
        %v4056 = vpop.permute.xlu0 %4055
        %4057 = vrot.lane.b32.xlu0 %v4010, 96
        %v4058 = vpop.permute.xlu0 %4057
        %v4061 = vsel %vm646, %v3480, %v4016
        %v4062 = vsel %vm646, %v3485, %v4018
        %vm4063 = vcmask 523264
        %v4064 = vsel %vm4063, %v4061, %v4024
        %v4065 = vsel %vm4063, %v4062, %v4026
        %vm4066 = vcmask 785408
        %v4067 = vsel %vm4066, %v4064, %v4032
        %v4068 = vsel %vm4066, %v4065, %v4034
        %v4069 = vsel %vm646, %v3780, %v4040
        %v4070 = vsel %vm646, %v3785, %v4042
        %v4071 = vsel %vm4063, %v4069, %v4048
        %v4072 = vsel %vm4063, %v4070, %v4050
        %v4073 = vsel %vm4066, %v4071, %v4056
        %v4074 = vsel %vm4066, %v4072, %v4058
        %4075 = vst [vmem:[%s447] sm:$0xff] %v4067
        %4076 = vst [vmem:[%s447 + $0x8] sm:$0xff] %v4073
        %4077 = vst [vmem:[%s447 + $0x10] sm:$0xff] %v4068
        %4078 = vst [vmem:[%s447 + $0x18] sm:$0xff] %v4074
        %s4079 = sand.u32 %s217, 1
        %s4080 = scalar_lea.sflag [#allocation4], %s4079
        %s4081 = sand.u32 %s217, 1
        %s4082 = smul.addr %s4081, 32
        %s4083 = scalar_lea.vmem [#allocation3], %s4082
        // Predicated region
        $region87: #{tpu_custom_call.1} parent=81 // pred_check
          %p4084 = pneg %p227
        $region88: #{tpu_custom_call.1} parent=81 // pred_check_branch
          %4086 = sbr.rel (%p4084) target = $region90
        $region89: #{tpu_custom_call.1} parent=81 // pred_region
          %s4087 = smul.u32 2, %s26
          %s4089 = ssub.s32 512, 512
          %4090 = vsyncadd %s4080, %s4089
          %s4091 = smul.addr %s4087, 2
          %s4092 = smul.addr %s25, 8
          %s4093 = sadd.s32 %s4091, %s4092
          %s4094 = smul.addr %s4093, 128
          %s4095 = scalar_lea.hbm %s7, %s4094
          %s4096 = sshll.u32 %s4083, 4
          %s4097 = int_to_ptr.vmem [resolvable:$true] %s4096
          %4102 = dma.vmem_to_hbm [thread:$0]  %s4097, 512, %s4095, %s4080, 256, 256, 16
        $region90: #{tpu_custom_call.1} parent=81 // pred_fallthru
          _
      $region82: #{tpu_custom_call.1} parent=5 // pred_fallthru
        _
      %p4103 = scmp.le.s32.totalorder 2, %s16
      // Predicated region
      $region91: #{tpu_custom_call.1} parent=5 // pred_check
        %p4104 = pneg %p4103
      $region92: #{tpu_custom_call.1} parent=5 // pred_check_branch
        %4106 = sbr.rel (%p4104) target = $region94
      $region93: #{tpu_custom_call.1} parent=5 // pred_region
        %s4107 = ssub.s32 %s16, 2
        // Predicated region
        $region95: #{tpu_custom_call.1} parent=93 // pred_check
          %p4108 = pneg %p233
        $region96: #{tpu_custom_call.1} parent=93 // pred_check_branch
          %4110 = sbr.rel (%p4108) target = $region98
        $region97: #{tpu_custom_call.1} parent=93 // pred_region
          %s4111 = sand.u32 %s218, 1
          %s4112 = scalar_lea.sflag [#allocation4], %s4111
          %s4113 = sand.u32 %s218, 1
          %s4114 = smul.addr %s4113, 32
          %s4115 = scalar_lea.vmem [#allocation3], %s4114
          %4116 = dma.done %s4112, 512
        $region98: #{tpu_custom_call.1} parent=93 // pred_fallthru
          _
      $region94: #{tpu_custom_call.1} parent=5 // pred_fallthru
        _
    $region6: #{tpu_custom_call.1} parent=1 // loop_footer
      %s20 = sadd.s32 1, %s16
    $region7: #{tpu_custom_call.1} parent=1 // loop_footer_branch
      %15 = sbr.rel target = $region3
    $region8: #{tpu_custom_call.1} parent=1 // loop_exit
      _
    %4117 = vsyncpa [#allocation4], 1
    %s4118 = scalar_lea.sflag [#allocation4], 1
    %4119 = vsyncpa %s4118, 1

</llo_original>
